<compile_context>
chip_gen: v6e
topology: v6e:2x2x1
jax: 0.10.0
libtpu: 0.0.40
codegen_flags: <defaults>
</compile_context>

<pallas_src>
import math
from functools import partial

import jax
import jax.numpy as jnp
from jax import lax
from jax.experimental import pallas as pl
from jax.experimental.pallas import tpu as pltpu


# ---------------------------------------------------------------------------
# Pallas kernel: one full EncoderBlock (optionally fused with the PE add)
# ---------------------------------------------------------------------------
def encoder_block_kernel(*refs, num_heads, add_pe):
    if add_pe:
        (x_ref, pe_ref, mask_ref, wqkv_ref, bqkv_ref, wo_ref, bo_ref,
         g1_ref, be1_ref, w1_ref, b1_ref, w2_ref, b2_ref, g2_ref, be2_ref,
         o_ref) = refs
    else:
        (x_ref, mask_ref, wqkv_ref, bqkv_ref, wo_ref, bo_ref,
         g1_ref, be1_ref, w1_ref, b1_ref, w2_ref, b2_ref, g2_ref, be2_ref,
         o_ref) = refs

    H = num_heads
    x = x_ref[...].astype(jnp.float32)               # (M, D); layer 0 gets f32 input
    if add_pe:
        x = x + pe_ref[...]                           # fused positional encoding
    M, D = x.shape
    hd = D // H
    x_bf = x.astype(jnp.bfloat16)

    # ---- QKV projection: ONE lane-dense (M,D) x (D,3D) MXU matmul ----
    # (1/sqrt(hd) already folded into the Q columns / bias offline)
    qkv = jnp.dot(x_bf, wqkv_ref[...], preferred_element_type=jnp.float32)
    qkv = (qkv + bqkv_ref[...]).astype(jnp.bfloat16)  # (M, 3D)

    mask = mask_ref[...].astype(jnp.float32)          # (M, M) additive block-causal bias
    wo = wo_ref[...]                                  # (D, D) bf16, lane-dense

    # ---- per-head attention; output projection accumulated on the MXU ----
    attn = None
    for h in range(H):                                # H is small; static unroll
        q_h = qkv[:, h * hd:(h + 1) * hd]             # (M, hd) bf16, static lane slices
        k_h = qkv[:, D + h * hd:D + (h + 1) * hd]
        v_h = qkv[:, 2 * D + h * hd:2 * D + (h + 1) * hd]

        s = jnp.einsum("md,nd->mn", q_h, k_h,
                       preferred_element_type=jnp.float32)        # (M, M)
        s = s + mask
        s = s - jnp.max(s, axis=-1, keepdims=True)
        p = jnp.exp(s)                                             # f32 exp (safe on all gens)
        l = jnp.sum(p, axis=-1, keepdims=True)                     # (M, 1) f32
        o_h = jnp.dot(p.astype(jnp.bfloat16), v_h,
                      preferred_element_type=jnp.float32)          # (M, hd)
        o_h = o_h * pl.reciprocal(l, approx=True)                  # normalize small tensor (EUP)

        # concat-of-heads @ Wo  ==  sum_h o_h @ Wo[h*hd:(h+1)*hd, :]
        contrib = jnp.dot(o_h.astype(jnp.bfloat16), wo[h * hd:(h + 1) * hd, :],
                          preferred_element_type=jnp.float32)      # (M, D)
        attn = contrib if attn is None else attn + contrib
    attn = attn + bo_ref[...]

    def layernorm(z, g, b):
        mu = jnp.mean(z, axis=-1, keepdims=True)
        var = jnp.mean((z - mu) ** 2, axis=-1, keepdims=True)
        return (z - mu) * lax.rsqrt(var + 1e-5) * g + b

    # ---- AddNorm 1 ----
    h1 = layernorm(attn + x, g1_ref[...], be1_ref[...])

    # ---- PositionWiseFFN (bf16 matmuls, f32 accumulation) ----
    f = jnp.dot(h1.astype(jnp.bfloat16), w1_ref[...],
                preferred_element_type=jnp.float32) + b1_ref[...]
    f = jnp.maximum(f, 0.0)
    f = jnp.dot(f.astype(jnp.bfloat16), w2_ref[...],
                preferred_element_type=jnp.float32) + b2_ref[...]

    # ---- AddNorm 2 ----
    o_ref[...] = layernorm(f + h1, g2_ref[...], be2_ref[...]).astype(o_ref.dtype)


# ---------------------------------------------------------------------------
# Wrappers
# ---------------------------------------------------------------------------
def _vmem_limit_bytes():
    """Generation-aware scoped-VMEM limit (96 MiB on 128 MiB chips, 48 MiB on v7x)."""
    try:
        cap = int(pltpu.get_tpu_info().vmem_capacity_bytes)
    except Exception:
        cap = 64 * 1024 * 1024          # conservative (v7x-sized) assumption
    return min(96 * 1024 * 1024, (cap * 3) // 4)


def _pick_nb(N, T, target_rows=256, cap_rows=512):
    """Sequences packed per grid step.

    Prefers (a) >= 2 grid steps so ("parallel",) shards across 2 TensorCores
    (v7x), (b) rows near the 256-row MXU fill target, (c) rows % 16 == 0 so
    bf16 I/O blocks satisfy sublane packing (or the block equals the full array).
    """
    cands = [nb for nb in range(1, N + 1)
             if N % nb == 0 and ((nb * T) % 16 == 0 or nb == N)]
    multi = [nb for nb in cands if N // nb >= 2]
    pool = sorted(multi if multi else cands, key=lambda nb: nb * T)
    best = pool[0]
    for nb in pool:
        rows = nb * T
        if rows <= cap_rows:
            best = nb
        if rows >= target_rows:
            break
    return best


def _make_block_causal_bias(NB, T, dtype=jnp.bfloat16):
    """(NB*T, NB*T) additive mask: causal within a sequence, -1e9 across sequences."""
    M = NB * T
    idx = jnp.arange(M)
    seq = idx // T
    pos = idx % T
    keep = (seq[:, None] == seq[None, :]) & (pos[None, :] <= pos[:, None])
    return jnp.where(keep, 0.0, -1e9).astype(dtype)


def _fuse_block_params(p, num_heads):
    """Offline weight prep: lane-dense fused QKV (scale folded into Q), bf16 matmul weights."""
    D = p["wq"].shape[0]
    hd = D // num_heads
    scale = 1.0 / math.sqrt(hd)

    wqkv = jnp.concatenate([p["wq"] * scale, p["wk"], p["wv"]], axis=1)   # (D, 3D)
    bqkv = jnp.concatenate([p["bq"] * scale, p["bk"], p["bv"]], axis=1)   # (1, 3D)

    return dict(
        wqkv=wqkv.astype(jnp.bfloat16),
        bqkv=bqkv.astype(jnp.float32),
        wo=p["wo"].astype(jnp.bfloat16),      # (D, D); head h uses rows h*hd:(h+1)*hd
        bo=p["bo"].astype(jnp.float32),
        g1=p["g1"].astype(jnp.float32), be1=p["be1"].astype(jnp.float32),
        w1=p["w1"].astype(jnp.bfloat16), b1=p["b1"].astype(jnp.float32),
        w2=p["w2"].astype(jnp.bfloat16), b2=p["b2"].astype(jnp.float32),
        g2=p["g2"].astype(jnp.float32), be2=p["be2"].astype(jnp.float32),
    )


def encoder_block(x2d, fp, mask, num_heads, rows_per_block, pe_blk=None):
    NT, D = x2d.shape
    grid = (NT // rows_per_block,)

    const_args = [mask, fp["wqkv"], fp["bqkv"], fp["wo"], fp["bo"],
                  fp["g1"], fp["be1"], fp["w1"], fp["b1"],
                  fp["w2"], fp["b2"], fp["g2"], fp["be2"]]

    x_spec = pl.BlockSpec((rows_per_block, D), lambda n: (n, 0))

    def const_spec(a, single_buffer):
        nd = a.ndim
        if single_buffer:
            # grid-invariant block -> double buffering only wastes VMEM
            return pl.BlockSpec(a.shape, lambda n, _nd=nd: (0,) * _nd,
                                pipeline_mode=pl.Buffered(1))
        return pl.BlockSpec(a.shape, lambda n, _nd=nd: (0,) * _nd)

    kernel = partial(encoder_block_kernel, num_heads=num_heads,
                     add_pe=pe_blk is not None)

    args = [x2d]
    if pe_blk is not None:
        args.append(pe_blk)
    args += const_args

    def build(single_buffer):
        in_specs = [x_spec]
        if pe_blk is not None:
            in_specs.append(const_spec(pe_blk, single_buffer))
        in_specs += [const_spec(a, single_buffer) for a in const_args]
        return pl.pallas_call(
            kernel,
            out_shape=jax.ShapeDtypeStruct((NT, D), jnp.bfloat16),   # bf16 layer boundary
            grid_spec=pltpu.PrefetchScalarGridSpec(
                num_scalar_prefetch=0,
                grid=grid,
                in_specs=in_specs,
                out_specs=x_spec,
            ),
            compiler_params=pltpu.CompilerParams(
                dimension_semantics=("parallel",),
                vmem_limit_bytes=_vmem_limit_bytes(),
            ),
        )

    try:
        return build(single_buffer=True)(*args)
    except Exception:
        # Fall back to default (double-buffered) specs if Buffered(1) is unsupported.
        return build(single_buffer=False)(*args)


def transformer_encoder(x, pe, block_params, num_heads):
    N, T, D = x.shape
    NB = _pick_nb(N, T)
    rows = NB * T

    x2d = x.reshape(N * T, D)                                     # f32 into layer 0
    pe_blk = jnp.tile(pe[0, :T, :], (NB, 1)).astype(jnp.float32)  # (rows, D), fused into block 0
    mask = _make_block_causal_bias(NB, T)                         # (rows, rows) bf16 additive bias
    fused = [_fuse_block_params(p, num_heads) for p in block_params]

    # TODO(synk): hide per-layer weight DMA (fuse two blocks per pallas_call or
    # cross-call prefetch of layer l+1 weights during layer l compute).
    for li, fp in enumerate(fused):
        x2d = encoder_block(x2d, fp, mask, num_heads, rows,
                            pe_blk=pe_blk if li == 0 else None)
    return x2d.astype(jnp.float32).reshape(N, T, D)


# ---------------------------------------------------------------------------
# Deterministic parameter init (PyTorch nn.Linear-style uniform bounds)
# ---------------------------------------------------------------------------
def init_linear(key, fan_in, fan_out):
    k1, k2 = jax.random.split(key)
    bound = 1.0 / math.sqrt(fan_in)
    w = jax.random.uniform(k1, (fan_in, fan_out), jnp.float32, -bound, bound)
    b = jax.random.uniform(k2, (1, fan_out), jnp.float32, -bound, bound)
    return w, b


def init_block(key, d_model, num_heads):
    ks = jax.random.split(key, 6)
    wq, bq = init_linear(ks[0], d_model, d_model)
    wk, bk = init_linear(ks[1], d_model, d_model)
    wv, bv = init_linear(ks[2], d_model, d_model)
    wo, bo = init_linear(ks[3], d_model, d_model)
    w1, b1 = init_linear(ks[4], d_model, d_model * num_heads)
    w2, b2 = init_linear(ks[5], d_model * num_heads, d_model)
    return dict(
        wq=wq, bq=bq, wk=wk, bk=bk, wv=wv, bv=bv, wo=wo, bo=bo,
        g1=jnp.ones((1, d_model), jnp.float32), be1=jnp.zeros((1, d_model), jnp.float32),
        w1=w1, b1=b1, w2=w2, b2=b2,
        g2=jnp.ones((1, d_model), jnp.float32), be2=jnp.zeros((1, d_model), jnp.float32),
    )


def make_position_encoding(d_model, max_len=1000):
    position = jnp.arange(max_len, dtype=jnp.float32)[:, None]
    div_term = jnp.exp(
        jnp.arange(0, d_model, 2, dtype=jnp.float32) * (-math.log(10000.0) / d_model)
    )
    X = position * div_term
    pe = jnp.zeros((max_len, d_model), jnp.float32)
    pe = pe.at[:, 0::2].set(jnp.sin(X))
    pe = pe.at[:, 1::2].set(jnp.cos(X))
    return pe[None]  # (1, max_len, d_model)


# ---------------------------------------------------------------------------
# Pure-JAX reference for sanity checking
# ---------------------------------------------------------------------------
def ref_forward(x, pe, block_params, num_heads):
    x = x + pe[:, : x.shape[1], :]
    for p in block_params:
        N, T, D = x.shape
        hd = D // num_heads

        def ln(y, g, b):
            mu = jnp.mean(y, axis=-1, keepdims=True)
            var = jnp.mean((y - mu) ** 2, axis=-1, keepdims=True)
            return (y - mu) / jnp.sqrt(var + 1e-5) * g + b

        def heads(y, w, b):
            return (y @ w + b).reshape(N, T, num_heads, hd).transpose(0, 2, 1, 3)

        q, k, v = heads(x, p["wq"], p["bq"]), heads(x, p["wk"], p["bk"]), heads(x, p["wv"], p["bv"])
        s = jnp.einsum("nhtd,nhsd->nhts", q, k) / math.sqrt(hd)
        causal = jnp.tril(jnp.ones((T, T), bool))
        s = jnp.where(causal[None, None], s, -1e9)
        a = jax.nn.softmax(s, axis=-1)
        o = jnp.einsum("nhts,nhsd->nhtd", a, v).transpose(0, 2, 1, 3).reshape(N, T, D)
        o = o @ p["wo"] + p["bo"]
        h1 = ln(o + x, p["g1"], p["be1"])
        f = jnp.maximum(h1 @ p["w1"] + p["b1"], 0.0) @ p["w2"] + p["b2"]
        x = ln(f + h1, p["g2"], p["be2"])
    return x


# ---------------------------------------------------------------------------
if __name__ == "__main__":
    # Small shapes consistent with the module's forward: x is [N, T, d_model]
    N, T, d_model = 2, 8, 32
    num_heads, num_blocks = 4, 2

    key = jax.random.PRNGKey(0)
    kx, *kblocks = jax.random.split(key, 1 + num_blocks)
    x = jax.random.normal(kx, (N, T, d_model), jnp.float32)

    pe = make_position_encoding(d_model, max_len=1000)
    block_params = [init_block(k, d_model, num_heads) for k in kblocks]

    out = transformer_encoder(x, pe, block_params, num_heads)
    out = jax.block_until_ready(out)

    ref = ref_forward(x, pe, block_params, num_heads)
    assert out.shape == (N, T, d_model)
    # bf16 MXU inputs + bf16 layer-boundary activations (f32 accumulation / stats)
    # -> slightly looser tolerance than pure f32.
    max_err = float(jnp.max(jnp.abs(out - ref)))
    assert jnp.allclose(out, ref, atol=7.5e-2, rtol=7.5e-2), (
        f"mismatch vs JAX reference (max abs err {max_err})")

    print("KERNEL_OK")
</pallas_src>

<mosaic_0001>
module attributes {stable_mosaic.version = 11 : i64} {
  func.func @encoder_block_kernel(%arg0: i32, %arg1: memref<16x32xf32, #tpu.memory_space<vmem>>, %arg2: memref<16x32xf32, #tpu.memory_space<vmem>>, %arg3: memref<16x16xbf16, #tpu.memory_space<vmem>>, %arg4: memref<32x96xbf16, #tpu.memory_space<vmem>>, %arg5: memref<1x96xf32, #tpu.memory_space<vmem>>, %arg6: memref<32x32xbf16, #tpu.memory_space<vmem>>, %arg7: memref<1x32xf32, #tpu.memory_space<vmem>>, %arg8: memref<1x32xf32, #tpu.memory_space<vmem>>, %arg9: memref<1x32xf32, #tpu.memory_space<vmem>>, %arg10: memref<32x128xbf16, #tpu.memory_space<vmem>>, %arg11: memref<1x128xf32, #tpu.memory_space<vmem>>, %arg12: memref<128x32xbf16, #tpu.memory_space<vmem>>, %arg13: memref<1x32xf32, #tpu.memory_space<vmem>>, %arg14: memref<1x32xf32, #tpu.memory_space<vmem>>, %arg15: memref<1x32xf32, #tpu.memory_space<vmem>>, %arg16: memref<16x32xbf16, #tpu.memory_space<vmem>>) attributes {dimension_semantics = [#tpu.dimension_semantics<parallel>], iteration_bounds = array<i64: 1>, scalar_prefetch = 0 : i64, scratch_operands = 0 : i64, tpu.core_type = #tpu.core_type<tc>, window_params = [{transform_indices = @transform_0, window_bounds = array<i64: 16, 32>}, {pipeline_mode = #tpu.pipeline_mode<synchronous>, transform_indices = @transform_1, window_bounds = array<i64: 16, 32>}, {pipeline_mode = #tpu.pipeline_mode<synchronous>, transform_indices = @transform_2, window_bounds = array<i64: 16, 16>}, {pipeline_mode = #tpu.pipeline_mode<synchronous>, transform_indices = @transform_3, window_bounds = array<i64: 32, 96>}, {pipeline_mode = #tpu.pipeline_mode<synchronous>, transform_indices = @transform_4, window_bounds = array<i64: 1, 96>}, {pipeline_mode = #tpu.pipeline_mode<synchronous>, transform_indices = @transform_5, window_bounds = array<i64: 32, 32>}, {pipeline_mode = #tpu.pipeline_mode<synchronous>, transform_indices = @transform_6, window_bounds = array<i64: 1, 32>}, {pipeline_mode = #tpu.pipeline_mode<synchronous>, transform_indices = @transform_7, window_bounds = array<i64: 1, 32>}, {pipeline_mode = #tpu.pipeline_mode<synchronous>, transform_indices = @transform_8, window_bounds = array<i64: 1, 32>}, {pipeline_mode = #tpu.pipeline_mode<synchronous>, transform_indices = @transform_9, window_bounds = array<i64: 32, 128>}, {pipeline_mode = #tpu.pipeline_mode<synchronous>, transform_indices = @transform_10, window_bounds = array<i64: 1, 128>}, {pipeline_mode = #tpu.pipeline_mode<synchronous>, transform_indices = @transform_11, window_bounds = array<i64: 128, 32>}, {pipeline_mode = #tpu.pipeline_mode<synchronous>, transform_indices = @transform_12, window_bounds = array<i64: 1, 32>}, {pipeline_mode = #tpu.pipeline_mode<synchronous>, transform_indices = @transform_13, window_bounds = array<i64: 1, 32>}, {pipeline_mode = #tpu.pipeline_mode<synchronous>, transform_indices = @transform_14, window_bounds = array<i64: 1, 32>}, {transform_indices = @transform_15, window_bounds = array<i64: 16, 32>}]} {
    %c0 = arith.constant 0 : index
    %c0_0 = arith.constant 0 : index
    %0 = vector.load %arg1[%c0, %c0_0] : memref<16x32xf32, #tpu.memory_space<vmem>>, vector<16x32xf32>
    %c0_1 = arith.constant 0 : index
    %c0_2 = arith.constant 0 : index
    %1 = vector.load %arg2[%c0_1, %c0_2] : memref<16x32xf32, #tpu.memory_space<vmem>>, vector<16x32xf32>
    %2 = arith.addf %0, %1 : vector<16x32xf32>
    %3 = arith.truncf %2 : vector<16x32xf32> to vector<16x32xbf16>
    %c0_3 = arith.constant 0 : index
    %c0_4 = arith.constant 0 : index
    %4 = vector.load %arg4[%c0_3, %c0_4] : memref<32x96xbf16, #tpu.memory_space<vmem>>, vector<32x96xbf16>
    %cst = arith.constant dense<0.000000e+00> : vector<16x96xf32>
    %5 = tpu.matmul %3, %4, %cst {dimension_numbers = #tpu.dot_dimension_numbers<[1], [0], [0], [1], [0, 0, 1, 1], [], []>} : vector<16x32xbf16>, vector<32x96xbf16>, vector<16x96xf32> -> vector<16x96xf32>
    %c0_5 = arith.constant 0 : index
    %c0_6 = arith.constant 0 : index
    %6 = vector.load %arg5[%c0_5, %c0_6] : memref<1x96xf32, #tpu.memory_space<vmem>>, vector<1x96xf32>
    %7 = vector.broadcast %6 : vector<1x96xf32> to vector<16x96xf32>
    %8 = arith.addf %5, %7 : vector<16x96xf32>
    %9 = arith.truncf %8 : vector<16x96xf32> to vector<16x96xbf16>
    %c0_7 = arith.constant 0 : index
    %c0_8 = arith.constant 0 : index
    %10 = vector.load %arg3[%c0_7, %c0_8] : memref<16x16xbf16, #tpu.memory_space<vmem>>, vector<16x16xbf16>
    %11 = arith.extf %10 : vector<16x16xbf16> to vector<16x16xf32>
    %c0_9 = arith.constant 0 : index
    %c0_10 = arith.constant 0 : index
    %12 = vector.load %arg6[%c0_9, %c0_10] : memref<32x32xbf16, #tpu.memory_space<vmem>>, vector<32x32xbf16>
    %13 = vector.extract_strided_slice %9 {offsets = [0, 0], sizes = [16, 8], strides = [1, 1]} : vector<16x96xbf16> to vector<16x8xbf16>
    %14 = vector.extract_strided_slice %9 {offsets = [0, 32], sizes = [16, 8], strides = [1, 1]} : vector<16x96xbf16> to vector<16x8xbf16>
    %15 = vector.extract_strided_slice %9 {offsets = [0, 64], sizes = [16, 8], strides = [1, 1]} : vector<16x96xbf16> to vector<16x8xbf16>
    "tpu.trace_start"() <{level = 10 : i32, message = "md,nd->mn"}> : () -> ()
    %cst_11 = arith.constant dense<0.000000e+00> : vector<16x16xf32>
    %16 = tpu.matmul %13, %14, %cst_11 {dimension_numbers = #tpu.dot_dimension_numbers<[1], [1], [0], [0], [0, 0, 1, 0], [], []>} : vector<16x8xbf16>, vector<16x8xbf16>, vector<16x16xf32> -> vector<16x16xf32>
    "tpu.trace_stop"() : () -> ()
    %17 = arith.addf %16, %11 : vector<16x16xf32>
    %cst_12 = arith.constant dense<0xFF800000> : vector<16xf32>
    %18 = vector.multi_reduction <maximumf>, %17, %cst_12 [1] : vector<16x16xf32> to vector<16xf32>
    %19 = vector.shape_cast %18 : vector<16xf32> to vector<16x1xf32>
    %20 = vector.broadcast %19 : vector<16x1xf32> to vector<16x16xf32>
    %21 = arith.subf %17, %20 : vector<16x16xf32>
    %22 = math.exp %21 : vector<16x16xf32>
    %cst_13 = arith.constant dense<0.000000e+00> : vector<16xf32>
    %23 = vector.multi_reduction <add>, %22, %cst_13 [1] : vector<16x16xf32> to vector<16xf32>
    %24 = vector.shape_cast %23 : vector<16xf32> to vector<16x1xf32>
    %25 = arith.truncf %22 : vector<16x16xf32> to vector<16x16xbf16>
    %cst_14 = arith.constant dense<0.000000e+00> : vector<16x8xf32>
    %26 = tpu.matmul %25, %15, %cst_14 {dimension_numbers = #tpu.dot_dimension_numbers<[1], [0], [0], [1], [0, 0, 1, 1], [], []>} : vector<16x16xbf16>, vector<16x8xbf16>, vector<16x8xf32> -> vector<16x8xf32>
    %27 = tpu.reciprocal %24 {approx = true} : vector<16x1xf32> -> vector<16x1xf32>
    %28 = vector.broadcast %27 : vector<16x1xf32> to vector<16x8xf32>
    %29 = arith.mulf %26, %28 : vector<16x8xf32>
    %30 = arith.truncf %29 : vector<16x8xf32> to vector<16x8xbf16>
    %31 = vector.extract_strided_slice %12 {offsets = [0, 0], sizes = [8, 32], strides = [1, 1]} : vector<32x32xbf16> to vector<8x32xbf16>
    %cst_15 = arith.constant dense<0.000000e+00> : vector<16x32xf32>
    %32 = tpu.matmul %30, %31, %cst_15 {dimension_numbers = #tpu.dot_dimension_numbers<[1], [0], [0], [1], [0, 0, 1, 1], [], []>} : vector<16x8xbf16>, vector<8x32xbf16>, vector<16x32xf32> -> vector<16x32xf32>
    %33 = vector.extract_strided_slice %9 {offsets = [0, 8], sizes = [16, 8], strides = [1, 1]} : vector<16x96xbf16> to vector<16x8xbf16>
    %34 = vector.extract_strided_slice %9 {offsets = [0, 40], sizes = [16, 8], strides = [1, 1]} : vector<16x96xbf16> to vector<16x8xbf16>
    %35 = vector.extract_strided_slice %9 {offsets = [0, 72], sizes = [16, 8], strides = [1, 1]} : vector<16x96xbf16> to vector<16x8xbf16>
    "tpu.trace_start"() <{level = 10 : i32, message = "md,nd->mn"}> : () -> ()
    %cst_16 = arith.constant dense<0.000000e+00> : vector<16x16xf32>
    %36 = tpu.matmul %33, %34, %cst_16 {dimension_numbers = #tpu.dot_dimension_numbers<[1], [1], [0], [0], [0, 0, 1, 0], [], []>} : vector<16x8xbf16>, vector<16x8xbf16>, vector<16x16xf32> -> vector<16x16xf32>
    "tpu.trace_stop"() : () -> ()
    %37 = arith.addf %36, %11 : vector<16x16xf32>
    %cst_17 = arith.constant dense<0xFF800000> : vector<16xf32>
    %38 = vector.multi_reduction <maximumf>, %37, %cst_17 [1] : vector<16x16xf32> to vector<16xf32>
    %39 = vector.shape_cast %38 : vector<16xf32> to vector<16x1xf32>
    %40 = vector.broadcast %39 : vector<16x1xf32> to vector<16x16xf32>
    %41 = arith.subf %37, %40 : vector<16x16xf32>
    %42 = math.exp %41 : vector<16x16xf32>
    %cst_18 = arith.constant dense<0.000000e+00> : vector<16xf32>
    %43 = vector.multi_reduction <add>, %42, %cst_18 [1] : vector<16x16xf32> to vector<16xf32>
    %44 = vector.shape_cast %43 : vector<16xf32> to vector<16x1xf32>
    %45 = arith.truncf %42 : vector<16x16xf32> to vector<16x16xbf16>
    %cst_19 = arith.constant dense<0.000000e+00> : vector<16x8xf32>
    %46 = tpu.matmul %45, %35, %cst_19 {dimension_numbers = #tpu.dot_dimension_numbers<[1], [0], [0], [1], [0, 0, 1, 1], [], []>} : vector<16x16xbf16>, vector<16x8xbf16>, vector<16x8xf32> -> vector<16x8xf32>
    %47 = tpu.reciprocal %44 {approx = true} : vector<16x1xf32> -> vector<16x1xf32>
    %48 = vector.broadcast %47 : vector<16x1xf32> to vector<16x8xf32>
    %49 = arith.mulf %46, %48 : vector<16x8xf32>
    %50 = arith.truncf %49 : vector<16x8xf32> to vector<16x8xbf16>
    %51 = vector.extract_strided_slice %12 {offsets = [8, 0], sizes = [8, 32], strides = [1, 1]} : vector<32x32xbf16> to vector<8x32xbf16>
    %cst_20 = arith.constant dense<0.000000e+00> : vector<16x32xf32>
    %52 = tpu.matmul %50, %51, %cst_20 {dimension_numbers = #tpu.dot_dimension_numbers<[1], [0], [0], [1], [0, 0, 1, 1], [], []>} : vector<16x8xbf16>, vector<8x32xbf16>, vector<16x32xf32> -> vector<16x32xf32>
    %53 = arith.addf %32, %52 : vector<16x32xf32>
    %54 = vector.extract_strided_slice %9 {offsets = [0, 16], sizes = [16, 8], strides = [1, 1]} : vector<16x96xbf16> to vector<16x8xbf16>
    %55 = vector.extract_strided_slice %9 {offsets = [0, 48], sizes = [16, 8], strides = [1, 1]} : vector<16x96xbf16> to vector<16x8xbf16>
    %56 = vector.extract_strided_slice %9 {offsets = [0, 80], sizes = [16, 8], strides = [1, 1]} : vector<16x96xbf16> to vector<16x8xbf16>
    "tpu.trace_start"() <{level = 10 : i32, message = "md,nd->mn"}> : () -> ()
    %cst_21 = arith.constant dense<0.000000e+00> : vector<16x16xf32>
    %57 = tpu.matmul %54, %55, %cst_21 {dimension_numbers = #tpu.dot_dimension_numbers<[1], [1], [0], [0], [0, 0, 1, 0], [], []>} : vector<16x8xbf16>, vector<16x8xbf16>, vector<16x16xf32> -> vector<16x16xf32>
    "tpu.trace_stop"() : () -> ()
    %58 = arith.addf %57, %11 : vector<16x16xf32>
    %cst_22 = arith.constant dense<0xFF800000> : vector<16xf32>
    %59 = vector.multi_reduction <maximumf>, %58, %cst_22 [1] : vector<16x16xf32> to vector<16xf32>
    %60 = vector.shape_cast %59 : vector<16xf32> to vector<16x1xf32>
    %61 = vector.broadcast %60 : vector<16x1xf32> to vector<16x16xf32>
    %62 = arith.subf %58, %61 : vector<16x16xf32>
    %63 = math.exp %62 : vector<16x16xf32>
    %cst_23 = arith.constant dense<0.000000e+00> : vector<16xf32>
    %64 = vector.multi_reduction <add>, %63, %cst_23 [1] : vector<16x16xf32> to vector<16xf32>
    %65 = vector.shape_cast %64 : vector<16xf32> to vector<16x1xf32>
    %66 = arith.truncf %63 : vector<16x16xf32> to vector<16x16xbf16>
    %cst_24 = arith.constant dense<0.000000e+00> : vector<16x8xf32>
    %67 = tpu.matmul %66, %56, %cst_24 {dimension_numbers = #tpu.dot_dimension_numbers<[1], [0], [0], [1], [0, 0, 1, 1], [], []>} : vector<16x16xbf16>, vector<16x8xbf16>, vector<16x8xf32> -> vector<16x8xf32>
    %68 = tpu.reciprocal %65 {approx = true} : vector<16x1xf32> -> vector<16x1xf32>
    %69 = vector.broadcast %68 : vector<16x1xf32> to vector<16x8xf32>
    %70 = arith.mulf %67, %69 : vector<16x8xf32>
    %71 = arith.truncf %70 : vector<16x8xf32> to vector<16x8xbf16>
    %72 = vector.extract_strided_slice %12 {offsets = [16, 0], sizes = [8, 32], strides = [1, 1]} : vector<32x32xbf16> to vector<8x32xbf16>
    %cst_25 = arith.constant dense<0.000000e+00> : vector<16x32xf32>
    %73 = tpu.matmul %71, %72, %cst_25 {dimension_numbers = #tpu.dot_dimension_numbers<[1], [0], [0], [1], [0, 0, 1, 1], [], []>} : vector<16x8xbf16>, vector<8x32xbf16>, vector<16x32xf32> -> vector<16x32xf32>
    %74 = arith.addf %53, %73 : vector<16x32xf32>
    %75 = vector.extract_strided_slice %9 {offsets = [0, 24], sizes = [16, 8], strides = [1, 1]} : vector<16x96xbf16> to vector<16x8xbf16>
    %76 = vector.extract_strided_slice %9 {offsets = [0, 56], sizes = [16, 8], strides = [1, 1]} : vector<16x96xbf16> to vector<16x8xbf16>
    %77 = vector.extract_strided_slice %9 {offsets = [0, 88], sizes = [16, 8], strides = [1, 1]} : vector<16x96xbf16> to vector<16x8xbf16>
    "tpu.trace_start"() <{level = 10 : i32, message = "md,nd->mn"}> : () -> ()
    %cst_26 = arith.constant dense<0.000000e+00> : vector<16x16xf32>
    %78 = tpu.matmul %75, %76, %cst_26 {dimension_numbers = #tpu.dot_dimension_numbers<[1], [1], [0], [0], [0, 0, 1, 0], [], []>} : vector<16x8xbf16>, vector<16x8xbf16>, vector<16x16xf32> -> vector<16x16xf32>
    "tpu.trace_stop"() : () -> ()
    %79 = arith.addf %78, %11 : vector<16x16xf32>
    %cst_27 = arith.constant dense<0xFF800000> : vector<16xf32>
    %80 = vector.multi_reduction <maximumf>, %79, %cst_27 [1] : vector<16x16xf32> to vector<16xf32>
    %81 = vector.shape_cast %80 : vector<16xf32> to vector<16x1xf32>
    %82 = vector.broadcast %81 : vector<16x1xf32> to vector<16x16xf32>
    %83 = arith.subf %79, %82 : vector<16x16xf32>
    %84 = math.exp %83 : vector<16x16xf32>
    %cst_28 = arith.constant dense<0.000000e+00> : vector<16xf32>
    %85 = vector.multi_reduction <add>, %84, %cst_28 [1] : vector<16x16xf32> to vector<16xf32>
    %86 = vector.shape_cast %85 : vector<16xf32> to vector<16x1xf32>
    %87 = arith.truncf %84 : vector<16x16xf32> to vector<16x16xbf16>
    %cst_29 = arith.constant dense<0.000000e+00> : vector<16x8xf32>
    %88 = tpu.matmul %87, %77, %cst_29 {dimension_numbers = #tpu.dot_dimension_numbers<[1], [0], [0], [1], [0, 0, 1, 1], [], []>} : vector<16x16xbf16>, vector<16x8xbf16>, vector<16x8xf32> -> vector<16x8xf32>
    %89 = tpu.reciprocal %86 {approx = true} : vector<16x1xf32> -> vector<16x1xf32>
    %90 = vector.broadcast %89 : vector<16x1xf32> to vector<16x8xf32>
    %91 = arith.mulf %88, %90 : vector<16x8xf32>
    %92 = arith.truncf %91 : vector<16x8xf32> to vector<16x8xbf16>
    %93 = vector.extract_strided_slice %12 {offsets = [24, 0], sizes = [8, 32], strides = [1, 1]} : vector<32x32xbf16> to vector<8x32xbf16>
    %cst_30 = arith.constant dense<0.000000e+00> : vector<16x32xf32>
    %94 = tpu.matmul %92, %93, %cst_30 {dimension_numbers = #tpu.dot_dimension_numbers<[1], [0], [0], [1], [0, 0, 1, 1], [], []>} : vector<16x8xbf16>, vector<8x32xbf16>, vector<16x32xf32> -> vector<16x32xf32>
    %95 = arith.addf %74, %94 : vector<16x32xf32>
    %c0_31 = arith.constant 0 : index
    %c0_32 = arith.constant 0 : index
    %96 = vector.load %arg7[%c0_31, %c0_32] : memref<1x32xf32, #tpu.memory_space<vmem>>, vector<1x32xf32>
    %97 = vector.broadcast %96 : vector<1x32xf32> to vector<16x32xf32>
    %98 = arith.addf %95, %97 : vector<16x32xf32>
    %99 = arith.addf %98, %2 : vector<16x32xf32>
    %c0_33 = arith.constant 0 : index
    %c0_34 = arith.constant 0 : index
    %100 = vector.load %arg8[%c0_33, %c0_34] : memref<1x32xf32, #tpu.memory_space<vmem>>, vector<1x32xf32>
    %c0_35 = arith.constant 0 : index
    %c0_36 = arith.constant 0 : index
    %101 = vector.load %arg9[%c0_35, %c0_36] : memref<1x32xf32, #tpu.memory_space<vmem>>, vector<1x32xf32>
    %cst_37 = arith.constant dense<0.000000e+00> : vector<16xf32>
    %102 = vector.multi_reduction <add>, %99, %cst_37 [1] : vector<16x32xf32> to vector<16xf32>
    %103 = vector.shape_cast %102 : vector<16xf32> to vector<16x1xf32>
    %cst_38 = arith.constant 3.200000e+01 : f32
    %104 = vector.broadcast %cst_38 : f32 to vector<16x1xf32>
    %105 = arith.divf %103, %104 : vector<16x1xf32>
    %106 = vector.broadcast %105 : vector<16x1xf32> to vector<16x32xf32>
    %107 = arith.subf %99, %106 : vector<16x32xf32>
    %108 = arith.mulf %107, %107 : vector<16x32xf32>
    %cst_39 = arith.constant dense<0.000000e+00> : vector<16xf32>
    %109 = vector.multi_reduction <add>, %108, %cst_39 [1] : vector<16x32xf32> to vector<16xf32>
    %110 = vector.shape_cast %109 : vector<16xf32> to vector<16x1xf32>
    %cst_40 = arith.constant 3.200000e+01 : f32
    %111 = vector.broadcast %cst_40 : f32 to vector<16x1xf32>
    %112 = arith.divf %110, %111 : vector<16x1xf32>
    %113 = vector.broadcast %105 : vector<16x1xf32> to vector<16x32xf32>
    %114 = arith.subf %99, %113 : vector<16x32xf32>
    %cst_41 = arith.constant 9.99999974E-6 : f32
    %115 = vector.broadcast %cst_41 : f32 to vector<16x1xf32>
    %116 = arith.addf %112, %115 : vector<16x1xf32>
    %117 = math.rsqrt %116 : vector<16x1xf32>
    %118 = vector.broadcast %117 : vector<16x1xf32> to vector<16x32xf32>
    %119 = arith.mulf %114, %118 : vector<16x32xf32>
    %120 = vector.broadcast %100 : vector<1x32xf32> to vector<16x32xf32>
    %121 = arith.mulf %119, %120 : vector<16x32xf32>
    %122 = vector.broadcast %101 : vector<1x32xf32> to vector<16x32xf32>
    %123 = arith.addf %121, %122 : vector<16x32xf32>
    %124 = arith.truncf %123 : vector<16x32xf32> to vector<16x32xbf16>
    %c0_42 = arith.constant 0 : index
    %c0_43 = arith.constant 0 : index
    %125 = vector.load %arg10[%c0_42, %c0_43] : memref<32x128xbf16, #tpu.memory_space<vmem>>, vector<32x128xbf16>
    %cst_44 = arith.constant dense<0.000000e+00> : vector<16x128xf32>
    %126 = tpu.matmul %124, %125, %cst_44 {dimension_numbers = #tpu.dot_dimension_numbers<[1], [0], [0], [1], [0, 0, 1, 1], [], []>} : vector<16x32xbf16>, vector<32x128xbf16>, vector<16x128xf32> -> vector<16x128xf32>
    %c0_45 = arith.constant 0 : index
    %c0_46 = arith.constant 0 : index
    %127 = vector.load %arg11[%c0_45, %c0_46] : memref<1x128xf32, #tpu.memory_space<vmem>>, vector<1x128xf32>
    %128 = vector.broadcast %127 : vector<1x128xf32> to vector<16x128xf32>
    %129 = arith.addf %126, %128 : vector<16x128xf32>
    %cst_47 = arith.constant 0.000000e+00 : f32
    %130 = vector.broadcast %cst_47 : f32 to vector<16x128xf32>
    %131 = arith.maximumf %129, %130 : vector<16x128xf32>
    %132 = arith.truncf %131 : vector<16x128xf32> to vector<16x128xbf16>
    %c0_48 = arith.constant 0 : index
    %c0_49 = arith.constant 0 : index
    %133 = vector.load %arg12[%c0_48, %c0_49] : memref<128x32xbf16, #tpu.memory_space<vmem>>, vector<128x32xbf16>
    %cst_50 = arith.constant dense<0.000000e+00> : vector<16x32xf32>
    %134 = tpu.matmul %132, %133, %cst_50 {dimension_numbers = #tpu.dot_dimension_numbers<[1], [0], [0], [1], [0, 0, 1, 1], [], []>} : vector<16x128xbf16>, vector<128x32xbf16>, vector<16x32xf32> -> vector<16x32xf32>
    %c0_51 = arith.constant 0 : index
    %c0_52 = arith.constant 0 : index
    %135 = vector.load %arg13[%c0_51, %c0_52] : memref<1x32xf32, #tpu.memory_space<vmem>>, vector<1x32xf32>
    %136 = vector.broadcast %135 : vector<1x32xf32> to vector<16x32xf32>
    %137 = arith.addf %134, %136 : vector<16x32xf32>
    %138 = arith.addf %137, %123 : vector<16x32xf32>
    %c0_53 = arith.constant 0 : index
    %c0_54 = arith.constant 0 : index
    %139 = vector.load %arg14[%c0_53, %c0_54] : memref<1x32xf32, #tpu.memory_space<vmem>>, vector<1x32xf32>
    %c0_55 = arith.constant 0 : index
    %c0_56 = arith.constant 0 : index
    %140 = vector.load %arg15[%c0_55, %c0_56] : memref<1x32xf32, #tpu.memory_space<vmem>>, vector<1x32xf32>
    %cst_57 = arith.constant dense<0.000000e+00> : vector<16xf32>
    %141 = vector.multi_reduction <add>, %138, %cst_57 [1] : vector<16x32xf32> to vector<16xf32>
    %142 = vector.shape_cast %141 : vector<16xf32> to vector<16x1xf32>
    %cst_58 = arith.constant 3.200000e+01 : f32
    %143 = vector.broadcast %cst_58 : f32 to vector<16x1xf32>
    %144 = arith.divf %142, %143 : vector<16x1xf32>
    %145 = vector.broadcast %144 : vector<16x1xf32> to vector<16x32xf32>
    %146 = arith.subf %138, %145 : vector<16x32xf32>
    %147 = arith.mulf %146, %146 : vector<16x32xf32>
    %cst_59 = arith.constant dense<0.000000e+00> : vector<16xf32>
    %148 = vector.multi_reduction <add>, %147, %cst_59 [1] : vector<16x32xf32> to vector<16xf32>
    %149 = vector.shape_cast %148 : vector<16xf32> to vector<16x1xf32>
    %cst_60 = arith.constant 3.200000e+01 : f32
    %150 = vector.broadcast %cst_60 : f32 to vector<16x1xf32>
    %151 = arith.divf %149, %150 : vector<16x1xf32>
    %152 = vector.broadcast %144 : vector<16x1xf32> to vector<16x32xf32>
    %153 = arith.subf %138, %152 : vector<16x32xf32>
    %cst_61 = arith.constant 9.99999974E-6 : f32
    %154 = vector.broadcast %cst_61 : f32 to vector<16x1xf32>
    %155 = arith.addf %151, %154 : vector<16x1xf32>
    %156 = math.rsqrt %155 : vector<16x1xf32>
    %157 = vector.broadcast %156 : vector<16x1xf32> to vector<16x32xf32>
    %158 = arith.mulf %153, %157 : vector<16x32xf32>
    %159 = vector.broadcast %139 : vector<1x32xf32> to vector<16x32xf32>
    %160 = arith.mulf %158, %159 : vector<16x32xf32>
    %161 = vector.broadcast %140 : vector<1x32xf32> to vector<16x32xf32>
    %162 = arith.addf %160, %161 : vector<16x32xf32>
    %163 = arith.truncf %162 : vector<16x32xf32> to vector<16x32xbf16>
    %c0_62 = arith.constant 0 : index
    %c0_63 = arith.constant 0 : index
    %164 = vector.load %arg16[%c0_62, %c0_63] : memref<16x32xbf16, #tpu.memory_space<vmem>>, vector<16x32xbf16>
    tpu.vector_store %arg16[%c0_62, %c0_63], %163 {strides = array<i32>} : memref<16x32xbf16, #tpu.memory_space<vmem>>, vector<16x32xbf16>,
    return
  }
  func.func @transform_0(%arg0: i32) -> (i32, i32) {
    %c0_i32 = arith.constant 0 : i32
    %c0_i32_0 = arith.constant 0 : i32
    return %arg0, %c0_i32 : i32, i32
  }
  func.func @transform_1(%arg0: i32) -> (i32, i32) {
    %c0_i32 = arith.constant 0 : i32
    %c0_i32_0 = arith.constant 0 : i32
    %c0_i32_1 = arith.constant 0 : i32
    return %c0_i32, %c0_i32_0 : i32, i32
  }
  func.func @transform_2(%arg0: i32) -> (i32, i32) {
    %c0_i32 = arith.constant 0 : i32
    %c0_i32_0 = arith.constant 0 : i32
    %c0_i32_1 = arith.constant 0 : i32
    return %c0_i32, %c0_i32_0 : i32, i32
  }
  func.func @transform_3(%arg0: i32) -> (i32, i32) {
    %c0_i32 = arith.constant 0 : i32
    %c0_i32_0 = arith.constant 0 : i32
    %c0_i32_1 = arith.constant 0 : i32
    return %c0_i32, %c0_i32_0 : i32, i32
  }
  func.func @transform_4(%arg0: i32) -> (i32, i32) {
    %c0_i32 = arith.constant 0 : i32
    %c0_i32_0 = arith.constant 0 : i32
    %c0_i32_1 = arith.constant 0 : i32
    return %c0_i32, %c0_i32_0 : i32, i32
  }
  func.func @transform_5(%arg0: i32) -> (i32, i32) {
    %c0_i32 = arith.constant 0 : i32
    %c0_i32_0 = arith.constant 0 : i32
    %c0_i32_1 = arith.constant 0 : i32
    return %c0_i32, %c0_i32_0 : i32, i32
  }
  func.func @transform_6(%arg0: i32) -> (i32, i32) {
    %c0_i32 = arith.constant 0 : i32
    %c0_i32_0 = arith.constant 0 : i32
    %c0_i32_1 = arith.constant 0 : i32
    return %c0_i32, %c0_i32_0 : i32, i32
  }
  func.func @transform_7(%arg0: i32) -> (i32, i32) {
    %c0_i32 = arith.constant 0 : i32
    %c0_i32_0 = arith.constant 0 : i32
    %c0_i32_1 = arith.constant 0 : i32
    return %c0_i32, %c0_i32_0 : i32, i32
  }
  func.func @transform_8(%arg0: i32) -> (i32, i32) {
    %c0_i32 = arith.constant 0 : i32
    %c0_i32_0 = arith.constant 0 : i32
    %c0_i32_1 = arith.constant 0 : i32
    return %c0_i32, %c0_i32_0 : i32, i32
  }
  func.func @transform_9(%arg0: i32) -> (i32, i32) {
    %c0_i32 = arith.constant 0 : i32
    %c0_i32_0 = arith.constant 0 : i32
    %c0_i32_1 = arith.constant 0 : i32
    return %c0_i32, %c0_i32_0 : i32, i32
  }
  func.func @transform_10(%arg0: i32) -> (i32, i32) {
    %c0_i32 = arith.constant 0 : i32
    %c0_i32_0 = arith.constant 0 : i32
    %c0_i32_1 = arith.constant 0 : i32
    return %c0_i32, %c0_i32_0 : i32, i32
  }
  func.func @transform_11(%arg0: i32) -> (i32, i32) {
    %c0_i32 = arith.constant 0 : i32
    %c0_i32_0 = arith.constant 0 : i32
    %c0_i32_1 = arith.constant 0 : i32
    return %c0_i32, %c0_i32_0 : i32, i32
  }
  func.func @transform_12(%arg0: i32) -> (i32, i32) {
    %c0_i32 = arith.constant 0 : i32
    %c0_i32_0 = arith.constant 0 : i32
    %c0_i32_1 = arith.constant 0 : i32
    return %c0_i32, %c0_i32_0 : i32, i32
  }
  func.func @transform_13(%arg0: i32) -> (i32, i32) {
    %c0_i32 = arith.constant 0 : i32
    %c0_i32_0 = arith.constant 0 : i32
    %c0_i32_1 = arith.constant 0 : i32
    return %c0_i32, %c0_i32_0 : i32, i32
  }
  func.func @transform_14(%arg0: i32) -> (i32, i32) {
    %c0_i32 = arith.constant 0 : i32
    %c0_i32_0 = arith.constant 0 : i32
    %c0_i32_1 = arith.constant 0 : i32
    return %c0_i32, %c0_i32_0 : i32, i32
  }
  func.func @transform_15(%arg0: i32) -> (i32, i32) {
    %c0_i32 = arith.constant 0 : i32
    %c0_i32_0 = arith.constant 0 : i32
    return %arg0, %c0_i32 : i32, i32
  }
}

module attributes {stable_mosaic.version = 11 : i64} {
  func.func @encoder_block_kernel(%arg0: i32, %arg1: memref<16x32xf32, #tpu.memory_space<vmem>>, %arg2: memref<16x32xf32, #tpu.memory_space<vmem>>, %arg3: memref<16x16xbf16, #tpu.memory_space<vmem>>, %arg4: memref<32x96xbf16, #tpu.memory_space<vmem>>, %arg5: memref<1x96xf32, #tpu.memory_space<vmem>>, %arg6: memref<32x32xbf16, #tpu.memory_space<vmem>>, %arg7: memref<1x32xf32, #tpu.memory_space<vmem>>, %arg8: memref<1x32xf32, #tpu.memory_space<vmem>>, %arg9: memref<1x32xf32, #tpu.memory_space<vmem>>, %arg10: memref<32x128xbf16, #tpu.memory_space<vmem>>, %arg11: memref<1x128xf32, #tpu.memory_space<vmem>>, %arg12: memref<128x32xbf16, #tpu.memory_space<vmem>>, %arg13: memref<1x32xf32, #tpu.memory_space<vmem>>, %arg14: memref<1x32xf32, #tpu.memory_space<vmem>>, %arg15: memref<1x32xf32, #tpu.memory_space<vmem>>, %arg16: memref<16x32xbf16, #tpu.memory_space<vmem>>) attributes {dimension_semantics = [#tpu.dimension_semantics<parallel>], iteration_bounds = array<i64: 1>, scalar_prefetch = 0 : i64, scratch_operands = 0 : i64, tpu.core_type = #tpu.core_type<tc>, window_params = [{transform_indices = @transform_0, window_bounds = array<i64: 16, 32>}, {pipeline_mode = #tpu.pipeline_mode<synchronous>, transform_indices = @transform_1, window_bounds = array<i64: 16, 32>}, {pipeline_mode = #tpu.pipeline_mode<synchronous>, transform_indices = @transform_2, window_bounds = array<i64: 16, 16>}, {pipeline_mode = #tpu.pipeline_mode<synchronous>, transform_indices = @transform_3, window_bounds = array<i64: 32, 96>}, {pipeline_mode = #tpu.pipeline_mode<synchronous>, transform_indices = @transform_4, window_bounds = array<i64: 1, 96>}, {pipeline_mode = #tpu.pipeline_mode<synchronous>, transform_indices = @transform_5, window_bounds = array<i64: 32, 32>}, {pipeline_mode = #tpu.pipeline_mode<synchronous>, transform_indices = @transform_6, window_bounds = array<i64: 1, 32>}, {pipeline_mode = #tpu.pipeline_mode<synchronous>, transform_indices = @transform_7, window_bounds = array<i64: 1, 32>}, {pipeline_mode = #tpu.pipeline_mode<synchronous>, transform_indices = @transform_8, window_bounds = array<i64: 1, 32>}, {pipeline_mode = #tpu.pipeline_mode<synchronous>, transform_indices = @transform_9, window_bounds = array<i64: 32, 128>}, {pipeline_mode = #tpu.pipeline_mode<synchronous>, transform_indices = @transform_10, window_bounds = array<i64: 1, 128>}, {pipeline_mode = #tpu.pipeline_mode<synchronous>, transform_indices = @transform_11, window_bounds = array<i64: 128, 32>}, {pipeline_mode = #tpu.pipeline_mode<synchronous>, transform_indices = @transform_12, window_bounds = array<i64: 1, 32>}, {pipeline_mode = #tpu.pipeline_mode<synchronous>, transform_indices = @transform_13, window_bounds = array<i64: 1, 32>}, {pipeline_mode = #tpu.pipeline_mode<synchronous>, transform_indices = @transform_14, window_bounds = array<i64: 1, 32>}, {transform_indices = @transform_15, window_bounds = array<i64: 16, 32>}]} {
    %c0 = arith.constant 0 : index
    %c0_0 = arith.constant 0 : index
    %0 = vector.load %arg1[%c0, %c0_0] : memref<16x32xf32, #tpu.memory_space<vmem>>, vector<16x32xf32>
    %c0_1 = arith.constant 0 : index
    %c0_2 = arith.constant 0 : index
    %1 = vector.load %arg2[%c0_1, %c0_2] : memref<16x32xf32, #tpu.memory_space<vmem>>, vector<16x32xf32>
    %2 = arith.addf %0, %1 : vector<16x32xf32>
    %3 = arith.truncf %2 : vector<16x32xf32> to vector<16x32xbf16>
    %c0_3 = arith.constant 0 : index
    %c0_4 = arith.constant 0 : index
    %4 = vector.load %arg4[%c0_3, %c0_4] : memref<32x96xbf16, #tpu.memory_space<vmem>>, vector<32x96xbf16>
    %cst = arith.constant dense<0.000000e+00> : vector<16x96xf32>
    %5 = tpu.matmul %3, %4, %cst {dimension_numbers = #tpu.dot_dimension_numbers<[1], [0], [0], [1], [0, 0, 1, 1], [], []>} : vector<16x32xbf16>, vector<32x96xbf16>, vector<16x96xf32> -> vector<16x96xf32>
    %c0_5 = arith.constant 0 : index
    %c0_6 = arith.constant 0 : index
    %6 = vector.load %arg5[%c0_5, %c0_6] : memref<1x96xf32, #tpu.memory_space<vmem>>, vector<1x96xf32>
    %7 = vector.broadcast %6 : vector<1x96xf32> to vector<16x96xf32>
    %8 = arith.addf %5, %7 : vector<16x96xf32>
    %9 = arith.truncf %8 : vector<16x96xf32> to vector<16x96xbf16>
    %c0_7 = arith.constant 0 : index
    %c0_8 = arith.constant 0 : index
    %10 = vector.load %arg3[%c0_7, %c0_8] : memref<16x16xbf16, #tpu.memory_space<vmem>>, vector<16x16xbf16>
    %11 = arith.extf %10 : vector<16x16xbf16> to vector<16x16xf32>
    %c0_9 = arith.constant 0 : index
    %c0_10 = arith.constant 0 : index
    %12 = vector.load %arg6[%c0_9, %c0_10] : memref<32x32xbf16, #tpu.memory_space<vmem>>, vector<32x32xbf16>
    %13 = vector.extract_strided_slice %9 {offsets = [0, 0], sizes = [16, 8], strides = [1, 1]} : vector<16x96xbf16> to vector<16x8xbf16>
    %14 = vector.extract_strided_slice %9 {offsets = [0, 32], sizes = [16, 8], strides = [1, 1]} : vector<16x96xbf16> to vector<16x8xbf16>
    %15 = vector.extract_strided_slice %9 {offsets = [0, 64], sizes = [16, 8], strides = [1, 1]} : vector<16x96xbf16> to vector<16x8xbf16>
    "tpu.trace_start"() <{level = 10 : i32, message = "md,nd->mn"}> : () -> ()
    %cst_11 = arith.constant dense<0.000000e+00> : vector<16x16xf32>
    %16 = tpu.matmul %13, %14, %cst_11 {dimension_numbers = #tpu.dot_dimension_numbers<[1], [1], [0], [0], [0, 0, 1, 0], [], []>} : vector<16x8xbf16>, vector<16x8xbf16>, vector<16x16xf32> -> vector<16x16xf32>
    "tpu.trace_stop"() : () -> ()
    %17 = arith.addf %16, %11 : vector<16x16xf32>
    %cst_12 = arith.constant dense<0xFF800000> : vector<16xf32>
    %18 = vector.multi_reduction <maximumf>, %17, %cst_12 [1] : vector<16x16xf32> to vector<16xf32>
    %19 = vector.shape_cast %18 : vector<16xf32> to vector<16x1xf32>
    %20 = vector.broadcast %19 : vector<16x1xf32> to vector<16x16xf32>
    %21 = arith.subf %17, %20 : vector<16x16xf32>
    %22 = math.exp %21 : vector<16x16xf32>
    %cst_13 = arith.constant dense<0.000000e+00> : vector<16xf32>
    %23 = vector.multi_reduction <add>, %22, %cst_13 [1] : vector<16x16xf32> to vector<16xf32>
    %24 = vector.shape_cast %23 : vector<16xf32> to vector<16x1xf32>
    %25 = arith.truncf %22 : vector<16x16xf32> to vector<16x16xbf16>
    %cst_14 = arith.constant dense<0.000000e+00> : vector<16x8xf32>
    %26 = tpu.matmul %25, %15, %cst_14 {dimension_numbers = #tpu.dot_dimension_numbers<[1], [0], [0], [1], [0, 0, 1, 1], [], []>} : vector<16x16xbf16>, vector<16x8xbf16>, vector<16x8xf32> -> vector<16x8xf32>
    %27 = tpu.reciprocal %24 {approx = true} : vector<16x1xf32> -> vector<16x1xf32>
    %28 = vector.broadcast %27 : vector<16x1xf32> to vector<16x8xf32>
    %29 = arith.mulf %26, %28 : vector<16x8xf32>
    %30 = arith.truncf %29 : vector<16x8xf32> to vector<16x8xbf16>
    %31 = vector.extract_strided_slice %12 {offsets = [0, 0], sizes = [8, 32], strides = [1, 1]} : vector<32x32xbf16> to vector<8x32xbf16>
    %cst_15 = arith.constant dense<0.000000e+00> : vector<16x32xf32>
    %32 = tpu.matmul %30, %31, %cst_15 {dimension_numbers = #tpu.dot_dimension_numbers<[1], [0], [0], [1], [0, 0, 1, 1], [], []>} : vector<16x8xbf16>, vector<8x32xbf16>, vector<16x32xf32> -> vector<16x32xf32>
    %33 = vector.extract_strided_slice %9 {offsets = [0, 8], sizes = [16, 8], strides = [1, 1]} : vector<16x96xbf16> to vector<16x8xbf16>
    %34 = vector.extract_strided_slice %9 {offsets = [0, 40], sizes = [16, 8], strides = [1, 1]} : vector<16x96xbf16> to vector<16x8xbf16>
    %35 = vector.extract_strided_slice %9 {offsets = [0, 72], sizes = [16, 8], strides = [1, 1]} : vector<16x96xbf16> to vector<16x8xbf16>
    "tpu.trace_start"() <{level = 10 : i32, message = "md,nd->mn"}> : () -> ()
    %cst_16 = arith.constant dense<0.000000e+00> : vector<16x16xf32>
    %36 = tpu.matmul %33, %34, %cst_16 {dimension_numbers = #tpu.dot_dimension_numbers<[1], [1], [0], [0], [0, 0, 1, 0], [], []>} : vector<16x8xbf16>, vector<16x8xbf16>, vector<16x16xf32> -> vector<16x16xf32>
    "tpu.trace_stop"() : () -> ()
    %37 = arith.addf %36, %11 : vector<16x16xf32>
    %cst_17 = arith.constant dense<0xFF800000> : vector<16xf32>
    %38 = vector.multi_reduction <maximumf>, %37, %cst_17 [1] : vector<16x16xf32> to vector<16xf32>
    %39 = vector.shape_cast %38 : vector<16xf32> to vector<16x1xf32>
    %40 = vector.broadcast %39 : vector<16x1xf32> to vector<16x16xf32>
    %41 = arith.subf %37, %40 : vector<16x16xf32>
    %42 = math.exp %41 : vector<16x16xf32>
    %cst_18 = arith.constant dense<0.000000e+00> : vector<16xf32>
    %43 = vector.multi_reduction <add>, %42, %cst_18 [1] : vector<16x16xf32> to vector<16xf32>
    %44 = vector.shape_cast %43 : vector<16xf32> to vector<16x1xf32>
    %45 = arith.truncf %42 : vector<16x16xf32> to vector<16x16xbf16>
    %cst_19 = arith.constant dense<0.000000e+00> : vector<16x8xf32>
    %46 = tpu.matmul %45, %35, %cst_19 {dimension_numbers = #tpu.dot_dimension_numbers<[1], [0], [0], [1], [0, 0, 1, 1], [], []>} : vector<16x16xbf16>, vector<16x8xbf16>, vector<16x8xf32> -> vector<16x8xf32>
    %47 = tpu.reciprocal %44 {approx = true} : vector<16x1xf32> -> vector<16x1xf32>
    %48 = vector.broadcast %47 : vector<16x1xf32> to vector<16x8xf32>
    %49 = arith.mulf %46, %48 : vector<16x8xf32>
    %50 = arith.truncf %49 : vector<16x8xf32> to vector<16x8xbf16>
    %51 = vector.extract_strided_slice %12 {offsets = [8, 0], sizes = [8, 32], strides = [1, 1]} : vector<32x32xbf16> to vector<8x32xbf16>
    %cst_20 = arith.constant dense<0.000000e+00> : vector<16x32xf32>
    %52 = tpu.matmul %50, %51, %cst_20 {dimension_numbers = #tpu.dot_dimension_numbers<[1], [0], [0], [1], [0, 0, 1, 1], [], []>} : vector<16x8xbf16>, vector<8x32xbf16>, vector<16x32xf32> -> vector<16x32xf32>
    %53 = arith.addf %32, %52 : vector<16x32xf32>
    %54 = vector.extract_strided_slice %9 {offsets = [0, 16], sizes = [16, 8], strides = [1, 1]} : vector<16x96xbf16> to vector<16x8xbf16>
    %55 = vector.extract_strided_slice %9 {offsets = [0, 48], sizes = [16, 8], strides = [1, 1]} : vector<16x96xbf16> to vector<16x8xbf16>
    %56 = vector.extract_strided_slice %9 {offsets = [0, 80], sizes = [16, 8], strides = [1, 1]} : vector<16x96xbf16> to vector<16x8xbf16>
    "tpu.trace_start"() <{level = 10 : i32, message = "md,nd->mn"}> : () -> ()
    %cst_21 = arith.constant dense<0.000000e+00> : vector<16x16xf32>
    %57 = tpu.matmul %54, %55, %cst_21 {dimension_numbers = #tpu.dot_dimension_numbers<[1], [1], [0], [0], [0, 0, 1, 0], [], []>} : vector<16x8xbf16>, vector<16x8xbf16>, vector<16x16xf32> -> vector<16x16xf32>
    "tpu.trace_stop"() : () -> ()
    %58 = arith.addf %57, %11 : vector<16x16xf32>
    %cst_22 = arith.constant dense<0xFF800000> : vector<16xf32>
    %59 = vector.multi_reduction <maximumf>, %58, %cst_22 [1] : vector<16x16xf32> to vector<16xf32>
    %60 = vector.shape_cast %59 : vector<16xf32> to vector<16x1xf32>
    %61 = vector.broadcast %60 : vector<16x1xf32> to vector<16x16xf32>
    %62 = arith.subf %58, %61 : vector<16x16xf32>
    %63 = math.exp %62 : vector<16x16xf32>
    %cst_23 = arith.constant dense<0.000000e+00> : vector<16xf32>
    %64 = vector.multi_reduction <add>, %63, %cst_23 [1] : vector<16x16xf32> to vector<16xf32>
    %65 = vector.shape_cast %64 : vector<16xf32> to vector<16x1xf32>
    %66 = arith.truncf %63 : vector<16x16xf32> to vector<16x16xbf16>
    %cst_24 = arith.constant dense<0.000000e+00> : vector<16x8xf32>
    %67 = tpu.matmul %66, %56, %cst_24 {dimension_numbers = #tpu.dot_dimension_numbers<[1], [0], [0], [1], [0, 0, 1, 1], [], []>} : vector<16x16xbf16>, vector<16x8xbf16>, vector<16x8xf32> -> vector<16x8xf32>
    %68 = tpu.reciprocal %65 {approx = true} : vector<16x1xf32> -> vector<16x1xf32>
    %69 = vector.broadcast %68 : vector<16x1xf32> to vector<16x8xf32>
    %70 = arith.mulf %67, %69 : vector<16x8xf32>
    %71 = arith.truncf %70 : vector<16x8xf32> to vector<16x8xbf16>
    %72 = vector.extract_strided_slice %12 {offsets = [16, 0], sizes = [8, 32], strides = [1, 1]} : vector<32x32xbf16> to vector<8x32xbf16>
    %cst_25 = arith.constant dense<0.000000e+00> : vector<16x32xf32>
    %73 = tpu.matmul %71, %72, %cst_25 {dimension_numbers = #tpu.dot_dimension_numbers<[1], [0], [0], [1], [0, 0, 1, 1], [], []>} : vector<16x8xbf16>, vector<8x32xbf16>, vector<16x32xf32> -> vector<16x32xf32>
    %74 = arith.addf %53, %73 : vector<16x32xf32>
    %75 = vector.extract_strided_slice %9 {offsets = [0, 24], sizes = [16, 8], strides = [1, 1]} : vector<16x96xbf16> to vector<16x8xbf16>
    %76 = vector.extract_strided_slice %9 {offsets = [0, 56], sizes = [16, 8], strides = [1, 1]} : vector<16x96xbf16> to vector<16x8xbf16>
    %77 = vector.extract_strided_slice %9 {offsets = [0, 88], sizes = [16, 8], strides = [1, 1]} : vector<16x96xbf16> to vector<16x8xbf16>
    "tpu.trace_start"() <{level = 10 : i32, message = "md,nd->mn"}> : () -> ()
    %cst_26 = arith.constant dense<0.000000e+00> : vector<16x16xf32>
    %78 = tpu.matmul %75, %76, %cst_26 {dimension_numbers = #tpu.dot_dimension_numbers<[1], [1], [0], [0], [0, 0, 1, 0], [], []>} : vector<16x8xbf16>, vector<16x8xbf16>, vector<16x16xf32> -> vector<16x16xf32>
    "tpu.trace_stop"() : () -> ()
    %79 = arith.addf %78, %11 : vector<16x16xf32>
    %cst_27 = arith.constant dense<0xFF800000> : vector<16xf32>
    %80 = vector.multi_reduction <maximumf>, %79, %cst_27 [1] : vector<16x16xf32> to vector<16xf32>
    %81 = vector.shape_cast %80 : vector<16xf32> to vector<16x1xf32>
    %82 = vector.broadcast %81 : vector<16x1xf32> to vector<16x16xf32>
    %83 = arith.subf %79, %82 : vector<16x16xf32>
    %84 = math.exp %83 : vector<16x16xf32>
    %cst_28 = arith.constant dense<0.000000e+00> : vector<16xf32>
    %85 = vector.multi_reduction <add>, %84, %cst_28 [1] : vector<16x16xf32> to vector<16xf32>
    %86 = vector.shape_cast %85 : vector<16xf32> to vector<16x1xf32>
    %87 = arith.truncf %84 : vector<16x16xf32> to vector<16x16xbf16>
    %cst_29 = arith.constant dense<0.000000e+00> : vector<16x8xf32>
    %88 = tpu.matmul %87, %77, %cst_29 {dimension_numbers = #tpu.dot_dimension_numbers<[1], [0], [0], [1], [0, 0, 1, 1], [], []>} : vector<16x16xbf16>, vector<16x8xbf16>, vector<16x8xf32> -> vector<16x8xf32>
    %89 = tpu.reciprocal %86 {approx = true} : vector<16x1xf32> -> vector<16x1xf32>
    %90 = vector.broadcast %89 : vector<16x1xf32> to vector<16x8xf32>
    %91 = arith.mulf %88, %90 : vector<16x8xf32>
    %92 = arith.truncf %91 : vector<16x8xf32> to vector<16x8xbf16>
    %93 = vector.extract_strided_slice %12 {offsets = [24, 0], sizes = [8, 32], strides = [1, 1]} : vector<32x32xbf16> to vector<8x32xbf16>
    %cst_30 = arith.constant dense<0.000000e+00> : vector<16x32xf32>
    %94 = tpu.matmul %92, %93, %cst_30 {dimension_numbers = #tpu.dot_dimension_numbers<[1], [0], [0], [1], [0, 0, 1, 1], [], []>} : vector<16x8xbf16>, vector<8x32xbf16>, vector<16x32xf32> -> vector<16x32xf32>
    %95 = arith.addf %74, %94 : vector<16x32xf32>
    %c0_31 = arith.constant 0 : index
    %c0_32 = arith.constant 0 : index
    %96 = vector.load %arg7[%c0_31, %c0_32] : memref<1x32xf32, #tpu.memory_space<vmem>>, vector<1x32xf32>
    %97 = vector.broadcast %96 : vector<1x32xf32> to vector<16x32xf32>
    %98 = arith.addf %95, %97 : vector<16x32xf32>
    %99 = arith.addf %98, %2 : vector<16x32xf32>
    %c0_33 = arith.constant 0 : index
    %c0_34 = arith.constant 0 : index
    %100 = vector.load %arg8[%c0_33, %c0_34] : memref<1x32xf32, #tpu.memory_space<vmem>>, vector<1x32xf32>
    %c0_35 = arith.constant 0 : index
    %c0_36 = arith.constant 0 : index
    %101 = vector.load %arg9[%c0_35, %c0_36] : memref<1x32xf32, #tpu.memory_space<vmem>>, vector<1x32xf32>
    %cst_37 = arith.constant dense<0.000000e+00> : vector<16xf32>
    %102 = vector.multi_reduction <add>, %99, %cst_37 [1] : vector<16x32xf32> to vector<16xf32>
    %103 = vector.shape_cast %102 : vector<16xf32> to vector<16x1xf32>
    %cst_38 = arith.constant 3.200000e+01 : f32
    %104 = vector.broadcast %cst_38 : f32 to vector<16x1xf32>
    %105 = arith.divf %103, %104 : vector<16x1xf32>
    %106 = vector.broadcast %105 : vector<16x1xf32> to vector<16x32xf32>
    %107 = arith.subf %99, %106 : vector<16x32xf32>
    %108 = arith.mulf %107, %107 : vector<16x32xf32>
    %cst_39 = arith.constant dense<0.000000e+00> : vector<16xf32>
    %109 = vector.multi_reduction <add>, %108, %cst_39 [1] : vector<16x32xf32> to vector<16xf32>
    %110 = vector.shape_cast %109 : vector<16xf32> to vector<16x1xf32>
    %cst_40 = arith.constant 3.200000e+01 : f32
    %111 = vector.broadcast %cst_40 : f32 to vector<16x1xf32>
    %112 = arith.divf %110, %111 : vector<16x1xf32>
    %113 = vector.broadcast %105 : vector<16x1xf32> to vector<16x32xf32>
    %114 = arith.subf %99, %113 : vector<16x32xf32>
    %cst_41 = arith.constant 9.99999974E-6 : f32
    %115 = vector.broadcast %cst_41 : f32 to vector<16x1xf32>
    %116 = arith.addf %112, %115 : vector<16x1xf32>
    %117 = math.rsqrt %116 : vector<16x1xf32>
    %118 = vector.broadcast %117 : vector<16x1xf32> to vector<16x32xf32>
    %119 = arith.mulf %114, %118 : vector<16x32xf32>
    %120 = vector.broadcast %100 : vector<1x32xf32> to vector<16x32xf32>
    %121 = arith.mulf %119, %120 : vector<16x32xf32>
    %122 = vector.broadcast %101 : vector<1x32xf32> to vector<16x32xf32>
    %123 = arith.addf %121, %122 : vector<16x32xf32>
    %124 = arith.truncf %123 : vector<16x32xf32> to vector<16x32xbf16>
    %c0_42 = arith.constant 0 : index
    %c0_43 = arith.constant 0 : index
    %125 = vector.load %arg10[%c0_42, %c0_43] : memref<32x128xbf16, #tpu.memory_space<vmem>>, vector<32x128xbf16>
    %cst_44 = arith.constant dense<0.000000e+00> : vector<16x128xf32>
    %126 = tpu.matmul %124, %125, %cst_44 {dimension_numbers = #tpu.dot_dimension_numbers<[1], [0], [0], [1], [0, 0, 1, 1], [], []>} : vector<16x32xbf16>, vector<32x128xbf16>, vector<16x128xf32> -> vector<16x128xf32>
    %c0_45 = arith.constant 0 : index
    %c0_46 = arith.constant 0 : index
    %127 = vector.load %arg11[%c0_45, %c0_46] : memref<1x128xf32, #tpu.memory_space<vmem>>, vector<1x128xf32>
    %128 = vector.broadcast %127 : vector<1x128xf32> to vector<16x128xf32>
    %129 = arith.addf %126, %128 : vector<16x128xf32>
    %cst_47 = arith.constant 0.000000e+00 : f32
    %130 = vector.broadcast %cst_47 : f32 to vector<16x128xf32>
    %131 = arith.maximumf %129, %130 : vector<16x128xf32>
    %132 = arith.truncf %131 : vector<16x128xf32> to vector<16x128xbf16>
    %c0_48 = arith.constant 0 : index
    %c0_49 = arith.constant 0 : index
    %133 = vector.load %arg12[%c0_48, %c0_49] : memref<128x32xbf16, #tpu.memory_space<vmem>>, vector<128x32xbf16>
    %cst_50 = arith.constant dense<0.000000e+00> : vector<16x32xf32>
    %134 = tpu.matmul %132, %133, %cst_50 {dimension_numbers = #tpu.dot_dimension_numbers<[1], [0], [0], [1], [0, 0, 1, 1], [], []>} : vector<16x128xbf16>, vector<128x32xbf16>, vector<16x32xf32> -> vector<16x32xf32>
    %c0_51 = arith.constant 0 : index
    %c0_52 = arith.constant 0 : index
    %135 = vector.load %arg13[%c0_51, %c0_52] : memref<1x32xf32, #tpu.memory_space<vmem>>, vector<1x32xf32>
    %136 = vector.broadcast %135 : vector<1x32xf32> to vector<16x32xf32>
    %137 = arith.addf %134, %136 : vector<16x32xf32>
    %138 = arith.addf %137, %123 : vector<16x32xf32>
    %c0_53 = arith.constant 0 : index
    %c0_54 = arith.constant 0 : index
    %139 = vector.load %arg14[%c0_53, %c0_54] : memref<1x32xf32, #tpu.memory_space<vmem>>, vector<1x32xf32>
    %c0_55 = arith.constant 0 : index
    %c0_56 = arith.constant 0 : index
    %140 = vector.load %arg15[%c0_55, %c0_56] : memref<1x32xf32, #tpu.memory_space<vmem>>, vector<1x32xf32>
    %cst_57 = arith.constant dense<0.000000e+00> : vector<16xf32>
    %141 = vector.multi_reduction <add>, %138, %cst_57 [1] : vector<16x32xf32> to vector<16xf32>
    %142 = vector.shape_cast %141 : vector<16xf32> to vector<16x1xf32>
    %cst_58 = arith.constant 3.200000e+01 : f32
    %143 = vector.broadcast %cst_58 : f32 to vector<16x1xf32>
    %144 = arith.divf %142, %143 : vector<16x1xf32>
    %145 = vector.broadcast %144 : vector<16x1xf32> to vector<16x32xf32>
    %146 = arith.subf %138, %145 : vector<16x32xf32>
    %147 = arith.mulf %146, %146 : vector<16x32xf32>
    %cst_59 = arith.constant dense<0.000000e+00> : vector<16xf32>
    %148 = vector.multi_reduction <add>, %147, %cst_59 [1] : vector<16x32xf32> to vector<16xf32>
    %149 = vector.shape_cast %148 : vector<16xf32> to vector<16x1xf32>
    %cst_60 = arith.constant 3.200000e+01 : f32
    %150 = vector.broadcast %cst_60 : f32 to vector<16x1xf32>
    %151 = arith.divf %149, %150 : vector<16x1xf32>
    %152 = vector.broadcast %144 : vector<16x1xf32> to vector<16x32xf32>
    %153 = arith.subf %138, %152 : vector<16x32xf32>
    %cst_61 = arith.constant 9.99999974E-6 : f32
    %154 = vector.broadcast %cst_61 : f32 to vector<16x1xf32>
    %155 = arith.addf %151, %154 : vector<16x1xf32>
    %156 = math.rsqrt %155 : vector<16x1xf32>
    %157 = vector.broadcast %156 : vector<16x1xf32> to vector<16x32xf32>
    %158 = arith.mulf %153, %157 : vector<16x32xf32>
    %159 = vector.broadcast %139 : vector<1x32xf32> to vector<16x32xf32>
    %160 = arith.mulf %158, %159 : vector<16x32xf32>
    %161 = vector.broadcast %140 : vector<1x32xf32> to vector<16x32xf32>
    %162 = arith.addf %160, %161 : vector<16x32xf32>
    %163 = arith.truncf %162 : vector<16x32xf32> to vector<16x32xbf16>
    %c0_62 = arith.constant 0 : index
    %c0_63 = arith.constant 0 : index
    %164 = vector.load %arg16[%c0_62, %c0_63] : memref<16x32xbf16, #tpu.memory_space<vmem>>, vector<16x32xbf16>
    tpu.vector_store %arg16[%c0_62, %c0_63], %163 {strides = array<i32>} : memref<16x32xbf16, #tpu.memory_space<vmem>>, vector<16x32xbf16>,
    return
  }
  func.func @transform_0(%arg0: i32) -> (i32, i32) {
    %c0_i32 = arith.constant 0 : i32
    %c0_i32_0 = arith.constant 0 : i32
    return %arg0, %c0_i32 : i32, i32
  }
  func.func @transform_1(%arg0: i32) -> (i32, i32) {
    %c0_i32 = arith.constant 0 : i32
    %c0_i32_0 = arith.constant 0 : i32
    %c0_i32_1 = arith.constant 0 : i32
    return %c0_i32, %c0_i32_0 : i32, i32
  }
  func.func @transform_2(%arg0: i32) -> (i32, i32) {
    %c0_i32 = arith.constant 0 : i32
    %c0_i32_0 = arith.constant 0 : i32
    %c0_i32_1 = arith.constant 0 : i32
    return %c0_i32, %c0_i32_0 : i32, i32
  }
  func.func @transform_3(%arg0: i32) -> (i32, i32) {
    %c0_i32 = arith.constant 0 : i32
    %c0_i32_0 = arith.constant 0 : i32
    %c0_i32_1 = arith.constant 0 : i32
    return %c0_i32, %c0_i32_0 : i32, i32
  }
  func.func @transform_4(%arg0: i32) -> (i32, i32) {
    %c0_i32 = arith.constant 0 : i32
    %c0_i32_0 = arith.constant 0 : i32
    %c0_i32_1 = arith.constant 0 : i32
    return %c0_i32, %c0_i32_0 : i32, i32
  }
  func.func @transform_5(%arg0: i32) -> (i32, i32) {
    %c0_i32 = arith.constant 0 : i32
    %c0_i32_0 = arith.constant 0 : i32
    %c0_i32_1 = arith.constant 0 : i32
    return %c0_i32, %c0_i32_0 : i32, i32
  }
  func.func @transform_6(%arg0: i32) -> (i32, i32) {
    %c0_i32 = arith.constant 0 : i32
    %c0_i32_0 = arith.constant 0 : i32
    %c0_i32_1 = arith.constant 0 : i32
    return %c0_i32, %c0_i32_0 : i32, i32
  }
  func.func @transform_7(%arg0: i32) -> (i32, i32) {
    %c0_i32 = arith.constant 0 : i32
    %c0_i32_0 = arith.constant 0 : i32
    %c0_i32_1 = arith.constant 0 : i32
    return %c0_i32, %c0_i32_0 : i32, i32
  }
  func.func @transform_8(%arg0: i32) -> (i32, i32) {
    %c0_i32 = arith.constant 0 : i32
    %c0_i32_0 = arith.constant 0 : i32
    %c0_i32_1 = arith.constant 0 : i32
    return %c0_i32, %c0_i32_0 : i32, i32
  }
  func.func @transform_9(%arg0: i32) -> (i32, i32) {
    %c0_i32 = arith.constant 0 : i32
    %c0_i32_0 = arith.constant 0 : i32
    %c0_i32_1 = arith.constant 0 : i32
    return %c0_i32, %c0_i32_0 : i32, i32
  }
  func.func @transform_10(%arg0: i32) -> (i32, i32) {
    %c0_i32 = arith.constant 0 : i32
    %c0_i32_0 = arith.constant 0 : i32
    %c0_i32_1 = arith.constant 0 : i32
    return %c0_i32, %c0_i32_0 : i32, i32
  }
  func.func @transform_11(%arg0: i32) -> (i32, i32) {
    %c0_i32 = arith.constant 0 : i32
    %c0_i32_0 = arith.constant 0 : i32
    %c0_i32_1 = arith.constant 0 : i32
    return %c0_i32, %c0_i32_0 : i32, i32
  }
  func.func @transform_12(%arg0: i32) -> (i32, i32) {
    %c0_i32 = arith.constant 0 : i32
    %c0_i32_0 = arith.constant 0 : i32
    %c0_i32_1 = arith.constant 0 : i32
    return %c0_i32, %c0_i32_0 : i32, i32
  }
  func.func @transform_13(%arg0: i32) -> (i32, i32) {
    %c0_i32 = arith.constant 0 : i32
    %c0_i32_0 = arith.constant 0 : i32
    %c0_i32_1 = arith.constant 0 : i32
    return %c0_i32, %c0_i32_0 : i32, i32
  }
  func.func @transform_14(%arg0: i32) -> (i32, i32) {
    %c0_i32 = arith.constant 0 : i32
    %c0_i32_0 = arith.constant 0 : i32
    %c0_i32_1 = arith.constant 0 : i32
    return %c0_i32, %c0_i32_0 : i32, i32
  }
  func.func @transform_15(%arg0: i32) -> (i32, i32) {
    %c0_i32 = arith.constant 0 : i32
    %c0_i32_0 = arith.constant 0 : i32
    return %arg0, %c0_i32 : i32, i32
  }
}

</mosaic_0001>

<llo_original>
// kernel: tpu_custom_call.1
$region0: #{tpu_custom_call.1}
  #allocation0 [shape = 'u32[]', space=smem, size = 0x4, offset = 0x4, fixed_abs, tag = 'smem constant byte address 0x4 - core index']
  #allocation1 [shape = 'u32[144,128]{1,0:T(1,128)}', space=vmem, size = 0x12000, scoped, tag = 'internal scratch']
  %s0 = inlined_call_operand.vmem [shape: f32[16,32], index: 0, kind: input, shape index: {}]
  %s1 = inlined_call_operand.vmem [shape: f32[16,32], index: 1, kind: input, shape index: {}]
  %s2 = inlined_call_operand.hbm [shape: bf16[16,16], index: 2, kind: input, shape index: {}]
  %s3 = inlined_call_operand.vmem [shape: bf16[32,96], index: 3, kind: input, shape index: {}]
  %s4 = inlined_call_operand.vmem [shape: f32[1,96], index: 4, kind: input, shape index: {}]
  %s5 = inlined_call_operand.vmem [shape: bf16[32,32], index: 5, kind: input, shape index: {}]
  %s6 = inlined_call_operand.vmem [shape: f32[1,32], index: 6, kind: input, shape index: {}]
  %s7 = inlined_call_operand.vmem [shape: f32[1,32], index: 7, kind: input, shape index: {}]
  %s8 = inlined_call_operand.vmem [shape: f32[1,32], index: 8, kind: input, shape index: {}]
  %s9 = inlined_call_operand.vmem [shape: bf16[32,128], index: 9, kind: input, shape index: {}]
  %s10 = inlined_call_operand.hbm [shape: f32[1,128], index: 10, kind: input, shape index: {}]
  %s11 = inlined_call_operand.vmem [shape: bf16[128,32], index: 11, kind: input, shape index: {}]
  %s12 = inlined_call_operand.vmem [shape: f32[1,32], index: 12, kind: input, shape index: {}]
  %s13 = inlined_call_operand.vmem [shape: f32[1,32], index: 13, kind: input, shape index: {}]
  %s14 = inlined_call_operand.vmem [shape: f32[1,32], index: 14, kind: input, shape index: {}]
  %s15 = inlined_call_operand.hbm [shape: bf16[16,32], index: 15, kind: output, shape index: {}]
  %s16 = sld [smem:[#allocation0]]
  $region78: #{tpu_custom_call.1} parent=0
    _
  %s18 = ssub.s32 1, %s16
  %s19 = scalar_select 0, %s18, %s16
  $region1: #{tpu_custom_call.1} parent=0
    #allocation2 [shape = 'u8[4096]{0}', space=vmem, size = 0x1000, scoped, tag = 'input window, operand 2, single buffered']
    #allocation3 [shape = 's32[1]{0}', space=sflag, size = 0x4, scoped, tag = 'scoped memory for tpu_custom_call.1']
    #allocation4 [shape = 's32[1]{0}', space=sflag, size = 0x4, scoped, tag = 'scoped memory for tpu_custom_call.1']
    #allocation5 [shape = 'u8[512]{0}', space=vmem, size = 0x400, scoped, tag = 'input window, operand 10, single buffered']
    #allocation6 [shape = 's32[1]{0}', space=sflag, size = 0x4, scoped, tag = 'scoped memory for tpu_custom_call.1']
    #allocation7 [shape = 'u8[4096]{0}', space=vmem, size = 0x1000, scoped, tag = 'output window, operand 0, single buffered']
    %20 = vsyncpa [#allocation3], 0
    %21 = vsyncpa [#allocation6], 0
    %22 = vsyncpa [#allocation4], 0
    // Predicated region
    $region2: #{tpu_custom_call.1} parent=1 // pred_check
      _
    $region3: #{tpu_custom_call.1} parent=1 // pred_check_branch
      %24 = sbr.rel (0) target = $region5
    $region4: #{tpu_custom_call.1} parent=1 // pred_region
      _
    $region5: #{tpu_custom_call.1} parent=1 // pred_fallthru
      _
    // Predicated region
    $region6: #{tpu_custom_call.1} parent=1 // pred_check
      _
    $region7: #{tpu_custom_call.1} parent=1 // pred_check_branch
      %26 = sbr.rel (0) target = $region9
    $region8: #{tpu_custom_call.1} parent=1 // pred_region
      _
    $region9: #{tpu_custom_call.1} parent=1 // pred_fallthru
      _
    // Predicated region
    $region10: #{tpu_custom_call.1} parent=1 // pred_check
      _
    $region11: #{tpu_custom_call.1} parent=1 // pred_check_branch
      %28 = sbr.rel (0) target = $region13
    $region12: #{tpu_custom_call.1} parent=1 // pred_region
      %s30 = ssub.s32 128, 128
      %31 = vsyncadd [#allocation3], %s30
      %s32 = sshll.u32 [#allocation2], 4
      %s33 = int_to_ptr.vmem [resolvable:$true] %s32
      %38 = dma.hbm_to_vmem [thread:$0]  %s2, 128, %s33, [#allocation3], 64, 64, 4
    $region13: #{tpu_custom_call.1} parent=1 // pred_fallthru
      _
    // Predicated region
    $region14: #{tpu_custom_call.1} parent=1 // pred_check
      _
    $region15: #{tpu_custom_call.1} parent=1 // pred_check_branch
      %40 = sbr.rel (0) target = $region17
    $region16: #{tpu_custom_call.1} parent=1 // pred_region
      _
    $region17: #{tpu_custom_call.1} parent=1 // pred_fallthru
      _
    // Predicated region
    $region18: #{tpu_custom_call.1} parent=1 // pred_check
      _
    $region19: #{tpu_custom_call.1} parent=1 // pred_check_branch
      %42 = sbr.rel (0) target = $region21
    $region20: #{tpu_custom_call.1} parent=1 // pred_region
      _
    $region21: #{tpu_custom_call.1} parent=1 // pred_fallthru
      _
    // Predicated region
    $region22: #{tpu_custom_call.1} parent=1 // pred_check
      _
    $region23: #{tpu_custom_call.1} parent=1 // pred_check_branch
      %44 = sbr.rel (0) target = $region25
    $region24: #{tpu_custom_call.1} parent=1 // pred_region
      _
    $region25: #{tpu_custom_call.1} parent=1 // pred_fallthru
      _
    // Predicated region
    $region26: #{tpu_custom_call.1} parent=1 // pred_check
      _
    $region27: #{tpu_custom_call.1} parent=1 // pred_check_branch
      %46 = sbr.rel (0) target = $region29
    $region28: #{tpu_custom_call.1} parent=1 // pred_region
      _
    $region29: #{tpu_custom_call.1} parent=1 // pred_fallthru
      _
    // Predicated region
    $region30: #{tpu_custom_call.1} parent=1 // pred_check
      _
    $region31: #{tpu_custom_call.1} parent=1 // pred_check_branch
      %48 = sbr.rel (0) target = $region33
    $region32: #{tpu_custom_call.1} parent=1 // pred_region
      _
    $region33: #{tpu_custom_call.1} parent=1 // pred_fallthru
      _
    // Predicated region
    $region34: #{tpu_custom_call.1} parent=1 // pred_check
      _
    $region35: #{tpu_custom_call.1} parent=1 // pred_check_branch
      %50 = sbr.rel (0) target = $region37
    $region36: #{tpu_custom_call.1} parent=1 // pred_region
      _
    $region37: #{tpu_custom_call.1} parent=1 // pred_fallthru
      _
    // Predicated region
    $region38: #{tpu_custom_call.1} parent=1 // pred_check
      _
    $region39: #{tpu_custom_call.1} parent=1 // pred_check_branch
      %52 = sbr.rel (0) target = $region41
    $region40: #{tpu_custom_call.1} parent=1 // pred_region
      _
    $region41: #{tpu_custom_call.1} parent=1 // pred_fallthru
      _
    // Predicated region
    $region42: #{tpu_custom_call.1} parent=1 // pred_check
      _
    $region43: #{tpu_custom_call.1} parent=1 // pred_check_branch
      %54 = sbr.rel (0) target = $region45
    $region44: #{tpu_custom_call.1} parent=1 // pred_region
      %s56 = ssub.s32 16, 16
      %57 = vsyncadd [#allocation6], %s56
      %s59 = sshll.u32 [#allocation5], 4
      %s60 = int_to_ptr.vmem [resolvable:$true] %s59
      %62 = dma.hbm_to_vmem [thread:$0]  %s10, 16, %s60, [#allocation6]
    $region45: #{tpu_custom_call.1} parent=1 // pred_fallthru
      _
    // Predicated region
    $region46: #{tpu_custom_call.1} parent=1 // pred_check
      _
    $region47: #{tpu_custom_call.1} parent=1 // pred_check_branch
      %64 = sbr.rel (0) target = $region49
    $region48: #{tpu_custom_call.1} parent=1 // pred_region
      _
    $region49: #{tpu_custom_call.1} parent=1 // pred_fallthru
      _
    // Predicated region
    $region50: #{tpu_custom_call.1} parent=1 // pred_check
      _
    $region51: #{tpu_custom_call.1} parent=1 // pred_check_branch
      %66 = sbr.rel (0) target = $region53
    $region52: #{tpu_custom_call.1} parent=1 // pred_region
      _
    $region53: #{tpu_custom_call.1} parent=1 // pred_fallthru
      _
    // Predicated region
    $region54: #{tpu_custom_call.1} parent=1 // pred_check
      _
    $region55: #{tpu_custom_call.1} parent=1 // pred_check_branch
      %68 = sbr.rel (0) target = $region57
    $region56: #{tpu_custom_call.1} parent=1 // pred_region
      _
    $region57: #{tpu_custom_call.1} parent=1 // pred_fallthru
      _
    // Predicated region
    $region58: #{tpu_custom_call.1} parent=1 // pred_check
      _
    $region59: #{tpu_custom_call.1} parent=1 // pred_check_branch
      %70 = sbr.rel (0) target = $region61
    $region60: #{tpu_custom_call.1} parent=1 // pred_region
      _
    $region61: #{tpu_custom_call.1} parent=1 // pred_fallthru
      _
    // Predicated region
    $region62: #{tpu_custom_call.1} parent=1 // pred_check
      _
    $region63: #{tpu_custom_call.1} parent=1 // pred_check_branch
      %72 = sbr.rel (0) target = $region65
    $region64: #{tpu_custom_call.1} parent=1 // pred_region
      %73 = dma.done [#allocation3], 128
    $region65: #{tpu_custom_call.1} parent=1 // pred_fallthru
      _
    // Predicated region
    $region66: #{tpu_custom_call.1} parent=1 // pred_check
      _
    $region67: #{tpu_custom_call.1} parent=1 // pred_check_branch
      %75 = sbr.rel (0) target = $region69
    $region68: #{tpu_custom_call.1} parent=1 // pred_region
      %76 = dma.done [#allocation6], 16
    $region69: #{tpu_custom_call.1} parent=1 // pred_fallthru
      _
    %v78 = vld [vmem:[%s0] sm:$0xff]
    %v79 = vld [vmem:[%s0 + $0x8] sm:$0xff]
    %v80 = vld [vmem:[%s1] sm:$0xff]
    %v81 = vld [vmem:[%s1 + $0x8] sm:$0xff]
    %v82 = vadd.f32 %v78, %v80
    %v83 = vadd.f32 %v79, %v81
    %v84 = vpack.c.bf16 %v83, %v82
    %v85 = vld [vmem:[%s3] sm:$0xf]
    %v86 = vld [vmem:[%s3 + $0x4] sm:$0xf]
    %v87 = vld [vmem:[%s3 + $0x8] sm:$0xf]
    %v88 = vld [vmem:[%s3 + $0xc] sm:$0xf]
    %v89 = vld [vmem:[%s4] sm:$0x1]
    %v91 = vlaneseq
    %v92 = vshrl.u32 %v91, 7
    %v93 = vsub.s32 0, %v92
    %v94 = vrot.slane %v89, %v93
    %v100 = vunpack.c.l.b16 %v85
    %v101 = vunpack.c.l.b16 %v86
    %v102 = vunpack.c.l.b16 %v87
    %v103 = vunpack.c.l.b16 %v88
    %v104 = vpack.c.b16 %v101, %v100
    %v105 = vpack.c.b16 %v103, %v102
    %vm108 = vcmask 261120
    %v110 = vsel %vm108, %v84, 0
    %112 = vmatprep.subr.bf16.mxu0 0
    %113 = vmatpush1.bf16.msra.mxu0 0
    %114 = vmatprep.subr.bf16.mxu0 0
    %115 = vmatpush1.bf16.msra.mxu0 0
    %116 = vmatprep.subr.bf16.mxu0 0
    %117 = vmatpush1.bf16.msra.mxu0 0
    %118 = vmatprep.subr.bf16.mxu0 0
    %119 = vmatpush1.bf16.msra.mxu0 0
    %120 = vmatprep.subr.bf16.mxu0 0
    %121 = vmatpush1.bf16.msra.mxu0 0
    %122 = vmatprep.subr.bf16.mxu0 0
    %123 = vmatpush1.bf16.msra.mxu0 0
    %124 = vmatprep.subr.bf16.mxu0 0
    %125 = vmatpush1.bf16.msra.mxu0 %v105
    %126 = vmatprep.subr.bf16.mxu0 0
    %127 = vmatpush1.bf16.msra.mxu0 %v104
    %128 = vmatprep.subr.bf16.mxu0 0
    %129 = vmatpush2.bf16.msra.mxu0 0
    %130 = vmatprep.subr.bf16.mxu0 0
    %131 = vmatpush2.bf16.msra.mxu0 0
    %132 = vmatprep.subr.bf16.mxu0 0
    %133 = vmatpush2.bf16.msra.mxu0 0
    %134 = vmatprep.subr.bf16.mxu0 0
    %135 = vmatpush2.bf16.msra.mxu0 0
    %136 = vmatprep.subr.bf16.mxu0 0
    %137 = vmatpush2.bf16.msra.mxu0 0
    %138 = vmatprep.subr.bf16.mxu0 0
    %139 = vmatpush2.bf16.msra.mxu0 0
    %140 = vmatprep.subr.bf16.mxu0 0
    %141 = vmatpush2.bf16.msra.mxu0 0
    %142 = vmatprep.subr.bf16.mxu0 0
    %143 = vmatpush2.bf16.msra.mxu0 0
    %144 = vmatprep.mubr.bf16.mxu0 0
    %145 = vmatmul.mubr.bf16.gmra.mxu0 %v110
    %v146 = vpop.f32.mrf.mxu0
    %v147 = vadd.f32 %v94, %v146
    %v148 = vpop.f32.mrf.mxu0
    %v149 = vpop.f32.mrf.mxu0
    %v150 = vadd.f32 %v94, %v149
    %v151 = vpop.f32.mrf.mxu0
    %152 = vdwg.mxu0
    %v153 = vpack.c.bf16 %v150, %v147
    %v154 = vld [vmem:[#allocation2] sm:$0xf]
    %v155 = vld [vmem:[#allocation2 + $0x4] sm:$0xf]
    %v156 = vunpack.c.l.bf16 %v154
    %v157 = vunpack.c.l.bf16 %v155
    %v158 = vld [vmem:[%s5] sm:$0xf]
    %v159 = vld [vmem:[%s5 + $0x4] sm:$0xf]
    %v160 = vld [vmem:[%s5 + $0x8] sm:$0xf]
    %v161 = vld [vmem:[%s5 + $0xc] sm:$0xf]
    %163 = vrot.lane.b32.xlu0 %v153, 96
    %v164 = vpop.permute.xlu0 %163
    %vm165 = vcmask 64512
    %v167 = vsel %vm165, %v153, 0
    %v170 = vsel %vm165, %v164, 0
    %172 = vmatprep.subr.bf16.mxu0 0
    %173 = vmatpush1.bf16.xpose.msra.mxu0 0
    %174 = vmatprep.subr.bf16.mxu0 0
    %175 = vmatpush1.bf16.xpose.msra.mxu0 0
    %176 = vmatprep.subr.bf16.mxu0 0
    %177 = vmatpush1.bf16.xpose.msra.mxu0 0
    %178 = vmatprep.subr.bf16.mxu0 0
    %179 = vmatpush1.bf16.xpose.msra.mxu0 0
    %180 = vmatprep.subr.bf16.mxu0 0
    %181 = vmatpush1.bf16.xpose.msra.mxu0 0
    %182 = vmatprep.subr.bf16.mxu0 0
    %183 = vmatpush1.bf16.xpose.msra.mxu0 0
    %184 = vmatprep.subr.bf16.mxu0 0
    %185 = vmatpush1.bf16.xpose.msra.mxu0 0
    %186 = vmatprep.subr.bf16.mxu0 0
    %187 = vmatpush1.bf16.xpose.msra.mxu0 %v170
    %188 = vmatprep.subr.bf16.mxu0 0
    %189 = vmatpush2.bf16.xpose.msra.mxu0 0
    %190 = vmatprep.subr.bf16.mxu0 0
    %191 = vmatpush2.bf16.xpose.msra.mxu0 0
    %192 = vmatprep.subr.bf16.mxu0 0
    %193 = vmatpush2.bf16.xpose.msra.mxu0 0
    %194 = vmatprep.subr.bf16.mxu0 0
    %195 = vmatpush2.bf16.xpose.msra.mxu0 0
    %196 = vmatprep.subr.bf16.mxu0 0
    %197 = vmatpush2.bf16.xpose.msra.mxu0 0
    %198 = vmatprep.subr.bf16.mxu0 0
    %199 = vmatpush2.bf16.xpose.msra.mxu0 0
    %200 = vmatprep.subr.bf16.mxu0 0
    %201 = vmatpush2.bf16.xpose.msra.mxu0 0
    %202 = vmatprep.subr.bf16.mxu0 0
    %203 = vmatpush2.bf16.xpose.msra.mxu0 0
    %204 = vmatprep.mubr.bf16.mxu0 0
    %205 = vmatmul.mubr.bf16.gmra.mxu0 %v167
    %v206 = vpop.f32.mrf.mxu0
    %v207 = vadd.f32 %v156, %v206
    %v208 = vpop.f32.mrf.mxu0
    %v209 = vpop.f32.mrf.mxu0
    %v210 = vadd.f32 %v157, %v209
    %v211 = vpop.f32.mrf.mxu0
    %212 = vdwg.mxu0
    %vm213 = vcmask 130048
    %v214 = vsel %vm213, %v207, -inf
    %215 = vmax.xlane.f32.xlu0 %v214
    %v216 = vpop.xlane.xlu0 %215
    %v217 = vsel %vm213, %v210, -inf
    %218 = vmax.xlane.f32.xlu0 %v217
    %v219 = vpop.xlane.xlu0 %218
    %v220 = vsub.f32 %v207, %v216
    %v221 = vsub.f32 %v210, %v219
    %v222 = vmul.f32 %v220, 1.442695
    %v223 = vpow.pop %v222
    %v224 = vmul.f32 %v221, 1.442695
    %v225 = vpow.pop %v224
    %v226 = vsel %vm213, %v223, 0.0
    %227 = vadd.xlane.f32.xlu0 %v226
    %v228 = vpop.xlane.xlu0 %227
    %v229 = vsel %vm213, %v225, 0.0
    %230 = vadd.xlane.f32.xlu0 %v229
    %v231 = vpop.xlane.xlu0 %230
    %v232 = vpack.c.bf16 %v225, %v223
    %233 = vrot.lane.b32.xlu0 %v153, 64
    %v234 = vpop.permute.xlu0 %233
    %v237 = vsel %vm213, %v232, 0
    %239 = vmatprep.subr.bf16.mxu0 0
    %240 = vmatpush1.bf16.msra.mxu0 0
    %241 = vmatprep.subr.bf16.mxu0 0
    %242 = vmatpush1.bf16.msra.mxu0 0
    %243 = vmatprep.subr.bf16.mxu0 0
    %244 = vmatpush1.bf16.msra.mxu0 0
    %245 = vmatprep.subr.bf16.mxu0 0
    %246 = vmatpush1.bf16.msra.mxu0 0
    %247 = vmatprep.subr.bf16.mxu0 0
    %248 = vmatpush1.bf16.msra.mxu0 0
    %249 = vmatprep.subr.bf16.mxu0 0
    %250 = vmatpush1.bf16.msra.mxu0 0
    %251 = vmatprep.subr.bf16.mxu0 0
    %252 = vmatpush1.bf16.msra.mxu0 0
    %253 = vmatprep.subr.bf16.mxu0 0
    %254 = vmatpush1.bf16.msra.mxu0 %v234
    %255 = vmatprep.subr.bf16.mxu0 0
    %256 = vmatpush2.bf16.msra.mxu0 0
    %257 = vmatprep.subr.bf16.mxu0 0
    %258 = vmatpush2.bf16.msra.mxu0 0
    %259 = vmatprep.subr.bf16.mxu0 0
    %260 = vmatpush2.bf16.msra.mxu0 0
    %261 = vmatprep.subr.bf16.mxu0 0
    %262 = vmatpush2.bf16.msra.mxu0 0
    %263 = vmatprep.subr.bf16.mxu0 0
    %264 = vmatpush2.bf16.msra.mxu0 0
    %265 = vmatprep.subr.bf16.mxu0 0
    %266 = vmatpush2.bf16.msra.mxu0 0
    %267 = vmatprep.subr.bf16.mxu0 0
    %268 = vmatpush2.bf16.msra.mxu0 0
    %269 = vmatprep.subr.bf16.mxu0 0
    %270 = vmatpush2.bf16.msra.mxu0 0
    %271 = vmatprep.mubr.bf16.mxu0 0
    %272 = vmatmul.mubr.bf16.gmra.mxu0 %v237
    %v273 = vpop.f32.mrf.mxu0
    %v274 = vadd.f32 0.0, %v273
    %v275 = vpop.f32.mrf.mxu0
    %v276 = vpop.f32.mrf.mxu0
    %v277 = vadd.f32 0.0, %v276
    %v278 = vpop.f32.mrf.mxu0
    %279 = vdwg.mxu0
    %v280 = vrcp.pop %v228
    %v281 = vrcp.pop %v231
    %v282 = vmul.f32 %v274, %v280
    %v283 = vmul.f32 %v277, %v281
    %v284 = vpack.c.bf16 %v283, %v282
    %285 = vrot.lane.b32.xlu0 %v153, 120
    %v286 = vpop.permute.xlu0 %285
    %287 = vrot.lane.b32.xlu0 %v153, 88
    %v288 = vpop.permute.xlu0 %287
    %v290 = vsel %vm165, %v286, 0
    %v293 = vsel %vm165, %v288, 0
    %295 = vmatprep.subr.bf16.mxu0 0
    %296 = vmatpush1.bf16.xpose.msra.mxu0 0
    %297 = vmatprep.subr.bf16.mxu0 0
    %298 = vmatpush1.bf16.xpose.msra.mxu0 0
    %299 = vmatprep.subr.bf16.mxu0 0
    %300 = vmatpush1.bf16.xpose.msra.mxu0 0
    %301 = vmatprep.subr.bf16.mxu0 0
    %302 = vmatpush1.bf16.xpose.msra.mxu0 0
    %303 = vmatprep.subr.bf16.mxu0 0
    %304 = vmatpush1.bf16.xpose.msra.mxu0 0
    %305 = vmatprep.subr.bf16.mxu0 0
    %306 = vmatpush1.bf16.xpose.msra.mxu0 0
    %307 = vmatprep.subr.bf16.mxu0 0
    %308 = vmatpush1.bf16.xpose.msra.mxu0 0
    %309 = vmatprep.subr.bf16.mxu0 0
    %310 = vmatpush1.bf16.xpose.msra.mxu0 %v293
    %311 = vmatprep.subr.bf16.mxu0 0
    %312 = vmatpush2.bf16.xpose.msra.mxu0 0
    %313 = vmatprep.subr.bf16.mxu0 0
    %314 = vmatpush2.bf16.xpose.msra.mxu0 0
    %315 = vmatprep.subr.bf16.mxu0 0
    %316 = vmatpush2.bf16.xpose.msra.mxu0 0
    %317 = vmatprep.subr.bf16.mxu0 0
    %318 = vmatpush2.bf16.xpose.msra.mxu0 0
    %319 = vmatprep.subr.bf16.mxu0 0
    %320 = vmatpush2.bf16.xpose.msra.mxu0 0
    %321 = vmatprep.subr.bf16.mxu0 0
    %322 = vmatpush2.bf16.xpose.msra.mxu0 0
    %323 = vmatprep.subr.bf16.mxu0 0
    %324 = vmatpush2.bf16.xpose.msra.mxu0 0
    %325 = vmatprep.subr.bf16.mxu0 0
    %326 = vmatpush2.bf16.xpose.msra.mxu0 0
    %327 = vmatprep.mubr.bf16.mxu0 0
    %328 = vmatmul.mubr.bf16.gmra.mxu0 %v290
    %v329 = vpop.f32.mrf.mxu0
    %v330 = vadd.f32 %v156, %v329
    %v331 = vpop.f32.mrf.mxu0
    %v332 = vpop.f32.mrf.mxu0
    %v333 = vadd.f32 %v157, %v332
    %v334 = vpop.f32.mrf.mxu0
    %335 = vdwg.mxu0
    %v336 = vsel %vm213, %v330, -inf
    %337 = vmax.xlane.f32.xlu0 %v336
    %v338 = vpop.xlane.xlu0 %337
    %v339 = vsel %vm213, %v333, -inf
    %340 = vmax.xlane.f32.xlu0 %v339
    %v341 = vpop.xlane.xlu0 %340
    %v342 = vsub.f32 %v330, %v338
    %v343 = vsub.f32 %v333, %v341
    %v344 = vmul.f32 %v342, 1.442695
    %v345 = vpow.pop %v344
    %v346 = vmul.f32 %v343, 1.442695
    %v347 = vpow.pop %v346
    %v348 = vsel %vm213, %v345, 0.0
    %349 = vadd.xlane.f32.xlu0 %v348
    %v350 = vpop.xlane.xlu0 %349
    %v351 = vsel %vm213, %v347, 0.0
    %352 = vadd.xlane.f32.xlu0 %v351
    %v353 = vpop.xlane.xlu0 %352
    %v354 = vpack.c.bf16 %v347, %v345
    %355 = vrot.lane.b32.xlu0 %v153, 56
    %v356 = vpop.permute.xlu0 %355
    %v359 = vsel %vm213, %v354, 0
    %361 = vmatprep.subr.bf16.mxu0 0
    %362 = vmatpush1.bf16.msra.mxu0 0
    %363 = vmatprep.subr.bf16.mxu0 0
    %364 = vmatpush1.bf16.msra.mxu0 0
    %365 = vmatprep.subr.bf16.mxu0 0
    %366 = vmatpush1.bf16.msra.mxu0 0
    %367 = vmatprep.subr.bf16.mxu0 0
    %368 = vmatpush1.bf16.msra.mxu0 0
    %369 = vmatprep.subr.bf16.mxu0 0
    %370 = vmatpush1.bf16.msra.mxu0 0
    %371 = vmatprep.subr.bf16.mxu0 0
    %372 = vmatpush1.bf16.msra.mxu0 0
    %373 = vmatprep.subr.bf16.mxu0 0
    %374 = vmatpush1.bf16.msra.mxu0 0
    %375 = vmatprep.subr.bf16.mxu0 0
    %376 = vmatpush1.bf16.msra.mxu0 %v356
    %377 = vmatprep.subr.bf16.mxu0 0
    %378 = vmatpush2.bf16.msra.mxu0 0
    %379 = vmatprep.subr.bf16.mxu0 0
    %380 = vmatpush2.bf16.msra.mxu0 0
    %381 = vmatprep.subr.bf16.mxu0 0
    %382 = vmatpush2.bf16.msra.mxu0 0
    %383 = vmatprep.subr.bf16.mxu0 0
    %384 = vmatpush2.bf16.msra.mxu0 0
    %385 = vmatprep.subr.bf16.mxu0 0
    %386 = vmatpush2.bf16.msra.mxu0 0
    %387 = vmatprep.subr.bf16.mxu0 0
    %388 = vmatpush2.bf16.msra.mxu0 0
    %389 = vmatprep.subr.bf16.mxu0 0
    %390 = vmatpush2.bf16.msra.mxu0 0
    %391 = vmatprep.subr.bf16.mxu0 0
    %392 = vmatpush2.bf16.msra.mxu0 0
    %393 = vmatprep.mubr.bf16.mxu0 0
    %394 = vmatmul.mubr.bf16.gmra.mxu0 %v359
    %v395 = vpop.f32.mrf.mxu0
    %v396 = vadd.f32 0.0, %v395
    %v397 = vpop.f32.mrf.mxu0
    %v398 = vpop.f32.mrf.mxu0
    %v399 = vadd.f32 0.0, %v398
    %v400 = vpop.f32.mrf.mxu0
    %401 = vdwg.mxu0
    %v402 = vrcp.pop %v350
    %v403 = vrcp.pop %v353
    %v404 = vmul.f32 %v396, %v402
    %v405 = vmul.f32 %v399, %v403
    %v406 = vpack.c.bf16 %v405, %v404
    %v408 = vsel %vm165, %v406, 0
    %vm410 = vcmask 1043456
    %v412 = vsel %vm410, %v159, 0
    %414 = vmatprep.subr.bf16.mxu0 0
    %415 = vmatpush1.bf16.msra.mxu0 0
    %416 = vmatprep.subr.bf16.mxu0 0
    %417 = vmatpush1.bf16.msra.mxu0 0
    %418 = vmatprep.subr.bf16.mxu0 0
    %419 = vmatpush1.bf16.msra.mxu0 0
    %420 = vmatprep.subr.bf16.mxu0 0
    %421 = vmatpush1.bf16.msra.mxu0 0
    %422 = vmatprep.subr.bf16.mxu0 0
    %423 = vmatpush1.bf16.msra.mxu0 0
    %424 = vmatprep.subr.bf16.mxu0 0
    %425 = vmatpush1.bf16.msra.mxu0 0
    %426 = vmatprep.subr.bf16.mxu0 0
    %427 = vmatpush1.bf16.msra.mxu0 0
    %428 = vmatprep.subr.bf16.mxu0 0
    %429 = vmatpush1.bf16.msra.mxu0 %v412
    %430 = vmatprep.subr.bf16.mxu0 0
    %431 = vmatpush2.bf16.msra.mxu0 0
    %432 = vmatprep.subr.bf16.mxu0 0
    %433 = vmatpush2.bf16.msra.mxu0 0
    %434 = vmatprep.subr.bf16.mxu0 0
    %435 = vmatpush2.bf16.msra.mxu0 0
    %436 = vmatprep.subr.bf16.mxu0 0
    %437 = vmatpush2.bf16.msra.mxu0 0
    %438 = vmatprep.subr.bf16.mxu0 0
    %439 = vmatpush2.bf16.msra.mxu0 0
    %440 = vmatprep.subr.bf16.mxu0 0
    %441 = vmatpush2.bf16.msra.mxu0 0
    %442 = vmatprep.subr.bf16.mxu0 0
    %443 = vmatpush2.bf16.msra.mxu0 0
    %444 = vmatprep.subr.bf16.mxu0 0
    %445 = vmatpush2.bf16.msra.mxu0 0
    %446 = vmatprep.mubr.bf16.mxu0 0
    %447 = vmatmul.mubr.bf16.gmra.mxu0 %v408
    %v448 = vpop.f32.mrf.mxu0
    %v449 = vadd.f32 0.0, %v448
    %v450 = vpop.f32.mrf.mxu0
    %v451 = vpop.f32.mrf.mxu0
    %v452 = vadd.f32 0.0, %v451
    %v453 = vpop.f32.mrf.mxu0
    %454 = vdwg.mxu0
    %v456 = vsel %vm165, %v284, 0
    %v459 = vsel %vm410, %v158, 0
    %461 = vmatprep.subr.bf16.mxu0 0
    %462 = vmatpush1.bf16.msra.mxu0 0
    %463 = vmatprep.subr.bf16.mxu0 0
    %464 = vmatpush1.bf16.msra.mxu0 0
    %465 = vmatprep.subr.bf16.mxu0 0
    %466 = vmatpush1.bf16.msra.mxu0 0
    %467 = vmatprep.subr.bf16.mxu0 0
    %468 = vmatpush1.bf16.msra.mxu0 0
    %469 = vmatprep.subr.bf16.mxu0 0
    %470 = vmatpush1.bf16.msra.mxu0 0
    %471 = vmatprep.subr.bf16.mxu0 0
    %472 = vmatpush1.bf16.msra.mxu0 0
    %473 = vmatprep.subr.bf16.mxu0 0
    %474 = vmatpush1.bf16.msra.mxu0 0
    %475 = vmatprep.subr.bf16.mxu0 0
    %476 = vmatpush1.bf16.msra.mxu0 %v459
    %477 = vmatprep.subr.bf16.mxu0 0
    %478 = vmatpush2.bf16.msra.mxu0 0
    %479 = vmatprep.subr.bf16.mxu0 0
    %480 = vmatpush2.bf16.msra.mxu0 0
    %481 = vmatprep.subr.bf16.mxu0 0
    %482 = vmatpush2.bf16.msra.mxu0 0
    %483 = vmatprep.subr.bf16.mxu0 0
    %484 = vmatpush2.bf16.msra.mxu0 0
    %485 = vmatprep.subr.bf16.mxu0 0
    %486 = vmatpush2.bf16.msra.mxu0 0
    %487 = vmatprep.subr.bf16.mxu0 0
    %488 = vmatpush2.bf16.msra.mxu0 0
    %489 = vmatprep.subr.bf16.mxu0 0
    %490 = vmatpush2.bf16.msra.mxu0 0
    %491 = vmatprep.subr.bf16.mxu0 0
    %492 = vmatpush2.bf16.msra.mxu0 0
    %493 = vmatprep.mubr.bf16.mxu0 0
    %494 = vmatmul.mubr.bf16.gmra.mxu0 %v456
    %v495 = vpop.f32.mrf.mxu0
    %v496 = vadd.f32 %v449, %v495
    %v497 = vpop.f32.mrf.mxu0
    %v498 = vpop.f32.mrf.mxu0
    %v499 = vadd.f32 %v452, %v498
    %v500 = vpop.f32.mrf.mxu0
    %501 = vdwg.mxu0
    %502 = vrot.lane.b32.xlu0 %v153, 112
    %v503 = vpop.permute.xlu0 %502
    %504 = vrot.lane.b32.xlu0 %v153, 80
    %v505 = vpop.permute.xlu0 %504
    %v507 = vsel %vm165, %v503, 0
    %v510 = vsel %vm165, %v505, 0
    %512 = vmatprep.subr.bf16.mxu0 0
    %513 = vmatpush1.bf16.xpose.msra.mxu0 0
    %514 = vmatprep.subr.bf16.mxu0 0
    %515 = vmatpush1.bf16.xpose.msra.mxu0 0
    %516 = vmatprep.subr.bf16.mxu0 0
    %517 = vmatpush1.bf16.xpose.msra.mxu0 0
    %518 = vmatprep.subr.bf16.mxu0 0
    %519 = vmatpush1.bf16.xpose.msra.mxu0 0
    %520 = vmatprep.subr.bf16.mxu0 0
    %521 = vmatpush1.bf16.xpose.msra.mxu0 0
    %522 = vmatprep.subr.bf16.mxu0 0
    %523 = vmatpush1.bf16.xpose.msra.mxu0 0
    %524 = vmatprep.subr.bf16.mxu0 0
    %525 = vmatpush1.bf16.xpose.msra.mxu0 0
    %526 = vmatprep.subr.bf16.mxu0 0
    %527 = vmatpush1.bf16.xpose.msra.mxu0 %v510
    %528 = vmatprep.subr.bf16.mxu0 0
    %529 = vmatpush2.bf16.xpose.msra.mxu0 0
    %530 = vmatprep.subr.bf16.mxu0 0
    %531 = vmatpush2.bf16.xpose.msra.mxu0 0
    %532 = vmatprep.subr.bf16.mxu0 0
    %533 = vmatpush2.bf16.xpose.msra.mxu0 0
    %534 = vmatprep.subr.bf16.mxu0 0
    %535 = vmatpush2.bf16.xpose.msra.mxu0 0
    %536 = vmatprep.subr.bf16.mxu0 0
    %537 = vmatpush2.bf16.xpose.msra.mxu0 0
    %538 = vmatprep.subr.bf16.mxu0 0
    %539 = vmatpush2.bf16.xpose.msra.mxu0 0
    %540 = vmatprep.subr.bf16.mxu0 0
    %541 = vmatpush2.bf16.xpose.msra.mxu0 0
    %542 = vmatprep.subr.bf16.mxu0 0
    %543 = vmatpush2.bf16.xpose.msra.mxu0 0
    %544 = vmatprep.mubr.bf16.mxu0 0
    %545 = vmatmul.mubr.bf16.gmra.mxu0 %v507
    %v546 = vpop.f32.mrf.mxu0
    %v547 = vadd.f32 %v156, %v546
    %v548 = vpop.f32.mrf.mxu0
    %v549 = vpop.f32.mrf.mxu0
    %v550 = vadd.f32 %v157, %v549
    %v551 = vpop.f32.mrf.mxu0
    %552 = vdwg.mxu0
    %v553 = vsel %vm213, %v547, -inf
    %554 = vmax.xlane.f32.xlu0 %v553
    %v555 = vpop.xlane.xlu0 %554
    %v556 = vsel %vm213, %v550, -inf
    %557 = vmax.xlane.f32.xlu0 %v556
    %v558 = vpop.xlane.xlu0 %557
    %v559 = vsub.f32 %v547, %v555
    %v560 = vsub.f32 %v550, %v558
    %v561 = vmul.f32 %v559, 1.442695
    %v562 = vpow.pop %v561
    %v563 = vmul.f32 %v560, 1.442695
    %v564 = vpow.pop %v563
    %v565 = vsel %vm213, %v562, 0.0
    %566 = vadd.xlane.f32.xlu0 %v565
    %v567 = vpop.xlane.xlu0 %566
    %v568 = vsel %vm213, %v564, 0.0
    %569 = vadd.xlane.f32.xlu0 %v568
    %v570 = vpop.xlane.xlu0 %569
    %v571 = vpack.c.bf16 %v564, %v562
    %572 = vrot.lane.b32.xlu0 %v153, 48
    %v573 = vpop.permute.xlu0 %572
    %v576 = vsel %vm213, %v571, 0
    %578 = vmatprep.subr.bf16.mxu0 0
    %579 = vmatpush1.bf16.msra.mxu0 0
    %580 = vmatprep.subr.bf16.mxu0 0
    %581 = vmatpush1.bf16.msra.mxu0 0
    %582 = vmatprep.subr.bf16.mxu0 0
    %583 = vmatpush1.bf16.msra.mxu0 0
    %584 = vmatprep.subr.bf16.mxu0 0
    %585 = vmatpush1.bf16.msra.mxu0 0
    %586 = vmatprep.subr.bf16.mxu0 0
    %587 = vmatpush1.bf16.msra.mxu0 0
    %588 = vmatprep.subr.bf16.mxu0 0
    %589 = vmatpush1.bf16.msra.mxu0 0
    %590 = vmatprep.subr.bf16.mxu0 0
    %591 = vmatpush1.bf16.msra.mxu0 0
    %592 = vmatprep.subr.bf16.mxu0 0
    %593 = vmatpush1.bf16.msra.mxu0 %v573
    %594 = vmatprep.subr.bf16.mxu0 0
    %595 = vmatpush2.bf16.msra.mxu0 0
    %596 = vmatprep.subr.bf16.mxu0 0
    %597 = vmatpush2.bf16.msra.mxu0 0
    %598 = vmatprep.subr.bf16.mxu0 0
    %599 = vmatpush2.bf16.msra.mxu0 0
    %600 = vmatprep.subr.bf16.mxu0 0
    %601 = vmatpush2.bf16.msra.mxu0 0
    %602 = vmatprep.subr.bf16.mxu0 0
    %603 = vmatpush2.bf16.msra.mxu0 0
    %604 = vmatprep.subr.bf16.mxu0 0
    %605 = vmatpush2.bf16.msra.mxu0 0
    %606 = vmatprep.subr.bf16.mxu0 0
    %607 = vmatpush2.bf16.msra.mxu0 0
    %608 = vmatprep.subr.bf16.mxu0 0
    %609 = vmatpush2.bf16.msra.mxu0 0
    %610 = vmatprep.mubr.bf16.mxu0 0
    %611 = vmatmul.mubr.bf16.gmra.mxu0 %v576
    %v612 = vpop.f32.mrf.mxu0
    %v613 = vadd.f32 0.0, %v612
    %v614 = vpop.f32.mrf.mxu0
    %v615 = vpop.f32.mrf.mxu0
    %v616 = vadd.f32 0.0, %v615
    %v617 = vpop.f32.mrf.mxu0
    %618 = vdwg.mxu0
    %v619 = vrcp.pop %v567
    %v620 = vrcp.pop %v570
    %v621 = vmul.f32 %v613, %v619
    %v622 = vmul.f32 %v616, %v620
    %v623 = vpack.c.bf16 %v622, %v621
    %v625 = vsel %vm165, %v623, 0
    %v628 = vsel %vm410, %v160, 0
    %630 = vmatprep.subr.bf16.mxu0 0
    %631 = vmatpush1.bf16.msra.mxu0 0
    %632 = vmatprep.subr.bf16.mxu0 0
    %633 = vmatpush1.bf16.msra.mxu0 0
    %634 = vmatprep.subr.bf16.mxu0 0
    %635 = vmatpush1.bf16.msra.mxu0 0
    %636 = vmatprep.subr.bf16.mxu0 0
    %637 = vmatpush1.bf16.msra.mxu0 0
    %638 = vmatprep.subr.bf16.mxu0 0
    %639 = vmatpush1.bf16.msra.mxu0 0
    %640 = vmatprep.subr.bf16.mxu0 0
    %641 = vmatpush1.bf16.msra.mxu0 0
    %642 = vmatprep.subr.bf16.mxu0 0
    %643 = vmatpush1.bf16.msra.mxu0 0
    %644 = vmatprep.subr.bf16.mxu0 0
    %645 = vmatpush1.bf16.msra.mxu0 %v628
    %646 = vmatprep.subr.bf16.mxu0 0
    %647 = vmatpush2.bf16.msra.mxu0 0
    %648 = vmatprep.subr.bf16.mxu0 0
    %649 = vmatpush2.bf16.msra.mxu0 0
    %650 = vmatprep.subr.bf16.mxu0 0
    %651 = vmatpush2.bf16.msra.mxu0 0
    %652 = vmatprep.subr.bf16.mxu0 0
    %653 = vmatpush2.bf16.msra.mxu0 0
    %654 = vmatprep.subr.bf16.mxu0 0
    %655 = vmatpush2.bf16.msra.mxu0 0
    %656 = vmatprep.subr.bf16.mxu0 0
    %657 = vmatpush2.bf16.msra.mxu0 0
    %658 = vmatprep.subr.bf16.mxu0 0
    %659 = vmatpush2.bf16.msra.mxu0 0
    %660 = vmatprep.subr.bf16.mxu0 0
    %661 = vmatpush2.bf16.msra.mxu0 0
    %662 = vmatprep.mubr.bf16.mxu0 0
    %663 = vmatmul.mubr.bf16.gmra.mxu0 %v625
    %v664 = vpop.f32.mrf.mxu0
    %v665 = vadd.f32 0.0, %v664
    %v666 = vpop.f32.mrf.mxu0
    %v667 = vpop.f32.mrf.mxu0
    %v668 = vadd.f32 0.0, %v667
    %v669 = vpop.f32.mrf.mxu0
    %670 = vdwg.mxu0
    %v671 = vadd.f32 %v496, %v665
    %v672 = vadd.f32 %v499, %v668
    %673 = vrot.lane.b32.xlu0 %v153, 104
    %v674 = vpop.permute.xlu0 %673
    %675 = vrot.lane.b32.xlu0 %v153, 72
    %v676 = vpop.permute.xlu0 %675
    %v678 = vsel %vm165, %v674, 0
    %v681 = vsel %vm165, %v676, 0
    %683 = vmatprep.subr.bf16.mxu0 0
    %684 = vmatpush1.bf16.xpose.msra.mxu0 0
    %685 = vmatprep.subr.bf16.mxu0 0
    %686 = vmatpush1.bf16.xpose.msra.mxu0 0
    %687 = vmatprep.subr.bf16.mxu0 0
    %688 = vmatpush1.bf16.xpose.msra.mxu0 0
    %689 = vmatprep.subr.bf16.mxu0 0
    %690 = vmatpush1.bf16.xpose.msra.mxu0 0
    %691 = vmatprep.subr.bf16.mxu0 0
    %692 = vmatpush1.bf16.xpose.msra.mxu0 0
    %693 = vmatprep.subr.bf16.mxu0 0
    %694 = vmatpush1.bf16.xpose.msra.mxu0 0
    %695 = vmatprep.subr.bf16.mxu0 0
    %696 = vmatpush1.bf16.xpose.msra.mxu0 0
    %697 = vmatprep.subr.bf16.mxu0 0
    %698 = vmatpush1.bf16.xpose.msra.mxu0 %v681
    %699 = vmatprep.subr.bf16.mxu0 0
    %700 = vmatpush2.bf16.xpose.msra.mxu0 0
    %701 = vmatprep.subr.bf16.mxu0 0
    %702 = vmatpush2.bf16.xpose.msra.mxu0 0
    %703 = vmatprep.subr.bf16.mxu0 0
    %704 = vmatpush2.bf16.xpose.msra.mxu0 0
    %705 = vmatprep.subr.bf16.mxu0 0
    %706 = vmatpush2.bf16.xpose.msra.mxu0 0
    %707 = vmatprep.subr.bf16.mxu0 0
    %708 = vmatpush2.bf16.xpose.msra.mxu0 0
    %709 = vmatprep.subr.bf16.mxu0 0
    %710 = vmatpush2.bf16.xpose.msra.mxu0 0
    %711 = vmatprep.subr.bf16.mxu0 0
    %712 = vmatpush2.bf16.xpose.msra.mxu0 0
    %713 = vmatprep.subr.bf16.mxu0 0
    %714 = vmatpush2.bf16.xpose.msra.mxu0 0
    %715 = vmatprep.mubr.bf16.mxu0 0
    %716 = vmatmul.mubr.bf16.gmra.mxu0 %v678
    %v717 = vpop.f32.mrf.mxu0
    %v718 = vadd.f32 %v156, %v717
    %v719 = vpop.f32.mrf.mxu0
    %v720 = vpop.f32.mrf.mxu0
    %v721 = vadd.f32 %v157, %v720
    %v722 = vpop.f32.mrf.mxu0
    %723 = vdwg.mxu0
    %v724 = vsel %vm213, %v718, -inf
    %725 = vmax.xlane.f32.xlu0 %v724
    %v726 = vpop.xlane.xlu0 %725
    %v727 = vsel %vm213, %v721, -inf
    %728 = vmax.xlane.f32.xlu0 %v727
    %v729 = vpop.xlane.xlu0 %728
    %v730 = vsub.f32 %v718, %v726
    %v731 = vsub.f32 %v721, %v729
    %v732 = vmul.f32 %v730, 1.442695
    %v733 = vpow.pop %v732
    %v734 = vmul.f32 %v731, 1.442695
    %v735 = vpow.pop %v734
    %v736 = vsel %vm213, %v733, 0.0
    %737 = vadd.xlane.f32.xlu0 %v736
    %v738 = vpop.xlane.xlu0 %737
    %v739 = vsel %vm213, %v735, 0.0
    %740 = vadd.xlane.f32.xlu0 %v739
    %v741 = vpop.xlane.xlu0 %740
    %v742 = vpack.c.bf16 %v735, %v733
    %743 = vrot.lane.b32.xlu0 %v153, 40
    %v744 = vpop.permute.xlu0 %743
    %v747 = vsel %vm213, %v742, 0
    %749 = vmatprep.subr.bf16.mxu0 0
    %750 = vmatpush1.bf16.msra.mxu0 0
    %751 = vmatprep.subr.bf16.mxu0 0
    %752 = vmatpush1.bf16.msra.mxu0 0
    %753 = vmatprep.subr.bf16.mxu0 0
    %754 = vmatpush1.bf16.msra.mxu0 0
    %755 = vmatprep.subr.bf16.mxu0 0
    %756 = vmatpush1.bf16.msra.mxu0 0
    %757 = vmatprep.subr.bf16.mxu0 0
    %758 = vmatpush1.bf16.msra.mxu0 0
    %759 = vmatprep.subr.bf16.mxu0 0
    %760 = vmatpush1.bf16.msra.mxu0 0
    %761 = vmatprep.subr.bf16.mxu0 0
    %762 = vmatpush1.bf16.msra.mxu0 0
    %763 = vmatprep.subr.bf16.mxu0 0
    %764 = vmatpush1.bf16.msra.mxu0 %v744
    %765 = vmatprep.subr.bf16.mxu0 0
    %766 = vmatpush2.bf16.msra.mxu0 0
    %767 = vmatprep.subr.bf16.mxu0 0
    %768 = vmatpush2.bf16.msra.mxu0 0
    %769 = vmatprep.subr.bf16.mxu0 0
    %770 = vmatpush2.bf16.msra.mxu0 0
    %771 = vmatprep.subr.bf16.mxu0 0
    %772 = vmatpush2.bf16.msra.mxu0 0
    %773 = vmatprep.subr.bf16.mxu0 0
    %774 = vmatpush2.bf16.msra.mxu0 0
    %775 = vmatprep.subr.bf16.mxu0 0
    %776 = vmatpush2.bf16.msra.mxu0 0
    %777 = vmatprep.subr.bf16.mxu0 0
    %778 = vmatpush2.bf16.msra.mxu0 0
    %779 = vmatprep.subr.bf16.mxu0 0
    %780 = vmatpush2.bf16.msra.mxu0 0
    %781 = vmatprep.mubr.bf16.mxu0 0
    %782 = vmatmul.mubr.bf16.gmra.mxu0 %v747
    %v783 = vpop.f32.mrf.mxu0
    %v784 = vadd.f32 0.0, %v783
    %v785 = vpop.f32.mrf.mxu0
    %v786 = vpop.f32.mrf.mxu0
    %v787 = vadd.f32 0.0, %v786
    %v788 = vpop.f32.mrf.mxu0
    %789 = vdwg.mxu0
    %v790 = vrcp.pop %v738
    %v791 = vrcp.pop %v741
    %v792 = vmul.f32 %v784, %v790
    %v793 = vmul.f32 %v787, %v791
    %v794 = vpack.c.bf16 %v793, %v792
    %v796 = vsel %vm165, %v794, 0
    %v799 = vsel %vm410, %v161, 0
    %801 = vmatprep.subr.bf16.mxu0 0
    %802 = vmatpush1.bf16.msra.mxu0 0
    %803 = vmatprep.subr.bf16.mxu0 0
    %804 = vmatpush1.bf16.msra.mxu0 0
    %805 = vmatprep.subr.bf16.mxu0 0
    %806 = vmatpush1.bf16.msra.mxu0 0
    %807 = vmatprep.subr.bf16.mxu0 0
    %808 = vmatpush1.bf16.msra.mxu0 0
    %809 = vmatprep.subr.bf16.mxu0 0
    %810 = vmatpush1.bf16.msra.mxu0 0
    %811 = vmatprep.subr.bf16.mxu0 0
    %812 = vmatpush1.bf16.msra.mxu0 0
    %813 = vmatprep.subr.bf16.mxu0 0
    %814 = vmatpush1.bf16.msra.mxu0 0
    %815 = vmatprep.subr.bf16.mxu0 0
    %816 = vmatpush1.bf16.msra.mxu0 %v799
    %817 = vmatprep.subr.bf16.mxu0 0
    %818 = vmatpush2.bf16.msra.mxu0 0
    %819 = vmatprep.subr.bf16.mxu0 0
    %820 = vmatpush2.bf16.msra.mxu0 0
    %821 = vmatprep.subr.bf16.mxu0 0
    %822 = vmatpush2.bf16.msra.mxu0 0
    %823 = vmatprep.subr.bf16.mxu0 0
    %824 = vmatpush2.bf16.msra.mxu0 0
    %825 = vmatprep.subr.bf16.mxu0 0
    %826 = vmatpush2.bf16.msra.mxu0 0
    %827 = vmatprep.subr.bf16.mxu0 0
    %828 = vmatpush2.bf16.msra.mxu0 0
    %829 = vmatprep.subr.bf16.mxu0 0
    %830 = vmatpush2.bf16.msra.mxu0 0
    %831 = vmatprep.subr.bf16.mxu0 0
    %832 = vmatpush2.bf16.msra.mxu0 0
    %833 = vmatprep.mubr.bf16.mxu0 0
    %834 = vmatmul.mubr.bf16.gmra.mxu0 %v796
    %v835 = vpop.f32.mrf.mxu0
    %v836 = vadd.f32 0.0, %v835
    %v837 = vpop.f32.mrf.mxu0
    %v838 = vpop.f32.mrf.mxu0
    %v839 = vadd.f32 0.0, %v838
    %v840 = vpop.f32.mrf.mxu0
    %841 = vdwg.mxu0
    %v842 = vadd.f32 %v671, %v836
    %v843 = vadd.f32 %v672, %v839
    %v844 = vld [vmem:[%s6] sm:$0x1]
    %v846 = vlaneseq
    %v847 = vshrl.u32 %v846, 7
    %v848 = vsub.s32 0, %v847
    %v849 = vrot.slane %v844, %v848
    %v851 = vadd.f32 %v842, %v849
    %v852 = vadd.f32 %v843, %v849
    %v853 = vadd.f32 %v851, %v82
    %v854 = vadd.f32 %v852, %v83
    %v855 = vld [vmem:[%s7] sm:$0x1]
    %v856 = vld [vmem:[%s8] sm:$0x1]
    %v857 = vsel %vm108, %v853, 0.0
    %858 = vadd.xlane.f32.xlu0 %v857
    %v859 = vpop.xlane.xlu0 %858
    %v860 = vsel %vm108, %v854, 0.0
    %861 = vadd.xlane.f32.xlu0 %v860
    %v862 = vpop.xlane.xlu0 %861
    %v863 = vrcp.pop 32.0
    %v864 = vmul.f32 %v859, %v863
    %v865 = vmul.f32 %v862, %v863
    %v866 = vsub.f32 %v853, %v864
    %v867 = vsub.f32 %v854, %v865
    %v868 = vmul.f32 %v866, %v866
    %v869 = vmul.f32 %v867, %v867
    %v870 = vsel %vm108, %v868, 0.0
    %871 = vadd.xlane.f32.xlu0 %v870
    %v872 = vpop.xlane.xlu0 %871
    %v873 = vsel %vm108, %v869, 0.0
    %874 = vadd.xlane.f32.xlu0 %v873
    %v875 = vpop.xlane.xlu0 %874
    %v876 = vmul.f32 %v872, %v863
    %v877 = vmul.f32 %v875, %v863
    %v878 = vadd.f32 %v876, 1e-05
    %v879 = vadd.f32 %v877, 1e-05
    %v880 = vrsqrt.pop %v878
    %v881 = vrsqrt.pop %v879
    %v882 = vmul.f32 %v866, %v880
    %v883 = vmul.f32 %v867, %v881
    %v885 = vlaneseq
    %v886 = vshrl.u32 %v885, 7
    %v887 = vsub.s32 0, %v886
    %v888 = vrot.slane %v855, %v887
    %v890 = vmul.f32 %v882, %v888
    %v891 = vmul.f32 %v883, %v888
    %v893 = vlaneseq
    %v894 = vshrl.u32 %v893, 7
    %v895 = vsub.s32 0, %v894
    %v896 = vrot.slane %v856, %v895
    %v898 = vadd.f32 %v890, %v896
    %v899 = vadd.f32 %v891, %v896
    %v900 = vpack.c.bf16 %v899, %v898
    %v901 = vld [vmem:[%s9] sm:$0xf]
    %v902 = vld [vmem:[%s9 + $0x4] sm:$0xf]
    %v903 = vld [vmem:[%s9 + $0x8] sm:$0xf]
    %v904 = vld [vmem:[%s9 + $0xc] sm:$0xf]
    %v905 = vld [vmem:[#allocation5] sm:$0x1]
    %v907 = vlaneseq
    %v908 = vshrl.u32 %v907, 7
    %v909 = vsub.s32 0, %v908
    %v910 = vrot.slane %v905, %v909
    %v916 = vunpack.c.l.b16 %v901
    %v917 = vunpack.c.l.b16 %v902
    %v918 = vunpack.c.l.b16 %v903
    %v919 = vunpack.c.l.b16 %v904
    %v920 = vpack.c.b16 %v917, %v916
    %v921 = vpack.c.b16 %v919, %v918
    %v925 = vsel %vm108, %v900, 0
    %927 = vmatprep.subr.bf16.mxu0 0
    %928 = vmatpush1.bf16.msra.mxu0 0
    %929 = vmatprep.subr.bf16.mxu0 0
    %930 = vmatpush1.bf16.msra.mxu0 0
    %931 = vmatprep.subr.bf16.mxu0 0
    %932 = vmatpush1.bf16.msra.mxu0 0
    %933 = vmatprep.subr.bf16.mxu0 0
    %934 = vmatpush1.bf16.msra.mxu0 0
    %935 = vmatprep.subr.bf16.mxu0 0
    %936 = vmatpush1.bf16.msra.mxu0 0
    %937 = vmatprep.subr.bf16.mxu0 0
    %938 = vmatpush1.bf16.msra.mxu0 0
    %939 = vmatprep.subr.bf16.mxu0 0
    %940 = vmatpush1.bf16.msra.mxu0 %v921
    %941 = vmatprep.subr.bf16.mxu0 0
    %942 = vmatpush1.bf16.msra.mxu0 %v920
    %943 = vmatprep.subr.bf16.mxu0 0
    %944 = vmatpush2.bf16.msra.mxu0 0
    %945 = vmatprep.subr.bf16.mxu0 0
    %946 = vmatpush2.bf16.msra.mxu0 0
    %947 = vmatprep.subr.bf16.mxu0 0
    %948 = vmatpush2.bf16.msra.mxu0 0
    %949 = vmatprep.subr.bf16.mxu0 0
    %950 = vmatpush2.bf16.msra.mxu0 0
    %951 = vmatprep.subr.bf16.mxu0 0
    %952 = vmatpush2.bf16.msra.mxu0 0
    %953 = vmatprep.subr.bf16.mxu0 0
    %954 = vmatpush2.bf16.msra.mxu0 0
    %955 = vmatprep.subr.bf16.mxu0 0
    %956 = vmatpush2.bf16.msra.mxu0 0
    %957 = vmatprep.subr.bf16.mxu0 0
    %958 = vmatpush2.bf16.msra.mxu0 0
    %959 = vmatprep.mubr.bf16.mxu0 0
    %960 = vmatmul.mubr.bf16.gmra.mxu0 %v925
    %v961 = vpop.f32.mrf.mxu0
    %v962 = vadd.f32 %v910, %v961
    %v963 = vpop.f32.mrf.mxu0
    %v964 = vpop.f32.mrf.mxu0
    %v965 = vadd.f32 %v910, %v964
    %v966 = vpop.f32.mrf.mxu0
    %967 = vdwg.mxu0
    %v968 = vmax.f32 %v962, 0.0
    %v969 = vmax.f32 %v965, 0.0
    %v970 = vpack.c.bf16 %v969, %v968
    %v971 = vld [vmem:[%s11] sm:$0xf]
    %v972 = vld [vmem:[%s11 + $0x4] sm:$0xf]
    %v973 = vld [vmem:[%s11 + $0x8] sm:$0xf]
    %v974 = vld [vmem:[%s11 + $0xc] sm:$0xf]
    %v975 = vld [vmem:[%s11 + $0x10] sm:$0xf]
    %v976 = vld [vmem:[%s11 + $0x14] sm:$0xf]
    %v977 = vld [vmem:[%s11 + $0x18] sm:$0xf]
    %v978 = vld [vmem:[%s11 + $0x1c] sm:$0xf]
    %v979 = vld [vmem:[%s11 + $0x20] sm:$0xf]
    %v980 = vld [vmem:[%s11 + $0x24] sm:$0xf]
    %v981 = vld [vmem:[%s11 + $0x28] sm:$0xf]
    %v982 = vld [vmem:[%s11 + $0x2c] sm:$0xf]
    %v983 = vld [vmem:[%s11 + $0x30] sm:$0xf]
    %v984 = vld [vmem:[%s11 + $0x34] sm:$0xf]
    %v985 = vld [vmem:[%s11 + $0x38] sm:$0xf]
    %v986 = vld [vmem:[%s11 + $0x3c] sm:$0xf]
    %v987 = vld [vmem:[%s12] sm:$0x1]
    %v989 = vlaneseq
    %v990 = vshrl.u32 %v989, 7
    %v991 = vsub.s32 0, %v990
    %v992 = vrot.slane %v987, %v991
    %v1010 = vunpack.c.l.b16 %v971
    %v1011 = vunpack.c.l.b16 %v972
    %v1012 = vunpack.c.l.b16 %v973
    %v1013 = vunpack.c.l.b16 %v974
    %v1014 = vunpack.c.l.b16 %v975
    %v1015 = vunpack.c.l.b16 %v976
    %v1016 = vunpack.c.l.b16 %v977
    %v1017 = vunpack.c.l.b16 %v978
    %v1018 = vunpack.c.l.b16 %v979
    %v1019 = vunpack.c.l.b16 %v980
    %v1020 = vunpack.c.l.b16 %v981
    %v1021 = vunpack.c.l.b16 %v982
    %v1022 = vunpack.c.l.b16 %v983
    %v1023 = vunpack.c.l.b16 %v984
    %v1024 = vunpack.c.l.b16 %v985
    %v1025 = vunpack.c.l.b16 %v986
    %v1026 = vpack.c.b16 %v1011, %v1010
    %v1027 = vpack.c.b16 %v1013, %v1012
    %v1028 = vpack.c.b16 %v1015, %v1014
    %v1029 = vpack.c.b16 %v1017, %v1016
    %v1030 = vpack.c.b16 %v1019, %v1018
    %v1031 = vpack.c.b16 %v1021, %v1020
    %v1032 = vpack.c.b16 %v1023, %v1022
    %v1033 = vpack.c.b16 %v1025, %v1024
    %1042 = vmatprep.subr.bf16.mxu0 0
    %1043 = vmatpush1.bf16.msra.mxu0 %v1033
    %1044 = vmatprep.subr.bf16.mxu0 0
    %1045 = vmatpush1.bf16.msra.mxu0 %v1032
    %1046 = vmatprep.subr.bf16.mxu0 0
    %1047 = vmatpush1.bf16.msra.mxu0 %v1031
    %1048 = vmatprep.subr.bf16.mxu0 0
    %1049 = vmatpush1.bf16.msra.mxu0 %v1030
    %1050 = vmatprep.subr.bf16.mxu0 0
    %1051 = vmatpush1.bf16.msra.mxu0 %v1029
    %1052 = vmatprep.subr.bf16.mxu0 0
    %1053 = vmatpush1.bf16.msra.mxu0 %v1028
    %1054 = vmatprep.subr.bf16.mxu0 0
    %1055 = vmatpush1.bf16.msra.mxu0 %v1027
    %1056 = vmatprep.subr.bf16.mxu0 0
    %1057 = vmatpush1.bf16.msra.mxu0 %v1026
    %1058 = vmatprep.subr.bf16.mxu0 0
    %1059 = vmatpush2.bf16.msra.mxu0 0
    %1060 = vmatprep.subr.bf16.mxu0 0
    %1061 = vmatpush2.bf16.msra.mxu0 0
    %1062 = vmatprep.subr.bf16.mxu0 0
    %1063 = vmatpush2.bf16.msra.mxu0 0
    %1064 = vmatprep.subr.bf16.mxu0 0
    %1065 = vmatpush2.bf16.msra.mxu0 0
    %1066 = vmatprep.subr.bf16.mxu0 0
    %1067 = vmatpush2.bf16.msra.mxu0 0
    %1068 = vmatprep.subr.bf16.mxu0 0
    %1069 = vmatpush2.bf16.msra.mxu0 0
    %1070 = vmatprep.subr.bf16.mxu0 0
    %1071 = vmatpush2.bf16.msra.mxu0 0
    %1072 = vmatprep.subr.bf16.mxu0 0
    %1073 = vmatpush2.bf16.msra.mxu0 0
    %1074 = vmatprep.mubr.bf16.mxu0 0
    %1075 = vmatmul.mubr.bf16.gmra.mxu0 %v970
    %v1076 = vpop.f32.mrf.mxu0
    %v1077 = vadd.f32 %v992, %v1076
    %v1078 = vpop.f32.mrf.mxu0
    %v1079 = vpop.f32.mrf.mxu0
    %v1080 = vadd.f32 %v992, %v1079
    %v1081 = vpop.f32.mrf.mxu0
    %1082 = vdwg.mxu0
    %v1083 = vadd.f32 %v1077, %v898
    %v1084 = vadd.f32 %v1080, %v899
    %v1085 = vld [vmem:[%s13] sm:$0x1]
    %v1086 = vld [vmem:[%s14] sm:$0x1]
    %v1087 = vsel %vm108, %v1083, 0.0
    %1088 = vadd.xlane.f32.xlu0 %v1087
    %v1089 = vpop.xlane.xlu0 %1088
    %v1090 = vsel %vm108, %v1084, 0.0
    %1091 = vadd.xlane.f32.xlu0 %v1090
    %v1092 = vpop.xlane.xlu0 %1091
    %v1093 = vmul.f32 %v1089, %v863
    %v1094 = vmul.f32 %v1092, %v863
    %v1095 = vsub.f32 %v1083, %v1093
    %v1096 = vsub.f32 %v1084, %v1094
    %v1097 = vmul.f32 %v1095, %v1095
    %v1098 = vmul.f32 %v1096, %v1096
    %v1099 = vsel %vm108, %v1097, 0.0
    %1100 = vadd.xlane.f32.xlu0 %v1099
    %v1101 = vpop.xlane.xlu0 %1100
    %v1102 = vsel %vm108, %v1098, 0.0
    %1103 = vadd.xlane.f32.xlu0 %v1102
    %v1104 = vpop.xlane.xlu0 %1103
    %v1105 = vmul.f32 %v1101, %v863
    %v1106 = vmul.f32 %v1104, %v863
    %v1107 = vadd.f32 %v1105, 1e-05
    %v1108 = vadd.f32 %v1106, 1e-05
    %v1109 = vrsqrt.pop %v1107
    %v1110 = vrsqrt.pop %v1108
    %v1111 = vmul.f32 %v1095, %v1109
    %v1112 = vmul.f32 %v1096, %v1110
    %v1114 = vlaneseq
    %v1115 = vshrl.u32 %v1114, 7
    %v1116 = vsub.s32 0, %v1115
    %v1117 = vrot.slane %v1085, %v1116
    %v1119 = vmul.f32 %v1111, %v1117
    %v1120 = vmul.f32 %v1112, %v1117
    %v1122 = vlaneseq
    %v1123 = vshrl.u32 %v1122, 7
    %v1124 = vsub.s32 0, %v1123
    %v1125 = vrot.slane %v1086, %v1124
    %v1127 = vadd.f32 %v1119, %v1125
    %v1128 = vadd.f32 %v1120, %v1125
    %v1129 = vpack.c.bf16 %v1128, %v1127
    %v1131 = vunpack.c.l.b16 %v1129
    %v1132 = vunpack.c.h.b16 %v1129
    %v1133 = vpack.c.b16 %v1131, %v1131
    %v1134 = vpack.c.b16 %v1132, %v1132
    %vm1137 = vcmask 257024
    %1138 = vst.msk [vmem:[#allocation7] sm:$0xf] %vm1137, %v1133
    %1139 = vst.msk [vmem:[#allocation7 + $0x4] sm:$0xf] %vm1137, %v1134
    // Predicated region
    $region70: #{tpu_custom_call.1} parent=1 // pred_check
      _
    $region71: #{tpu_custom_call.1} parent=1 // pred_check_branch
      %1141 = sbr.rel (0) target = $region73
    $region72: #{tpu_custom_call.1} parent=1 // pred_region
      %s1143 = ssub.s32 128, 128
      %1144 = vsyncadd [#allocation4], %s1143
      %s1145 = sshll.u32 [#allocation7], 4
      %s1146 = int_to_ptr.vmem [resolvable:$true] %s1145
      %1151 = dma.vmem_to_hbm [thread:$0]  %s1146, 128, %s15, [#allocation4], 64, 64, 4
    $region73: #{tpu_custom_call.1} parent=1 // pred_fallthru
      _
    // Predicated region
    $region74: #{tpu_custom_call.1} parent=1 // pred_check
      _
    $region75: #{tpu_custom_call.1} parent=1 // pred_check_branch
      %1153 = sbr.rel (0) target = $region77
    $region76: #{tpu_custom_call.1} parent=1 // pred_region
      %1154 = dma.done [#allocation4], 128
    $region77: #{tpu_custom_call.1} parent=1 // pred_fallthru
      _
    %1155 = vsyncpa [#allocation3], 1
    %1156 = vsyncpa [#allocation6], 1
    %1157 = vsyncpa [#allocation4], 1

// kernel: tpu_custom_call.1
$region0: #{tpu_custom_call.1}
  #allocation0 [shape = 'u32[]', space=smem, size = 0x4, offset = 0x4, fixed_abs, tag = 'smem constant byte address 0x4 - core index']
  #allocation1 [shape = 'u32[144,128]{1,0:T(1,128)}', space=vmem, size = 0x12000, scoped, tag = 'internal scratch']
  %s0 = inlined_call_operand.vmem [shape: f32[16,32], index: 0, kind: input, shape index: {}]
  %s1 = inlined_call_operand.vmem [shape: f32[16,32], index: 1, kind: input, shape index: {}]
  %s2 = inlined_call_operand.hbm [shape: bf16[16,16], index: 2, kind: input, shape index: {}]
  %s3 = inlined_call_operand.vmem [shape: bf16[32,96], index: 3, kind: input, shape index: {}]
  %s4 = inlined_call_operand.vmem [shape: f32[1,96], index: 4, kind: input, shape index: {}]
  %s5 = inlined_call_operand.vmem [shape: bf16[32,32], index: 5, kind: input, shape index: {}]
  %s6 = inlined_call_operand.vmem [shape: f32[1,32], index: 6, kind: input, shape index: {}]
  %s7 = inlined_call_operand.vmem [shape: f32[1,32], index: 7, kind: input, shape index: {}]
  %s8 = inlined_call_operand.vmem [shape: f32[1,32], index: 8, kind: input, shape index: {}]
  %s9 = inlined_call_operand.vmem [shape: bf16[32,128], index: 9, kind: input, shape index: {}]
  %s10 = inlined_call_operand.hbm [shape: f32[1,128], index: 10, kind: input, shape index: {}]
  %s11 = inlined_call_operand.vmem [shape: bf16[128,32], index: 11, kind: input, shape index: {}]
  %s12 = inlined_call_operand.vmem [shape: f32[1,32], index: 12, kind: input, shape index: {}]
  %s13 = inlined_call_operand.vmem [shape: f32[1,32], index: 13, kind: input, shape index: {}]
  %s14 = inlined_call_operand.vmem [shape: f32[1,32], index: 14, kind: input, shape index: {}]
  %s15 = inlined_call_operand.hbm [shape: bf16[16,32], index: 15, kind: output, shape index: {}]
  %s16 = sld [smem:[#allocation0]]
  $region78: #{tpu_custom_call.1} parent=0
    _
  %s18 = ssub.s32 1, %s16
  %s19 = scalar_select 0, %s18, %s16
  $region1: #{tpu_custom_call.1} parent=0
    #allocation2 [shape = 'u8[4096]{0}', space=vmem, size = 0x1000, scoped, tag = 'input window, operand 2, single buffered']
    #allocation3 [shape = 's32[1]{0}', space=sflag, size = 0x4, scoped, tag = 'scoped memory for tpu_custom_call.1']
    #allocation4 [shape = 's32[1]{0}', space=sflag, size = 0x4, scoped, tag = 'scoped memory for tpu_custom_call.1']
    #allocation5 [shape = 'u8[512]{0}', space=vmem, size = 0x400, scoped, tag = 'input window, operand 10, single buffered']
    #allocation6 [shape = 's32[1]{0}', space=sflag, size = 0x4, scoped, tag = 'scoped memory for tpu_custom_call.1']
    #allocation7 [shape = 'u8[4096]{0}', space=vmem, size = 0x1000, scoped, tag = 'output window, operand 0, single buffered']
    %20 = vsyncpa [#allocation3], 0
    %21 = vsyncpa [#allocation6], 0
    %22 = vsyncpa [#allocation4], 0
    // Predicated region
    $region2: #{tpu_custom_call.1} parent=1 // pred_check
      _
    $region3: #{tpu_custom_call.1} parent=1 // pred_check_branch
      %24 = sbr.rel (0) target = $region5
    $region4: #{tpu_custom_call.1} parent=1 // pred_region
      _
    $region5: #{tpu_custom_call.1} parent=1 // pred_fallthru
      _
    // Predicated region
    $region6: #{tpu_custom_call.1} parent=1 // pred_check
      _
    $region7: #{tpu_custom_call.1} parent=1 // pred_check_branch
      %26 = sbr.rel (0) target = $region9
    $region8: #{tpu_custom_call.1} parent=1 // pred_region
      _
    $region9: #{tpu_custom_call.1} parent=1 // pred_fallthru
      _
    // Predicated region
    $region10: #{tpu_custom_call.1} parent=1 // pred_check
      _
    $region11: #{tpu_custom_call.1} parent=1 // pred_check_branch
      %28 = sbr.rel (0) target = $region13
    $region12: #{tpu_custom_call.1} parent=1 // pred_region
      %s30 = ssub.s32 128, 128
      %31 = vsyncadd [#allocation3], %s30
      %s32 = sshll.u32 [#allocation2], 4
      %s33 = int_to_ptr.vmem [resolvable:$true] %s32
      %38 = dma.hbm_to_vmem [thread:$0]  %s2, 128, %s33, [#allocation3], 64, 64, 4
    $region13: #{tpu_custom_call.1} parent=1 // pred_fallthru
      _
    // Predicated region
    $region14: #{tpu_custom_call.1} parent=1 // pred_check
      _
    $region15: #{tpu_custom_call.1} parent=1 // pred_check_branch
      %40 = sbr.rel (0) target = $region17
    $region16: #{tpu_custom_call.1} parent=1 // pred_region
      _
    $region17: #{tpu_custom_call.1} parent=1 // pred_fallthru
      _
    // Predicated region
    $region18: #{tpu_custom_call.1} parent=1 // pred_check
      _
    $region19: #{tpu_custom_call.1} parent=1 // pred_check_branch
      %42 = sbr.rel (0) target = $region21
    $region20: #{tpu_custom_call.1} parent=1 // pred_region
      _
    $region21: #{tpu_custom_call.1} parent=1 // pred_fallthru
      _
    // Predicated region
    $region22: #{tpu_custom_call.1} parent=1 // pred_check
      _
    $region23: #{tpu_custom_call.1} parent=1 // pred_check_branch
      %44 = sbr.rel (0) target = $region25
    $region24: #{tpu_custom_call.1} parent=1 // pred_region
      _
    $region25: #{tpu_custom_call.1} parent=1 // pred_fallthru
      _
    // Predicated region
    $region26: #{tpu_custom_call.1} parent=1 // pred_check
      _
    $region27: #{tpu_custom_call.1} parent=1 // pred_check_branch
      %46 = sbr.rel (0) target = $region29
    $region28: #{tpu_custom_call.1} parent=1 // pred_region
      _
    $region29: #{tpu_custom_call.1} parent=1 // pred_fallthru
      _
    // Predicated region
    $region30: #{tpu_custom_call.1} parent=1 // pred_check
      _
    $region31: #{tpu_custom_call.1} parent=1 // pred_check_branch
      %48 = sbr.rel (0) target = $region33
    $region32: #{tpu_custom_call.1} parent=1 // pred_region
      _
    $region33: #{tpu_custom_call.1} parent=1 // pred_fallthru
      _
    // Predicated region
    $region34: #{tpu_custom_call.1} parent=1 // pred_check
      _
    $region35: #{tpu_custom_call.1} parent=1 // pred_check_branch
      %50 = sbr.rel (0) target = $region37
    $region36: #{tpu_custom_call.1} parent=1 // pred_region
      _
    $region37: #{tpu_custom_call.1} parent=1 // pred_fallthru
      _
    // Predicated region
    $region38: #{tpu_custom_call.1} parent=1 // pred_check
      _
    $region39: #{tpu_custom_call.1} parent=1 // pred_check_branch
      %52 = sbr.rel (0) target = $region41
    $region40: #{tpu_custom_call.1} parent=1 // pred_region
      _
    $region41: #{tpu_custom_call.1} parent=1 // pred_fallthru
      _
    // Predicated region
    $region42: #{tpu_custom_call.1} parent=1 // pred_check
      _
    $region43: #{tpu_custom_call.1} parent=1 // pred_check_branch
      %54 = sbr.rel (0) target = $region45
    $region44: #{tpu_custom_call.1} parent=1 // pred_region
      %s56 = ssub.s32 16, 16
      %57 = vsyncadd [#allocation6], %s56
      %s59 = sshll.u32 [#allocation5], 4
      %s60 = int_to_ptr.vmem [resolvable:$true] %s59
      %62 = dma.hbm_to_vmem [thread:$0]  %s10, 16, %s60, [#allocation6]
    $region45: #{tpu_custom_call.1} parent=1 // pred_fallthru
      _
    // Predicated region
    $region46: #{tpu_custom_call.1} parent=1 // pred_check
      _
    $region47: #{tpu_custom_call.1} parent=1 // pred_check_branch
      %64 = sbr.rel (0) target = $region49
    $region48: #{tpu_custom_call.1} parent=1 // pred_region
      _
    $region49: #{tpu_custom_call.1} parent=1 // pred_fallthru
      _
    // Predicated region
    $region50: #{tpu_custom_call.1} parent=1 // pred_check
      _
    $region51: #{tpu_custom_call.1} parent=1 // pred_check_branch
      %66 = sbr.rel (0) target = $region53
    $region52: #{tpu_custom_call.1} parent=1 // pred_region
      _
    $region53: #{tpu_custom_call.1} parent=1 // pred_fallthru
      _
    // Predicated region
    $region54: #{tpu_custom_call.1} parent=1 // pred_check
      _
    $region55: #{tpu_custom_call.1} parent=1 // pred_check_branch
      %68 = sbr.rel (0) target = $region57
    $region56: #{tpu_custom_call.1} parent=1 // pred_region
      _
    $region57: #{tpu_custom_call.1} parent=1 // pred_fallthru
      _
    // Predicated region
    $region58: #{tpu_custom_call.1} parent=1 // pred_check
      _
    $region59: #{tpu_custom_call.1} parent=1 // pred_check_branch
      %70 = sbr.rel (0) target = $region61
    $region60: #{tpu_custom_call.1} parent=1 // pred_region
      _
    $region61: #{tpu_custom_call.1} parent=1 // pred_fallthru
      _
    // Predicated region
    $region62: #{tpu_custom_call.1} parent=1 // pred_check
      _
    $region63: #{tpu_custom_call.1} parent=1 // pred_check_branch
      %72 = sbr.rel (0) target = $region65
    $region64: #{tpu_custom_call.1} parent=1 // pred_region
      %73 = dma.done [#allocation3], 128
    $region65: #{tpu_custom_call.1} parent=1 // pred_fallthru
      _
    // Predicated region
    $region66: #{tpu_custom_call.1} parent=1 // pred_check
      _
    $region67: #{tpu_custom_call.1} parent=1 // pred_check_branch
      %75 = sbr.rel (0) target = $region69
    $region68: #{tpu_custom_call.1} parent=1 // pred_region
      %76 = dma.done [#allocation6], 16
    $region69: #{tpu_custom_call.1} parent=1 // pred_fallthru
      _
    %v78 = vld [vmem:[%s0] sm:$0xff]
    %v79 = vld [vmem:[%s0 + $0x8] sm:$0xff]
    %v80 = vld [vmem:[%s1] sm:$0xff]
    %v81 = vld [vmem:[%s1 + $0x8] sm:$0xff]
    %v82 = vadd.f32 %v78, %v80
    %v83 = vadd.f32 %v79, %v81
    %v84 = vpack.c.bf16 %v83, %v82
    %v85 = vld [vmem:[%s3] sm:$0xf]
    %v86 = vld [vmem:[%s3 + $0x4] sm:$0xf]
    %v87 = vld [vmem:[%s3 + $0x8] sm:$0xf]
    %v88 = vld [vmem:[%s3 + $0xc] sm:$0xf]
    %v89 = vld [vmem:[%s4] sm:$0x1]
    %v91 = vlaneseq
    %v92 = vshrl.u32 %v91, 7
    %v93 = vsub.s32 0, %v92
    %v94 = vrot.slane %v89, %v93
    %v100 = vunpack.c.l.b16 %v85
    %v101 = vunpack.c.l.b16 %v86
    %v102 = vunpack.c.l.b16 %v87
    %v103 = vunpack.c.l.b16 %v88
    %v104 = vpack.c.b16 %v101, %v100
    %v105 = vpack.c.b16 %v103, %v102
    %vm108 = vcmask 261120
    %v110 = vsel %vm108, %v84, 0
    %112 = vmatprep.subr.bf16.mxu0 0
    %113 = vmatpush1.bf16.msra.mxu0 0
    %114 = vmatprep.subr.bf16.mxu0 0
    %115 = vmatpush1.bf16.msra.mxu0 0
    %116 = vmatprep.subr.bf16.mxu0 0
    %117 = vmatpush1.bf16.msra.mxu0 0
    %118 = vmatprep.subr.bf16.mxu0 0
    %119 = vmatpush1.bf16.msra.mxu0 0
    %120 = vmatprep.subr.bf16.mxu0 0
    %121 = vmatpush1.bf16.msra.mxu0 0
    %122 = vmatprep.subr.bf16.mxu0 0
    %123 = vmatpush1.bf16.msra.mxu0 0
    %124 = vmatprep.subr.bf16.mxu0 0
    %125 = vmatpush1.bf16.msra.mxu0 %v105
    %126 = vmatprep.subr.bf16.mxu0 0
    %127 = vmatpush1.bf16.msra.mxu0 %v104
    %128 = vmatprep.subr.bf16.mxu0 0
    %129 = vmatpush2.bf16.msra.mxu0 0
    %130 = vmatprep.subr.bf16.mxu0 0
    %131 = vmatpush2.bf16.msra.mxu0 0
    %132 = vmatprep.subr.bf16.mxu0 0
    %133 = vmatpush2.bf16.msra.mxu0 0
    %134 = vmatprep.subr.bf16.mxu0 0
    %135 = vmatpush2.bf16.msra.mxu0 0
    %136 = vmatprep.subr.bf16.mxu0 0
    %137 = vmatpush2.bf16.msra.mxu0 0
    %138 = vmatprep.subr.bf16.mxu0 0
    %139 = vmatpush2.bf16.msra.mxu0 0
    %140 = vmatprep.subr.bf16.mxu0 0
    %141 = vmatpush2.bf16.msra.mxu0 0
    %142 = vmatprep.subr.bf16.mxu0 0
    %143 = vmatpush2.bf16.msra.mxu0 0
    %144 = vmatprep.mubr.bf16.mxu0 0
    %145 = vmatmul.mubr.bf16.gmra.mxu0 %v110
    %v146 = vpop.f32.mrf.mxu0
    %v147 = vadd.f32 %v94, %v146
    %v148 = vpop.f32.mrf.mxu0
    %v149 = vpop.f32.mrf.mxu0
    %v150 = vadd.f32 %v94, %v149
    %v151 = vpop.f32.mrf.mxu0
    %152 = vdwg.mxu0
    %v153 = vpack.c.bf16 %v150, %v147
    %v154 = vld [vmem:[#allocation2] sm:$0xf]
    %v155 = vld [vmem:[#allocation2 + $0x4] sm:$0xf]
    %v156 = vunpack.c.l.bf16 %v154
    %v157 = vunpack.c.l.bf16 %v155
    %v158 = vld [vmem:[%s5] sm:$0xf]
    %v159 = vld [vmem:[%s5 + $0x4] sm:$0xf]
    %v160 = vld [vmem:[%s5 + $0x8] sm:$0xf]
    %v161 = vld [vmem:[%s5 + $0xc] sm:$0xf]
    %163 = vrot.lane.b32.xlu0 %v153, 96
    %v164 = vpop.permute.xlu0 %163
    %vm165 = vcmask 64512
    %v167 = vsel %vm165, %v153, 0
    %v170 = vsel %vm165, %v164, 0
    %172 = vmatprep.subr.bf16.mxu0 0
    %173 = vmatpush1.bf16.xpose.msra.mxu0 0
    %174 = vmatprep.subr.bf16.mxu0 0
    %175 = vmatpush1.bf16.xpose.msra.mxu0 0
    %176 = vmatprep.subr.bf16.mxu0 0
    %177 = vmatpush1.bf16.xpose.msra.mxu0 0
    %178 = vmatprep.subr.bf16.mxu0 0
    %179 = vmatpush1.bf16.xpose.msra.mxu0 0
    %180 = vmatprep.subr.bf16.mxu0 0
    %181 = vmatpush1.bf16.xpose.msra.mxu0 0
    %182 = vmatprep.subr.bf16.mxu0 0
    %183 = vmatpush1.bf16.xpose.msra.mxu0 0
    %184 = vmatprep.subr.bf16.mxu0 0
    %185 = vmatpush1.bf16.xpose.msra.mxu0 0
    %186 = vmatprep.subr.bf16.mxu0 0
    %187 = vmatpush1.bf16.xpose.msra.mxu0 %v170
    %188 = vmatprep.subr.bf16.mxu0 0
    %189 = vmatpush2.bf16.xpose.msra.mxu0 0
    %190 = vmatprep.subr.bf16.mxu0 0
    %191 = vmatpush2.bf16.xpose.msra.mxu0 0
    %192 = vmatprep.subr.bf16.mxu0 0
    %193 = vmatpush2.bf16.xpose.msra.mxu0 0
    %194 = vmatprep.subr.bf16.mxu0 0
    %195 = vmatpush2.bf16.xpose.msra.mxu0 0
    %196 = vmatprep.subr.bf16.mxu0 0
    %197 = vmatpush2.bf16.xpose.msra.mxu0 0
    %198 = vmatprep.subr.bf16.mxu0 0
    %199 = vmatpush2.bf16.xpose.msra.mxu0 0
    %200 = vmatprep.subr.bf16.mxu0 0
    %201 = vmatpush2.bf16.xpose.msra.mxu0 0
    %202 = vmatprep.subr.bf16.mxu0 0
    %203 = vmatpush2.bf16.xpose.msra.mxu0 0
    %204 = vmatprep.mubr.bf16.mxu0 0
    %205 = vmatmul.mubr.bf16.gmra.mxu0 %v167
    %v206 = vpop.f32.mrf.mxu0
    %v207 = vadd.f32 %v156, %v206
    %v208 = vpop.f32.mrf.mxu0
    %v209 = vpop.f32.mrf.mxu0
    %v210 = vadd.f32 %v157, %v209
    %v211 = vpop.f32.mrf.mxu0
    %212 = vdwg.mxu0
    %vm213 = vcmask 130048
    %v214 = vsel %vm213, %v207, -inf
    %215 = vmax.xlane.f32.xlu0 %v214
    %v216 = vpop.xlane.xlu0 %215
    %v217 = vsel %vm213, %v210, -inf
    %218 = vmax.xlane.f32.xlu0 %v217
    %v219 = vpop.xlane.xlu0 %218
    %v220 = vsub.f32 %v207, %v216
    %v221 = vsub.f32 %v210, %v219
    %v222 = vmul.f32 %v220, 1.442695
    %v223 = vpow.pop %v222
    %v224 = vmul.f32 %v221, 1.442695
    %v225 = vpow.pop %v224
    %v226 = vsel %vm213, %v223, 0.0
    %227 = vadd.xlane.f32.xlu0 %v226
    %v228 = vpop.xlane.xlu0 %227
    %v229 = vsel %vm213, %v225, 0.0
    %230 = vadd.xlane.f32.xlu0 %v229
    %v231 = vpop.xlane.xlu0 %230
    %v232 = vpack.c.bf16 %v225, %v223
    %233 = vrot.lane.b32.xlu0 %v153, 64
    %v234 = vpop.permute.xlu0 %233
    %v237 = vsel %vm213, %v232, 0
    %239 = vmatprep.subr.bf16.mxu0 0
    %240 = vmatpush1.bf16.msra.mxu0 0
    %241 = vmatprep.subr.bf16.mxu0 0
    %242 = vmatpush1.bf16.msra.mxu0 0
    %243 = vmatprep.subr.bf16.mxu0 0
    %244 = vmatpush1.bf16.msra.mxu0 0
    %245 = vmatprep.subr.bf16.mxu0 0
    %246 = vmatpush1.bf16.msra.mxu0 0
    %247 = vmatprep.subr.bf16.mxu0 0
    %248 = vmatpush1.bf16.msra.mxu0 0
    %249 = vmatprep.subr.bf16.mxu0 0
    %250 = vmatpush1.bf16.msra.mxu0 0
    %251 = vmatprep.subr.bf16.mxu0 0
    %252 = vmatpush1.bf16.msra.mxu0 0
    %253 = vmatprep.subr.bf16.mxu0 0
    %254 = vmatpush1.bf16.msra.mxu0 %v234
    %255 = vmatprep.subr.bf16.mxu0 0
    %256 = vmatpush2.bf16.msra.mxu0 0
    %257 = vmatprep.subr.bf16.mxu0 0
    %258 = vmatpush2.bf16.msra.mxu0 0
    %259 = vmatprep.subr.bf16.mxu0 0
    %260 = vmatpush2.bf16.msra.mxu0 0
    %261 = vmatprep.subr.bf16.mxu0 0
    %262 = vmatpush2.bf16.msra.mxu0 0
    %263 = vmatprep.subr.bf16.mxu0 0
    %264 = vmatpush2.bf16.msra.mxu0 0
    %265 = vmatprep.subr.bf16.mxu0 0
    %266 = vmatpush2.bf16.msra.mxu0 0
    %267 = vmatprep.subr.bf16.mxu0 0
    %268 = vmatpush2.bf16.msra.mxu0 0
    %269 = vmatprep.subr.bf16.mxu0 0
    %270 = vmatpush2.bf16.msra.mxu0 0
    %271 = vmatprep.mubr.bf16.mxu0 0
    %272 = vmatmul.mubr.bf16.gmra.mxu0 %v237
    %v273 = vpop.f32.mrf.mxu0
    %v274 = vadd.f32 0.0, %v273
    %v275 = vpop.f32.mrf.mxu0
    %v276 = vpop.f32.mrf.mxu0
    %v277 = vadd.f32 0.0, %v276
    %v278 = vpop.f32.mrf.mxu0
    %279 = vdwg.mxu0
    %v280 = vrcp.pop %v228
    %v281 = vrcp.pop %v231
    %v282 = vmul.f32 %v274, %v280
    %v283 = vmul.f32 %v277, %v281
    %v284 = vpack.c.bf16 %v283, %v282
    %285 = vrot.lane.b32.xlu0 %v153, 120
    %v286 = vpop.permute.xlu0 %285
    %287 = vrot.lane.b32.xlu0 %v153, 88
    %v288 = vpop.permute.xlu0 %287
    %v290 = vsel %vm165, %v286, 0
    %v293 = vsel %vm165, %v288, 0
    %295 = vmatprep.subr.bf16.mxu0 0
    %296 = vmatpush1.bf16.xpose.msra.mxu0 0
    %297 = vmatprep.subr.bf16.mxu0 0
    %298 = vmatpush1.bf16.xpose.msra.mxu0 0
    %299 = vmatprep.subr.bf16.mxu0 0
    %300 = vmatpush1.bf16.xpose.msra.mxu0 0
    %301 = vmatprep.subr.bf16.mxu0 0
    %302 = vmatpush1.bf16.xpose.msra.mxu0 0
    %303 = vmatprep.subr.bf16.mxu0 0
    %304 = vmatpush1.bf16.xpose.msra.mxu0 0
    %305 = vmatprep.subr.bf16.mxu0 0
    %306 = vmatpush1.bf16.xpose.msra.mxu0 0
    %307 = vmatprep.subr.bf16.mxu0 0
    %308 = vmatpush1.bf16.xpose.msra.mxu0 0
    %309 = vmatprep.subr.bf16.mxu0 0
    %310 = vmatpush1.bf16.xpose.msra.mxu0 %v293
    %311 = vmatprep.subr.bf16.mxu0 0
    %312 = vmatpush2.bf16.xpose.msra.mxu0 0
    %313 = vmatprep.subr.bf16.mxu0 0
    %314 = vmatpush2.bf16.xpose.msra.mxu0 0
    %315 = vmatprep.subr.bf16.mxu0 0
    %316 = vmatpush2.bf16.xpose.msra.mxu0 0
    %317 = vmatprep.subr.bf16.mxu0 0
    %318 = vmatpush2.bf16.xpose.msra.mxu0 0
    %319 = vmatprep.subr.bf16.mxu0 0
    %320 = vmatpush2.bf16.xpose.msra.mxu0 0
    %321 = vmatprep.subr.bf16.mxu0 0
    %322 = vmatpush2.bf16.xpose.msra.mxu0 0
    %323 = vmatprep.subr.bf16.mxu0 0
    %324 = vmatpush2.bf16.xpose.msra.mxu0 0
    %325 = vmatprep.subr.bf16.mxu0 0
    %326 = vmatpush2.bf16.xpose.msra.mxu0 0
    %327 = vmatprep.mubr.bf16.mxu0 0
    %328 = vmatmul.mubr.bf16.gmra.mxu0 %v290
    %v329 = vpop.f32.mrf.mxu0
    %v330 = vadd.f32 %v156, %v329
    %v331 = vpop.f32.mrf.mxu0
    %v332 = vpop.f32.mrf.mxu0
    %v333 = vadd.f32 %v157, %v332
    %v334 = vpop.f32.mrf.mxu0
    %335 = vdwg.mxu0
    %v336 = vsel %vm213, %v330, -inf
    %337 = vmax.xlane.f32.xlu0 %v336
    %v338 = vpop.xlane.xlu0 %337
    %v339 = vsel %vm213, %v333, -inf
    %340 = vmax.xlane.f32.xlu0 %v339
    %v341 = vpop.xlane.xlu0 %340
    %v342 = vsub.f32 %v330, %v338
    %v343 = vsub.f32 %v333, %v341
    %v344 = vmul.f32 %v342, 1.442695
    %v345 = vpow.pop %v344
    %v346 = vmul.f32 %v343, 1.442695
    %v347 = vpow.pop %v346
    %v348 = vsel %vm213, %v345, 0.0
    %349 = vadd.xlane.f32.xlu0 %v348
    %v350 = vpop.xlane.xlu0 %349
    %v351 = vsel %vm213, %v347, 0.0
    %352 = vadd.xlane.f32.xlu0 %v351
    %v353 = vpop.xlane.xlu0 %352
    %v354 = vpack.c.bf16 %v347, %v345
    %355 = vrot.lane.b32.xlu0 %v153, 56
    %v356 = vpop.permute.xlu0 %355
    %v359 = vsel %vm213, %v354, 0
    %361 = vmatprep.subr.bf16.mxu0 0
    %362 = vmatpush1.bf16.msra.mxu0 0
    %363 = vmatprep.subr.bf16.mxu0 0
    %364 = vmatpush1.bf16.msra.mxu0 0
    %365 = vmatprep.subr.bf16.mxu0 0
    %366 = vmatpush1.bf16.msra.mxu0 0
    %367 = vmatprep.subr.bf16.mxu0 0
    %368 = vmatpush1.bf16.msra.mxu0 0
    %369 = vmatprep.subr.bf16.mxu0 0
    %370 = vmatpush1.bf16.msra.mxu0 0
    %371 = vmatprep.subr.bf16.mxu0 0
    %372 = vmatpush1.bf16.msra.mxu0 0
    %373 = vmatprep.subr.bf16.mxu0 0
    %374 = vmatpush1.bf16.msra.mxu0 0
    %375 = vmatprep.subr.bf16.mxu0 0
    %376 = vmatpush1.bf16.msra.mxu0 %v356
    %377 = vmatprep.subr.bf16.mxu0 0
    %378 = vmatpush2.bf16.msra.mxu0 0
    %379 = vmatprep.subr.bf16.mxu0 0
    %380 = vmatpush2.bf16.msra.mxu0 0
    %381 = vmatprep.subr.bf16.mxu0 0
    %382 = vmatpush2.bf16.msra.mxu0 0
    %383 = vmatprep.subr.bf16.mxu0 0
    %384 = vmatpush2.bf16.msra.mxu0 0
    %385 = vmatprep.subr.bf16.mxu0 0
    %386 = vmatpush2.bf16.msra.mxu0 0
    %387 = vmatprep.subr.bf16.mxu0 0
    %388 = vmatpush2.bf16.msra.mxu0 0
    %389 = vmatprep.subr.bf16.mxu0 0
    %390 = vmatpush2.bf16.msra.mxu0 0
    %391 = vmatprep.subr.bf16.mxu0 0
    %392 = vmatpush2.bf16.msra.mxu0 0
    %393 = vmatprep.mubr.bf16.mxu0 0
    %394 = vmatmul.mubr.bf16.gmra.mxu0 %v359
    %v395 = vpop.f32.mrf.mxu0
    %v396 = vadd.f32 0.0, %v395
    %v397 = vpop.f32.mrf.mxu0
    %v398 = vpop.f32.mrf.mxu0
    %v399 = vadd.f32 0.0, %v398
    %v400 = vpop.f32.mrf.mxu0
    %401 = vdwg.mxu0
    %v402 = vrcp.pop %v350
    %v403 = vrcp.pop %v353
    %v404 = vmul.f32 %v396, %v402
    %v405 = vmul.f32 %v399, %v403
    %v406 = vpack.c.bf16 %v405, %v404
    %v408 = vsel %vm165, %v406, 0
    %vm410 = vcmask 1043456
    %v412 = vsel %vm410, %v159, 0
    %414 = vmatprep.subr.bf16.mxu0 0
    %415 = vmatpush1.bf16.msra.mxu0 0
    %416 = vmatprep.subr.bf16.mxu0 0
    %417 = vmatpush1.bf16.msra.mxu0 0
    %418 = vmatprep.subr.bf16.mxu0 0
    %419 = vmatpush1.bf16.msra.mxu0 0
    %420 = vmatprep.subr.bf16.mxu0 0
    %421 = vmatpush1.bf16.msra.mxu0 0
    %422 = vmatprep.subr.bf16.mxu0 0
    %423 = vmatpush1.bf16.msra.mxu0 0
    %424 = vmatprep.subr.bf16.mxu0 0
    %425 = vmatpush1.bf16.msra.mxu0 0
    %426 = vmatprep.subr.bf16.mxu0 0
    %427 = vmatpush1.bf16.msra.mxu0 0
    %428 = vmatprep.subr.bf16.mxu0 0
    %429 = vmatpush1.bf16.msra.mxu0 %v412
    %430 = vmatprep.subr.bf16.mxu0 0
    %431 = vmatpush2.bf16.msra.mxu0 0
    %432 = vmatprep.subr.bf16.mxu0 0
    %433 = vmatpush2.bf16.msra.mxu0 0
    %434 = vmatprep.subr.bf16.mxu0 0
    %435 = vmatpush2.bf16.msra.mxu0 0
    %436 = vmatprep.subr.bf16.mxu0 0
    %437 = vmatpush2.bf16.msra.mxu0 0
    %438 = vmatprep.subr.bf16.mxu0 0
    %439 = vmatpush2.bf16.msra.mxu0 0
    %440 = vmatprep.subr.bf16.mxu0 0
    %441 = vmatpush2.bf16.msra.mxu0 0
    %442 = vmatprep.subr.bf16.mxu0 0
    %443 = vmatpush2.bf16.msra.mxu0 0
    %444 = vmatprep.subr.bf16.mxu0 0
    %445 = vmatpush2.bf16.msra.mxu0 0
    %446 = vmatprep.mubr.bf16.mxu0 0
    %447 = vmatmul.mubr.bf16.gmra.mxu0 %v408
    %v448 = vpop.f32.mrf.mxu0
    %v449 = vadd.f32 0.0, %v448
    %v450 = vpop.f32.mrf.mxu0
    %v451 = vpop.f32.mrf.mxu0
    %v452 = vadd.f32 0.0, %v451
    %v453 = vpop.f32.mrf.mxu0
    %454 = vdwg.mxu0
    %v456 = vsel %vm165, %v284, 0
    %v459 = vsel %vm410, %v158, 0
    %461 = vmatprep.subr.bf16.mxu0 0
    %462 = vmatpush1.bf16.msra.mxu0 0
    %463 = vmatprep.subr.bf16.mxu0 0
    %464 = vmatpush1.bf16.msra.mxu0 0
    %465 = vmatprep.subr.bf16.mxu0 0
    %466 = vmatpush1.bf16.msra.mxu0 0
    %467 = vmatprep.subr.bf16.mxu0 0
    %468 = vmatpush1.bf16.msra.mxu0 0
    %469 = vmatprep.subr.bf16.mxu0 0
    %470 = vmatpush1.bf16.msra.mxu0 0
    %471 = vmatprep.subr.bf16.mxu0 0
    %472 = vmatpush1.bf16.msra.mxu0 0
    %473 = vmatprep.subr.bf16.mxu0 0
    %474 = vmatpush1.bf16.msra.mxu0 0
    %475 = vmatprep.subr.bf16.mxu0 0
    %476 = vmatpush1.bf16.msra.mxu0 %v459
    %477 = vmatprep.subr.bf16.mxu0 0
    %478 = vmatpush2.bf16.msra.mxu0 0
    %479 = vmatprep.subr.bf16.mxu0 0
    %480 = vmatpush2.bf16.msra.mxu0 0
    %481 = vmatprep.subr.bf16.mxu0 0
    %482 = vmatpush2.bf16.msra.mxu0 0
    %483 = vmatprep.subr.bf16.mxu0 0
    %484 = vmatpush2.bf16.msra.mxu0 0
    %485 = vmatprep.subr.bf16.mxu0 0
    %486 = vmatpush2.bf16.msra.mxu0 0
    %487 = vmatprep.subr.bf16.mxu0 0
    %488 = vmatpush2.bf16.msra.mxu0 0
    %489 = vmatprep.subr.bf16.mxu0 0
    %490 = vmatpush2.bf16.msra.mxu0 0
    %491 = vmatprep.subr.bf16.mxu0 0
    %492 = vmatpush2.bf16.msra.mxu0 0
    %493 = vmatprep.mubr.bf16.mxu0 0
    %494 = vmatmul.mubr.bf16.gmra.mxu0 %v456
    %v495 = vpop.f32.mrf.mxu0
    %v496 = vadd.f32 %v449, %v495
    %v497 = vpop.f32.mrf.mxu0
    %v498 = vpop.f32.mrf.mxu0
    %v499 = vadd.f32 %v452, %v498
    %v500 = vpop.f32.mrf.mxu0
    %501 = vdwg.mxu0
    %502 = vrot.lane.b32.xlu0 %v153, 112
    %v503 = vpop.permute.xlu0 %502
    %504 = vrot.lane.b32.xlu0 %v153, 80
    %v505 = vpop.permute.xlu0 %504
    %v507 = vsel %vm165, %v503, 0
    %v510 = vsel %vm165, %v505, 0
    %512 = vmatprep.subr.bf16.mxu0 0
    %513 = vmatpush1.bf16.xpose.msra.mxu0 0
    %514 = vmatprep.subr.bf16.mxu0 0
    %515 = vmatpush1.bf16.xpose.msra.mxu0 0
    %516 = vmatprep.subr.bf16.mxu0 0
    %517 = vmatpush1.bf16.xpose.msra.mxu0 0
    %518 = vmatprep.subr.bf16.mxu0 0
    %519 = vmatpush1.bf16.xpose.msra.mxu0 0
    %520 = vmatprep.subr.bf16.mxu0 0
    %521 = vmatpush1.bf16.xpose.msra.mxu0 0
    %522 = vmatprep.subr.bf16.mxu0 0
    %523 = vmatpush1.bf16.xpose.msra.mxu0 0
    %524 = vmatprep.subr.bf16.mxu0 0
    %525 = vmatpush1.bf16.xpose.msra.mxu0 0
    %526 = vmatprep.subr.bf16.mxu0 0
    %527 = vmatpush1.bf16.xpose.msra.mxu0 %v510
    %528 = vmatprep.subr.bf16.mxu0 0
    %529 = vmatpush2.bf16.xpose.msra.mxu0 0
    %530 = vmatprep.subr.bf16.mxu0 0
    %531 = vmatpush2.bf16.xpose.msra.mxu0 0
    %532 = vmatprep.subr.bf16.mxu0 0
    %533 = vmatpush2.bf16.xpose.msra.mxu0 0
    %534 = vmatprep.subr.bf16.mxu0 0
    %535 = vmatpush2.bf16.xpose.msra.mxu0 0
    %536 = vmatprep.subr.bf16.mxu0 0
    %537 = vmatpush2.bf16.xpose.msra.mxu0 0
    %538 = vmatprep.subr.bf16.mxu0 0
    %539 = vmatpush2.bf16.xpose.msra.mxu0 0
    %540 = vmatprep.subr.bf16.mxu0 0
    %541 = vmatpush2.bf16.xpose.msra.mxu0 0
    %542 = vmatprep.subr.bf16.mxu0 0
    %543 = vmatpush2.bf16.xpose.msra.mxu0 0
    %544 = vmatprep.mubr.bf16.mxu0 0
    %545 = vmatmul.mubr.bf16.gmra.mxu0 %v507
    %v546 = vpop.f32.mrf.mxu0
    %v547 = vadd.f32 %v156, %v546
    %v548 = vpop.f32.mrf.mxu0
    %v549 = vpop.f32.mrf.mxu0
    %v550 = vadd.f32 %v157, %v549
    %v551 = vpop.f32.mrf.mxu0
    %552 = vdwg.mxu0
    %v553 = vsel %vm213, %v547, -inf
    %554 = vmax.xlane.f32.xlu0 %v553
    %v555 = vpop.xlane.xlu0 %554
    %v556 = vsel %vm213, %v550, -inf
    %557 = vmax.xlane.f32.xlu0 %v556
    %v558 = vpop.xlane.xlu0 %557
    %v559 = vsub.f32 %v547, %v555
    %v560 = vsub.f32 %v550, %v558
    %v561 = vmul.f32 %v559, 1.442695
    %v562 = vpow.pop %v561
    %v563 = vmul.f32 %v560, 1.442695
    %v564 = vpow.pop %v563
    %v565 = vsel %vm213, %v562, 0.0
    %566 = vadd.xlane.f32.xlu0 %v565
    %v567 = vpop.xlane.xlu0 %566
    %v568 = vsel %vm213, %v564, 0.0
    %569 = vadd.xlane.f32.xlu0 %v568
    %v570 = vpop.xlane.xlu0 %569
    %v571 = vpack.c.bf16 %v564, %v562
    %572 = vrot.lane.b32.xlu0 %v153, 48
    %v573 = vpop.permute.xlu0 %572
    %v576 = vsel %vm213, %v571, 0
    %578 = vmatprep.subr.bf16.mxu0 0
    %579 = vmatpush1.bf16.msra.mxu0 0
    %580 = vmatprep.subr.bf16.mxu0 0
    %581 = vmatpush1.bf16.msra.mxu0 0
    %582 = vmatprep.subr.bf16.mxu0 0
    %583 = vmatpush1.bf16.msra.mxu0 0
    %584 = vmatprep.subr.bf16.mxu0 0
    %585 = vmatpush1.bf16.msra.mxu0 0
    %586 = vmatprep.subr.bf16.mxu0 0
    %587 = vmatpush1.bf16.msra.mxu0 0
    %588 = vmatprep.subr.bf16.mxu0 0
    %589 = vmatpush1.bf16.msra.mxu0 0
    %590 = vmatprep.subr.bf16.mxu0 0
    %591 = vmatpush1.bf16.msra.mxu0 0
    %592 = vmatprep.subr.bf16.mxu0 0
    %593 = vmatpush1.bf16.msra.mxu0 %v573
    %594 = vmatprep.subr.bf16.mxu0 0
    %595 = vmatpush2.bf16.msra.mxu0 0
    %596 = vmatprep.subr.bf16.mxu0 0
    %597 = vmatpush2.bf16.msra.mxu0 0
    %598 = vmatprep.subr.bf16.mxu0 0
    %599 = vmatpush2.bf16.msra.mxu0 0
    %600 = vmatprep.subr.bf16.mxu0 0
    %601 = vmatpush2.bf16.msra.mxu0 0
    %602 = vmatprep.subr.bf16.mxu0 0
    %603 = vmatpush2.bf16.msra.mxu0 0
    %604 = vmatprep.subr.bf16.mxu0 0
    %605 = vmatpush2.bf16.msra.mxu0 0
    %606 = vmatprep.subr.bf16.mxu0 0
    %607 = vmatpush2.bf16.msra.mxu0 0
    %608 = vmatprep.subr.bf16.mxu0 0
    %609 = vmatpush2.bf16.msra.mxu0 0
    %610 = vmatprep.mubr.bf16.mxu0 0
    %611 = vmatmul.mubr.bf16.gmra.mxu0 %v576
    %v612 = vpop.f32.mrf.mxu0
    %v613 = vadd.f32 0.0, %v612
    %v614 = vpop.f32.mrf.mxu0
    %v615 = vpop.f32.mrf.mxu0
    %v616 = vadd.f32 0.0, %v615
    %v617 = vpop.f32.mrf.mxu0
    %618 = vdwg.mxu0
    %v619 = vrcp.pop %v567
    %v620 = vrcp.pop %v570
    %v621 = vmul.f32 %v613, %v619
    %v622 = vmul.f32 %v616, %v620
    %v623 = vpack.c.bf16 %v622, %v621
    %v625 = vsel %vm165, %v623, 0
    %v628 = vsel %vm410, %v160, 0
    %630 = vmatprep.subr.bf16.mxu0 0
    %631 = vmatpush1.bf16.msra.mxu0 0
    %632 = vmatprep.subr.bf16.mxu0 0
    %633 = vmatpush1.bf16.msra.mxu0 0
    %634 = vmatprep.subr.bf16.mxu0 0
    %635 = vmatpush1.bf16.msra.mxu0 0
    %636 = vmatprep.subr.bf16.mxu0 0
    %637 = vmatpush1.bf16.msra.mxu0 0
    %638 = vmatprep.subr.bf16.mxu0 0
    %639 = vmatpush1.bf16.msra.mxu0 0
    %640 = vmatprep.subr.bf16.mxu0 0
    %641 = vmatpush1.bf16.msra.mxu0 0
    %642 = vmatprep.subr.bf16.mxu0 0
    %643 = vmatpush1.bf16.msra.mxu0 0
    %644 = vmatprep.subr.bf16.mxu0 0
    %645 = vmatpush1.bf16.msra.mxu0 %v628
    %646 = vmatprep.subr.bf16.mxu0 0
    %647 = vmatpush2.bf16.msra.mxu0 0
    %648 = vmatprep.subr.bf16.mxu0 0
    %649 = vmatpush2.bf16.msra.mxu0 0
    %650 = vmatprep.subr.bf16.mxu0 0
    %651 = vmatpush2.bf16.msra.mxu0 0
    %652 = vmatprep.subr.bf16.mxu0 0
    %653 = vmatpush2.bf16.msra.mxu0 0
    %654 = vmatprep.subr.bf16.mxu0 0
    %655 = vmatpush2.bf16.msra.mxu0 0
    %656 = vmatprep.subr.bf16.mxu0 0
    %657 = vmatpush2.bf16.msra.mxu0 0
    %658 = vmatprep.subr.bf16.mxu0 0
    %659 = vmatpush2.bf16.msra.mxu0 0
    %660 = vmatprep.subr.bf16.mxu0 0
    %661 = vmatpush2.bf16.msra.mxu0 0
    %662 = vmatprep.mubr.bf16.mxu0 0
    %663 = vmatmul.mubr.bf16.gmra.mxu0 %v625
    %v664 = vpop.f32.mrf.mxu0
    %v665 = vadd.f32 0.0, %v664
    %v666 = vpop.f32.mrf.mxu0
    %v667 = vpop.f32.mrf.mxu0
    %v668 = vadd.f32 0.0, %v667
    %v669 = vpop.f32.mrf.mxu0
    %670 = vdwg.mxu0
    %v671 = vadd.f32 %v496, %v665
    %v672 = vadd.f32 %v499, %v668
    %673 = vrot.lane.b32.xlu0 %v153, 104
    %v674 = vpop.permute.xlu0 %673
    %675 = vrot.lane.b32.xlu0 %v153, 72
    %v676 = vpop.permute.xlu0 %675
    %v678 = vsel %vm165, %v674, 0
    %v681 = vsel %vm165, %v676, 0
    %683 = vmatprep.subr.bf16.mxu0 0
    %684 = vmatpush1.bf16.xpose.msra.mxu0 0
    %685 = vmatprep.subr.bf16.mxu0 0
    %686 = vmatpush1.bf16.xpose.msra.mxu0 0
    %687 = vmatprep.subr.bf16.mxu0 0
    %688 = vmatpush1.bf16.xpose.msra.mxu0 0
    %689 = vmatprep.subr.bf16.mxu0 0
    %690 = vmatpush1.bf16.xpose.msra.mxu0 0
    %691 = vmatprep.subr.bf16.mxu0 0
    %692 = vmatpush1.bf16.xpose.msra.mxu0 0
    %693 = vmatprep.subr.bf16.mxu0 0
    %694 = vmatpush1.bf16.xpose.msra.mxu0 0
    %695 = vmatprep.subr.bf16.mxu0 0
    %696 = vmatpush1.bf16.xpose.msra.mxu0 0
    %697 = vmatprep.subr.bf16.mxu0 0
    %698 = vmatpush1.bf16.xpose.msra.mxu0 %v681
    %699 = vmatprep.subr.bf16.mxu0 0
    %700 = vmatpush2.bf16.xpose.msra.mxu0 0
    %701 = vmatprep.subr.bf16.mxu0 0
    %702 = vmatpush2.bf16.xpose.msra.mxu0 0
    %703 = vmatprep.subr.bf16.mxu0 0
    %704 = vmatpush2.bf16.xpose.msra.mxu0 0
    %705 = vmatprep.subr.bf16.mxu0 0
    %706 = vmatpush2.bf16.xpose.msra.mxu0 0
    %707 = vmatprep.subr.bf16.mxu0 0
    %708 = vmatpush2.bf16.xpose.msra.mxu0 0
    %709 = vmatprep.subr.bf16.mxu0 0
    %710 = vmatpush2.bf16.xpose.msra.mxu0 0
    %711 = vmatprep.subr.bf16.mxu0 0
    %712 = vmatpush2.bf16.xpose.msra.mxu0 0
    %713 = vmatprep.subr.bf16.mxu0 0
    %714 = vmatpush2.bf16.xpose.msra.mxu0 0
    %715 = vmatprep.mubr.bf16.mxu0 0
    %716 = vmatmul.mubr.bf16.gmra.mxu0 %v678
    %v717 = vpop.f32.mrf.mxu0
    %v718 = vadd.f32 %v156, %v717
    %v719 = vpop.f32.mrf.mxu0
    %v720 = vpop.f32.mrf.mxu0
    %v721 = vadd.f32 %v157, %v720
    %v722 = vpop.f32.mrf.mxu0
    %723 = vdwg.mxu0
    %v724 = vsel %vm213, %v718, -inf
    %725 = vmax.xlane.f32.xlu0 %v724
    %v726 = vpop.xlane.xlu0 %725
    %v727 = vsel %vm213, %v721, -inf
    %728 = vmax.xlane.f32.xlu0 %v727
    %v729 = vpop.xlane.xlu0 %728
    %v730 = vsub.f32 %v718, %v726
    %v731 = vsub.f32 %v721, %v729
    %v732 = vmul.f32 %v730, 1.442695
    %v733 = vpow.pop %v732
    %v734 = vmul.f32 %v731, 1.442695
    %v735 = vpow.pop %v734
    %v736 = vsel %vm213, %v733, 0.0
    %737 = vadd.xlane.f32.xlu0 %v736
    %v738 = vpop.xlane.xlu0 %737
    %v739 = vsel %vm213, %v735, 0.0
    %740 = vadd.xlane.f32.xlu0 %v739
    %v741 = vpop.xlane.xlu0 %740
    %v742 = vpack.c.bf16 %v735, %v733
    %743 = vrot.lane.b32.xlu0 %v153, 40
    %v744 = vpop.permute.xlu0 %743
    %v747 = vsel %vm213, %v742, 0
    %749 = vmatprep.subr.bf16.mxu0 0
    %750 = vmatpush1.bf16.msra.mxu0 0
    %751 = vmatprep.subr.bf16.mxu0 0
    %752 = vmatpush1.bf16.msra.mxu0 0
    %753 = vmatprep.subr.bf16.mxu0 0
    %754 = vmatpush1.bf16.msra.mxu0 0
    %755 = vmatprep.subr.bf16.mxu0 0
    %756 = vmatpush1.bf16.msra.mxu0 0
    %757 = vmatprep.subr.bf16.mxu0 0
    %758 = vmatpush1.bf16.msra.mxu0 0
    %759 = vmatprep.subr.bf16.mxu0 0
    %760 = vmatpush1.bf16.msra.mxu0 0
    %761 = vmatprep.subr.bf16.mxu0 0
    %762 = vmatpush1.bf16.msra.mxu0 0
    %763 = vmatprep.subr.bf16.mxu0 0
    %764 = vmatpush1.bf16.msra.mxu0 %v744
    %765 = vmatprep.subr.bf16.mxu0 0
    %766 = vmatpush2.bf16.msra.mxu0 0
    %767 = vmatprep.subr.bf16.mxu0 0
    %768 = vmatpush2.bf16.msra.mxu0 0
    %769 = vmatprep.subr.bf16.mxu0 0
    %770 = vmatpush2.bf16.msra.mxu0 0
    %771 = vmatprep.subr.bf16.mxu0 0
    %772 = vmatpush2.bf16.msra.mxu0 0
    %773 = vmatprep.subr.bf16.mxu0 0
    %774 = vmatpush2.bf16.msra.mxu0 0
    %775 = vmatprep.subr.bf16.mxu0 0
    %776 = vmatpush2.bf16.msra.mxu0 0
    %777 = vmatprep.subr.bf16.mxu0 0
    %778 = vmatpush2.bf16.msra.mxu0 0
    %779 = vmatprep.subr.bf16.mxu0 0
    %780 = vmatpush2.bf16.msra.mxu0 0
    %781 = vmatprep.mubr.bf16.mxu0 0
    %782 = vmatmul.mubr.bf16.gmra.mxu0 %v747
    %v783 = vpop.f32.mrf.mxu0
    %v784 = vadd.f32 0.0, %v783
    %v785 = vpop.f32.mrf.mxu0
    %v786 = vpop.f32.mrf.mxu0
    %v787 = vadd.f32 0.0, %v786
    %v788 = vpop.f32.mrf.mxu0
    %789 = vdwg.mxu0
    %v790 = vrcp.pop %v738
    %v791 = vrcp.pop %v741
    %v792 = vmul.f32 %v784, %v790
    %v793 = vmul.f32 %v787, %v791
    %v794 = vpack.c.bf16 %v793, %v792
    %v796 = vsel %vm165, %v794, 0
    %v799 = vsel %vm410, %v161, 0
    %801 = vmatprep.subr.bf16.mxu0 0
    %802 = vmatpush1.bf16.msra.mxu0 0
    %803 = vmatprep.subr.bf16.mxu0 0
    %804 = vmatpush1.bf16.msra.mxu0 0
    %805 = vmatprep.subr.bf16.mxu0 0
    %806 = vmatpush1.bf16.msra.mxu0 0
    %807 = vmatprep.subr.bf16.mxu0 0
    %808 = vmatpush1.bf16.msra.mxu0 0
    %809 = vmatprep.subr.bf16.mxu0 0
    %810 = vmatpush1.bf16.msra.mxu0 0
    %811 = vmatprep.subr.bf16.mxu0 0
    %812 = vmatpush1.bf16.msra.mxu0 0
    %813 = vmatprep.subr.bf16.mxu0 0
    %814 = vmatpush1.bf16.msra.mxu0 0
    %815 = vmatprep.subr.bf16.mxu0 0
    %816 = vmatpush1.bf16.msra.mxu0 %v799
    %817 = vmatprep.subr.bf16.mxu0 0
    %818 = vmatpush2.bf16.msra.mxu0 0
    %819 = vmatprep.subr.bf16.mxu0 0
    %820 = vmatpush2.bf16.msra.mxu0 0
    %821 = vmatprep.subr.bf16.mxu0 0
    %822 = vmatpush2.bf16.msra.mxu0 0
    %823 = vmatprep.subr.bf16.mxu0 0
    %824 = vmatpush2.bf16.msra.mxu0 0
    %825 = vmatprep.subr.bf16.mxu0 0
    %826 = vmatpush2.bf16.msra.mxu0 0
    %827 = vmatprep.subr.bf16.mxu0 0
    %828 = vmatpush2.bf16.msra.mxu0 0
    %829 = vmatprep.subr.bf16.mxu0 0
    %830 = vmatpush2.bf16.msra.mxu0 0
    %831 = vmatprep.subr.bf16.mxu0 0
    %832 = vmatpush2.bf16.msra.mxu0 0
    %833 = vmatprep.mubr.bf16.mxu0 0
    %834 = vmatmul.mubr.bf16.gmra.mxu0 %v796
    %v835 = vpop.f32.mrf.mxu0
    %v836 = vadd.f32 0.0, %v835
    %v837 = vpop.f32.mrf.mxu0
    %v838 = vpop.f32.mrf.mxu0
    %v839 = vadd.f32 0.0, %v838
    %v840 = vpop.f32.mrf.mxu0
    %841 = vdwg.mxu0
    %v842 = vadd.f32 %v671, %v836
    %v843 = vadd.f32 %v672, %v839
    %v844 = vld [vmem:[%s6] sm:$0x1]
    %v846 = vlaneseq
    %v847 = vshrl.u32 %v846, 7
    %v848 = vsub.s32 0, %v847
    %v849 = vrot.slane %v844, %v848
    %v851 = vadd.f32 %v842, %v849
    %v852 = vadd.f32 %v843, %v849
    %v853 = vadd.f32 %v851, %v82
    %v854 = vadd.f32 %v852, %v83
    %v855 = vld [vmem:[%s7] sm:$0x1]
    %v856 = vld [vmem:[%s8] sm:$0x1]
    %v857 = vsel %vm108, %v853, 0.0
    %858 = vadd.xlane.f32.xlu0 %v857
    %v859 = vpop.xlane.xlu0 %858
    %v860 = vsel %vm108, %v854, 0.0
    %861 = vadd.xlane.f32.xlu0 %v860
    %v862 = vpop.xlane.xlu0 %861
    %v863 = vrcp.pop 32.0
    %v864 = vmul.f32 %v859, %v863
    %v865 = vmul.f32 %v862, %v863
    %v866 = vsub.f32 %v853, %v864
    %v867 = vsub.f32 %v854, %v865
    %v868 = vmul.f32 %v866, %v866
    %v869 = vmul.f32 %v867, %v867
    %v870 = vsel %vm108, %v868, 0.0
    %871 = vadd.xlane.f32.xlu0 %v870
    %v872 = vpop.xlane.xlu0 %871
    %v873 = vsel %vm108, %v869, 0.0
    %874 = vadd.xlane.f32.xlu0 %v873
    %v875 = vpop.xlane.xlu0 %874
    %v876 = vmul.f32 %v872, %v863
    %v877 = vmul.f32 %v875, %v863
    %v878 = vadd.f32 %v876, 1e-05
    %v879 = vadd.f32 %v877, 1e-05
    %v880 = vrsqrt.pop %v878
    %v881 = vrsqrt.pop %v879
    %v882 = vmul.f32 %v866, %v880
    %v883 = vmul.f32 %v867, %v881
    %v885 = vlaneseq
    %v886 = vshrl.u32 %v885, 7
    %v887 = vsub.s32 0, %v886
    %v888 = vrot.slane %v855, %v887
    %v890 = vmul.f32 %v882, %v888
    %v891 = vmul.f32 %v883, %v888
    %v893 = vlaneseq
    %v894 = vshrl.u32 %v893, 7
    %v895 = vsub.s32 0, %v894
    %v896 = vrot.slane %v856, %v895
    %v898 = vadd.f32 %v890, %v896
    %v899 = vadd.f32 %v891, %v896
    %v900 = vpack.c.bf16 %v899, %v898
    %v901 = vld [vmem:[%s9] sm:$0xf]
    %v902 = vld [vmem:[%s9 + $0x4] sm:$0xf]
    %v903 = vld [vmem:[%s9 + $0x8] sm:$0xf]
    %v904 = vld [vmem:[%s9 + $0xc] sm:$0xf]
    %v905 = vld [vmem:[#allocation5] sm:$0x1]
    %v907 = vlaneseq
    %v908 = vshrl.u32 %v907, 7
    %v909 = vsub.s32 0, %v908
    %v910 = vrot.slane %v905, %v909
    %v916 = vunpack.c.l.b16 %v901
    %v917 = vunpack.c.l.b16 %v902
    %v918 = vunpack.c.l.b16 %v903
    %v919 = vunpack.c.l.b16 %v904
    %v920 = vpack.c.b16 %v917, %v916
    %v921 = vpack.c.b16 %v919, %v918
    %v925 = vsel %vm108, %v900, 0
    %927 = vmatprep.subr.bf16.mxu0 0
    %928 = vmatpush1.bf16.msra.mxu0 0
    %929 = vmatprep.subr.bf16.mxu0 0
    %930 = vmatpush1.bf16.msra.mxu0 0
    %931 = vmatprep.subr.bf16.mxu0 0
    %932 = vmatpush1.bf16.msra.mxu0 0
    %933 = vmatprep.subr.bf16.mxu0 0
    %934 = vmatpush1.bf16.msra.mxu0 0
    %935 = vmatprep.subr.bf16.mxu0 0
    %936 = vmatpush1.bf16.msra.mxu0 0
    %937 = vmatprep.subr.bf16.mxu0 0
    %938 = vmatpush1.bf16.msra.mxu0 0
    %939 = vmatprep.subr.bf16.mxu0 0
    %940 = vmatpush1.bf16.msra.mxu0 %v921
    %941 = vmatprep.subr.bf16.mxu0 0
    %942 = vmatpush1.bf16.msra.mxu0 %v920
    %943 = vmatprep.subr.bf16.mxu0 0
    %944 = vmatpush2.bf16.msra.mxu0 0
    %945 = vmatprep.subr.bf16.mxu0 0
    %946 = vmatpush2.bf16.msra.mxu0 0
    %947 = vmatprep.subr.bf16.mxu0 0
    %948 = vmatpush2.bf16.msra.mxu0 0
    %949 = vmatprep.subr.bf16.mxu0 0
    %950 = vmatpush2.bf16.msra.mxu0 0
    %951 = vmatprep.subr.bf16.mxu0 0
    %952 = vmatpush2.bf16.msra.mxu0 0
    %953 = vmatprep.subr.bf16.mxu0 0
    %954 = vmatpush2.bf16.msra.mxu0 0
    %955 = vmatprep.subr.bf16.mxu0 0
    %956 = vmatpush2.bf16.msra.mxu0 0
    %957 = vmatprep.subr.bf16.mxu0 0
    %958 = vmatpush2.bf16.msra.mxu0 0
    %959 = vmatprep.mubr.bf16.mxu0 0
    %960 = vmatmul.mubr.bf16.gmra.mxu0 %v925
    %v961 = vpop.f32.mrf.mxu0
    %v962 = vadd.f32 %v910, %v961
    %v963 = vpop.f32.mrf.mxu0
    %v964 = vpop.f32.mrf.mxu0
    %v965 = vadd.f32 %v910, %v964
    %v966 = vpop.f32.mrf.mxu0
    %967 = vdwg.mxu0
    %v968 = vmax.f32 %v962, 0.0
    %v969 = vmax.f32 %v965, 0.0
    %v970 = vpack.c.bf16 %v969, %v968
    %v971 = vld [vmem:[%s11] sm:$0xf]
    %v972 = vld [vmem:[%s11 + $0x4] sm:$0xf]
    %v973 = vld [vmem:[%s11 + $0x8] sm:$0xf]
    %v974 = vld [vmem:[%s11 + $0xc] sm:$0xf]
    %v975 = vld [vmem:[%s11 + $0x10] sm:$0xf]
    %v976 = vld [vmem:[%s11 + $0x14] sm:$0xf]
    %v977 = vld [vmem:[%s11 + $0x18] sm:$0xf]
    %v978 = vld [vmem:[%s11 + $0x1c] sm:$0xf]
    %v979 = vld [vmem:[%s11 + $0x20] sm:$0xf]
    %v980 = vld [vmem:[%s11 + $0x24] sm:$0xf]
    %v981 = vld [vmem:[%s11 + $0x28] sm:$0xf]
    %v982 = vld [vmem:[%s11 + $0x2c] sm:$0xf]
    %v983 = vld [vmem:[%s11 + $0x30] sm:$0xf]
    %v984 = vld [vmem:[%s11 + $0x34] sm:$0xf]
    %v985 = vld [vmem:[%s11 + $0x38] sm:$0xf]
    %v986 = vld [vmem:[%s11 + $0x3c] sm:$0xf]
    %v987 = vld [vmem:[%s12] sm:$0x1]
    %v989 = vlaneseq
    %v990 = vshrl.u32 %v989, 7
    %v991 = vsub.s32 0, %v990
    %v992 = vrot.slane %v987, %v991
    %v1010 = vunpack.c.l.b16 %v971
    %v1011 = vunpack.c.l.b16 %v972
    %v1012 = vunpack.c.l.b16 %v973
    %v1013 = vunpack.c.l.b16 %v974
    %v1014 = vunpack.c.l.b16 %v975
    %v1015 = vunpack.c.l.b16 %v976
    %v1016 = vunpack.c.l.b16 %v977
    %v1017 = vunpack.c.l.b16 %v978
    %v1018 = vunpack.c.l.b16 %v979
    %v1019 = vunpack.c.l.b16 %v980
    %v1020 = vunpack.c.l.b16 %v981
    %v1021 = vunpack.c.l.b16 %v982
    %v1022 = vunpack.c.l.b16 %v983
    %v1023 = vunpack.c.l.b16 %v984
    %v1024 = vunpack.c.l.b16 %v985
    %v1025 = vunpack.c.l.b16 %v986
    %v1026 = vpack.c.b16 %v1011, %v1010
    %v1027 = vpack.c.b16 %v1013, %v1012
    %v1028 = vpack.c.b16 %v1015, %v1014
    %v1029 = vpack.c.b16 %v1017, %v1016
    %v1030 = vpack.c.b16 %v1019, %v1018
    %v1031 = vpack.c.b16 %v1021, %v1020
    %v1032 = vpack.c.b16 %v1023, %v1022
    %v1033 = vpack.c.b16 %v1025, %v1024
    %1042 = vmatprep.subr.bf16.mxu0 0
    %1043 = vmatpush1.bf16.msra.mxu0 %v1033
    %1044 = vmatprep.subr.bf16.mxu0 0
    %1045 = vmatpush1.bf16.msra.mxu0 %v1032
    %1046 = vmatprep.subr.bf16.mxu0 0
    %1047 = vmatpush1.bf16.msra.mxu0 %v1031
    %1048 = vmatprep.subr.bf16.mxu0 0
    %1049 = vmatpush1.bf16.msra.mxu0 %v1030
    %1050 = vmatprep.subr.bf16.mxu0 0
    %1051 = vmatpush1.bf16.msra.mxu0 %v1029
    %1052 = vmatprep.subr.bf16.mxu0 0
    %1053 = vmatpush1.bf16.msra.mxu0 %v1028
    %1054 = vmatprep.subr.bf16.mxu0 0
    %1055 = vmatpush1.bf16.msra.mxu0 %v1027
    %1056 = vmatprep.subr.bf16.mxu0 0
    %1057 = vmatpush1.bf16.msra.mxu0 %v1026
    %1058 = vmatprep.subr.bf16.mxu0 0
    %1059 = vmatpush2.bf16.msra.mxu0 0
    %1060 = vmatprep.subr.bf16.mxu0 0
    %1061 = vmatpush2.bf16.msra.mxu0 0
    %1062 = vmatprep.subr.bf16.mxu0 0
    %1063 = vmatpush2.bf16.msra.mxu0 0
    %1064 = vmatprep.subr.bf16.mxu0 0
    %1065 = vmatpush2.bf16.msra.mxu0 0
    %1066 = vmatprep.subr.bf16.mxu0 0
    %1067 = vmatpush2.bf16.msra.mxu0 0
    %1068 = vmatprep.subr.bf16.mxu0 0
    %1069 = vmatpush2.bf16.msra.mxu0 0
    %1070 = vmatprep.subr.bf16.mxu0 0
    %1071 = vmatpush2.bf16.msra.mxu0 0
    %1072 = vmatprep.subr.bf16.mxu0 0
    %1073 = vmatpush2.bf16.msra.mxu0 0
    %1074 = vmatprep.mubr.bf16.mxu0 0
    %1075 = vmatmul.mubr.bf16.gmra.mxu0 %v970
    %v1076 = vpop.f32.mrf.mxu0
    %v1077 = vadd.f32 %v992, %v1076
    %v1078 = vpop.f32.mrf.mxu0
    %v1079 = vpop.f32.mrf.mxu0
    %v1080 = vadd.f32 %v992, %v1079
    %v1081 = vpop.f32.mrf.mxu0
    %1082 = vdwg.mxu0
    %v1083 = vadd.f32 %v1077, %v898
    %v1084 = vadd.f32 %v1080, %v899
    %v1085 = vld [vmem:[%s13] sm:$0x1]
    %v1086 = vld [vmem:[%s14] sm:$0x1]
    %v1087 = vsel %vm108, %v1083, 0.0
    %1088 = vadd.xlane.f32.xlu0 %v1087
    %v1089 = vpop.xlane.xlu0 %1088
    %v1090 = vsel %vm108, %v1084, 0.0
    %1091 = vadd.xlane.f32.xlu0 %v1090
    %v1092 = vpop.xlane.xlu0 %1091
    %v1093 = vmul.f32 %v1089, %v863
    %v1094 = vmul.f32 %v1092, %v863
    %v1095 = vsub.f32 %v1083, %v1093
    %v1096 = vsub.f32 %v1084, %v1094
    %v1097 = vmul.f32 %v1095, %v1095
    %v1098 = vmul.f32 %v1096, %v1096
    %v1099 = vsel %vm108, %v1097, 0.0
    %1100 = vadd.xlane.f32.xlu0 %v1099
    %v1101 = vpop.xlane.xlu0 %1100
    %v1102 = vsel %vm108, %v1098, 0.0
    %1103 = vadd.xlane.f32.xlu0 %v1102
    %v1104 = vpop.xlane.xlu0 %1103
    %v1105 = vmul.f32 %v1101, %v863
    %v1106 = vmul.f32 %v1104, %v863
    %v1107 = vadd.f32 %v1105, 1e-05
    %v1108 = vadd.f32 %v1106, 1e-05
    %v1109 = vrsqrt.pop %v1107
    %v1110 = vrsqrt.pop %v1108
    %v1111 = vmul.f32 %v1095, %v1109
    %v1112 = vmul.f32 %v1096, %v1110
    %v1114 = vlaneseq
    %v1115 = vshrl.u32 %v1114, 7
    %v1116 = vsub.s32 0, %v1115
    %v1117 = vrot.slane %v1085, %v1116
    %v1119 = vmul.f32 %v1111, %v1117
    %v1120 = vmul.f32 %v1112, %v1117
    %v1122 = vlaneseq
    %v1123 = vshrl.u32 %v1122, 7
    %v1124 = vsub.s32 0, %v1123
    %v1125 = vrot.slane %v1086, %v1124
    %v1127 = vadd.f32 %v1119, %v1125
    %v1128 = vadd.f32 %v1120, %v1125
    %v1129 = vpack.c.bf16 %v1128, %v1127
    %v1131 = vunpack.c.l.b16 %v1129
    %v1132 = vunpack.c.h.b16 %v1129
    %v1133 = vpack.c.b16 %v1131, %v1131
    %v1134 = vpack.c.b16 %v1132, %v1132
    %vm1137 = vcmask 257024
    %1138 = vst.msk [vmem:[#allocation7] sm:$0xf] %vm1137, %v1133
    %1139 = vst.msk [vmem:[#allocation7 + $0x4] sm:$0xf] %vm1137, %v1134
    // Predicated region
    $region70: #{tpu_custom_call.1} parent=1 // pred_check
      _
    $region71: #{tpu_custom_call.1} parent=1 // pred_check_branch
      %1141 = sbr.rel (0) target = $region73
    $region72: #{tpu_custom_call.1} parent=1 // pred_region
      %s1143 = ssub.s32 128, 128
      %1144 = vsyncadd [#allocation4], %s1143
      %s1145 = sshll.u32 [#allocation7], 4
      %s1146 = int_to_ptr.vmem [resolvable:$true] %s1145
      %1151 = dma.vmem_to_hbm [thread:$0]  %s1146, 128, %s15, [#allocation4], 64, 64, 4
    $region73: #{tpu_custom_call.1} parent=1 // pred_fallthru
      _
    // Predicated region
    $region74: #{tpu_custom_call.1} parent=1 // pred_check
      _
    $region75: #{tpu_custom_call.1} parent=1 // pred_check_branch
      %1153 = sbr.rel (0) target = $region77
    $region76: #{tpu_custom_call.1} parent=1 // pred_region
      %1154 = dma.done [#allocation4], 128
    $region77: #{tpu_custom_call.1} parent=1 // pred_fallthru
      _
    %1155 = vsyncpa [#allocation3], 1
    %1156 = vsyncpa [#allocation6], 1
    %1157 = vsyncpa [#allocation4], 1

</llo_original>
